<compile_context>
chip_gen: v5e
topology: v5e:2x2
jax: 0.10.0
libtpu: 0.0.40
codegen_flags: <defaults>
</compile_context>

<pallas_src>
import functools
import math

import jax
import jax.numpy as jnp
from jax.experimental import pallas as pl
from jax.experimental.pallas import tpu as pltpu


# ----------------------------------------------------------------------------
# Fused kernel: embed scale + tied lm_head matmul + online log_softmax +
#               label-smoothed Xent (KLDiv sum), per-token losses out.
# Grid = (token_tiles, vocab_tiles); vocab is the reduction ("arbitrary") axis.
# ----------------------------------------------------------------------------
def _lmhead_xent_kernel(h_ref, w_ref, b_ref, tgt_ref, logits_ref, loss_ref,
                        m_acc, s_acc, sum_acc, gold_acc, pad_acc,
                        *, scale, pad_index, smoothing, vocab_size):
    j = pl.program_id(1)
    nv = pl.num_programs(1)
    tv = logits_ref.shape[1]

    # Fused sqrt(d_model) scale + bf16 cast for the MXU; f32 accumulation.
    h = (h_ref[...] * scale).astype(jnp.bfloat16)
    logits = jnp.dot(h, w_ref[...],
                     preferred_element_type=jnp.float32) + b_ref[...]
    logits_ref[...] = logits.astype(logits_ref.dtype)   # lane-dense (tm, tv)

    @pl.when(j == 0)
    def _():
        m_acc[...] = jnp.full_like(m_acc, -jnp.inf)
        s_acc[...] = jnp.zeros_like(s_acc)
        sum_acc[...] = jnp.zeros_like(sum_acc)
        gold_acc[...] = jnp.zeros_like(gold_acc)
        pad_acc[...] = jnp.zeros_like(pad_acc)

    # Online logsumexp across vocab tiles (numerically stable).
    tile_max = jnp.max(logits, axis=-1, keepdims=True)
    m_new = jnp.maximum(m_acc[...], tile_max)
    s_acc[...] = (s_acc[...] * jnp.exp(m_acc[...] - m_new)
                  + jnp.sum(jnp.exp(logits - m_new), axis=-1, keepdims=True))
    m_acc[...] = m_new

    # Running sums needed by the label-smoothed loss.
    sum_acc[...] += jnp.sum(logits, axis=-1, keepdims=True)

    # NOTE: the (tm,1) targets block is lane-sparse; acceptable since it is
    # resident across the vocab axis (loaded once per token tile).
    tgt = tgt_ref[...]                                        # (tm, 1) int32
    iota = j * tv + jax.lax.broadcasted_iota(jnp.int32, logits.shape, 1)
    gold_acc[...] += jnp.sum(jnp.where(iota == tgt, logits, 0.0),
                             axis=-1, keepdims=True)
    pad_acc[...] += jnp.sum(jnp.where(iota == pad_index, logits, 0.0),
                            axis=-1, keepdims=True)

    @pl.when(j == nv - 1)
    def _():
        lse = m_acc[...] + jnp.log(s_acc[...])
        lp_gold = gold_acc[...] - lse
        lp_sum = sum_acc[...] - vocab_size * lse
        lp_pad = pad_acc[...] - lse

        smooth = smoothing / (vocab_size - 2)
        conf = 1.0 - smoothing
        entropy = (conf * math.log(conf)
                   + (vocab_size - 2) * smooth * math.log(smooth))
        cross = conf * lp_gold + smooth * (lp_sum - lp_gold - lp_pad)
        non_pad = (tgt != pad_index).astype(jnp.float32)      # (tm, 1)
        loss_ref[...] = non_pad * (entropy - cross)           # per-token loss


def lm_head_and_loss(hidden, w_t_bf16, bias, targets, *, scale, pad_index,
                     smoothing, batch_size, tm=256, tv=512):
    """hidden: (N, D) f32 (UNscaled embeddings); w_t_bf16: (D, V) bf16;
    bias: (1, V) f32; targets: (N,) int.  Returns (logits (N,V) f32, loss)."""
    n, d = hidden.shape
    v = w_t_bf16.shape[1]
    tv = min(tv, v)
    assert v % tv == 0 and v % 128 == 0

    # Pad the token axis up to a multiple of tm; padded rows use pad_index
    # targets so they contribute exactly zero loss.
    n_pad = -(-n // tm) * tm
    if n_pad != n:
        hidden = jnp.pad(hidden, ((0, n_pad - n), (0, 0)))
        targets = jnp.pad(targets, (0, n_pad - n), constant_values=pad_index)
    tgt2d = targets.reshape(n_pad, 1).astype(jnp.int32)

    kern = functools.partial(
        _lmhead_xent_kernel, scale=scale, pad_index=pad_index,
        smoothing=smoothing, vocab_size=v)

    logits, tok_loss = pl.pallas_call(
        kern,
        out_shape=(jax.ShapeDtypeStruct((n_pad, v), jnp.float32),
                   jax.ShapeDtypeStruct((n_pad, 1), jnp.float32)),
        grid_spec=pltpu.PrefetchScalarGridSpec(
            num_scalar_prefetch=0,
            grid=(n_pad // tm, v // tv),
            in_specs=[pl.BlockSpec((tm, d), lambda i, j: (i, 0)),
                      pl.BlockSpec((d, tv), lambda i, j: (0, j)),
                      pl.BlockSpec((1, tv), lambda i, j: (0, j)),
                      pl.BlockSpec((tm, 1), lambda i, j: (i, 0))],
            out_specs=[pl.BlockSpec((tm, tv), lambda i, j: (i, j)),
                       pl.BlockSpec((tm, 1), lambda i, j: (i, 0))],
            scratch_shapes=[pltpu.VMEM((tm, 1), jnp.float32)] * 5,
        ),
        compiler_params=pltpu.CompilerParams(
            # token tiles are independent -> parallel (2 TCs on v7x);
            # vocab is the reduction axis -> arbitrary (last in grid)
            dimension_semantics=("parallel", "arbitrary"),
            vmem_limit_bytes=64 * 1024 * 1024,
        ),
    )(hidden, w_t_bf16, bias, tgt2d)

    loss = jnp.sum(tok_loss) / batch_size
    return logits[:n], loss


# ----------------------------------------------------------------------------
# TranslationNetwork (synthetic, deterministic parameters)
# ----------------------------------------------------------------------------
class TranslationNetworkPallas:
    def __init__(self, key, *, d_model=128, txt_vocab=256, gls_vocab=64,
                 pad_index=1, decoder_start_id=2, smoothing=0.2):
        k1, k2 = jax.random.split(key, 2)
        self.d_model = d_model
        self.pad_index = pad_index
        self.decoder_start_id = decoder_start_id
        self.smoothing = smoothing
        self.input_embed_scale = math.sqrt(d_model)            # cfg default
        # gloss_embedding: nn.Embedding(len(id2gloss), d_model)
        self.gloss_embedding = 0.02 * jax.random.normal(
            k1, (gls_vocab, d_model), jnp.float32)
        # model.model.shared (tied with lm_head)
        self.shared = 0.02 * jax.random.normal(
            k2, (txt_vocab, d_model), jnp.float32)
        # Precompute the (D, V) tied lm_head weight ONCE (bf16 for the MXU);
        # avoids materializing shared.T in HBM on every forward.
        self.lm_head_w_t = self.shared.T.astype(jnp.bfloat16)
        # model.final_logits_bias (registered buffer, zeros)
        self.final_logits_bias = jnp.zeros((1, txt_vocab), jnp.float32)

    def forward(self, input_ids, labels):
        B, Ts = input_ids.shape
        _, Tt = labels.shape

        # prepare_gloss_inputs: gather + scale are memory-bound glue; the scale
        # is fused into plain XLA (no standalone HBM round-trip kernel).
        gls = jnp.take(self.gloss_embedding, input_ids.reshape(-1), axis=0)
        inputs_embeds = (gls * self.input_embed_scale).reshape(
            B, Ts, self.d_model)

        # TODO(synk): MBart encoder/decoder attention stack not replicated.
        # Stand-in decoder hidden states = scaled embeddings of the
        # right-shifted labels (identity decoder), then the real tied lm_head.
        shifted = jnp.concatenate(
            [jnp.full((B, 1), self.decoder_start_id, labels.dtype),
             labels[:, :-1]], axis=1)
        dec_emb = jnp.take(self.shared, shifted.reshape(-1), axis=0)  # (B*Tt,D)

        logits_flat, translation_loss = lm_head_and_loss(
            dec_emb, self.lm_head_w_t, self.final_logits_bias,
            labels.reshape(-1), scale=self.input_embed_scale,
            pad_index=self.pad_index, smoothing=self.smoothing, batch_size=B)

        return {
            'logits': logits_flat.reshape(B, Tt, -1),
            'translation_loss': translation_loss,
            'transformer_inputs': {'inputs_embeds': inputs_embeds,
                                   'labels': labels},
        }


# ----------------------------------------------------------------------------
# Pure-JAX reference for a correctness sanity check
# ----------------------------------------------------------------------------
def reference_forward(net, input_ids, labels):
    B, Tt = labels.shape
    shifted = jnp.concatenate(
        [jnp.full((B, 1), net.decoder_start_id, labels.dtype),
         labels[:, :-1]], axis=1)
    dec_hidden = jnp.take(net.shared, shifted.reshape(-1), axis=0) \
        * net.input_embed_scale
    logits = dec_hidden @ net.shared.T + net.final_logits_bias
    lp = jax.nn.log_softmax(logits, axis=-1)
    tgt = labels.reshape(-1)
    V = lp.shape[-1]
    smooth = net.smoothing / (V - 2)
    conf = 1.0 - net.smoothing
    tdist = jnp.full((tgt.shape[0], V), smooth, jnp.float32)
    tdist = tdist.at[jnp.arange(tgt.shape[0]), tgt].set(conf)
    tdist = tdist.at[:, net.pad_index].set(0.0)
    tdist = jnp.where((tgt == net.pad_index)[:, None], 0.0, tdist)
    safe = jnp.where(tdist > 0, tdist, 1.0)
    kl = jnp.where(tdist > 0, tdist * (jnp.log(safe) - lp), 0.0)
    loss = kl.sum() / B
    return logits.reshape(B, Tt, V), loss


if __name__ == "__main__":
    key = jax.random.PRNGKey(0)
    kp, ki, kl = jax.random.split(key, 3)

    B, T_SRC, T_TGT = 2, 8, 8
    D_MODEL, TXT_VOCAB, GLS_VOCAB, PAD = 128, 256, 64, 1

    net = TranslationNetworkPallas(kp, d_model=D_MODEL, txt_vocab=TXT_VOCAB,
                                   gls_vocab=GLS_VOCAB, pad_index=PAD,
                                   smoothing=0.2)

    input_ids = jax.random.randint(ki, (B, T_SRC), 0, GLS_VOCAB, jnp.int32)
    labels = jax.random.randint(kl, (B, T_TGT), 3, TXT_VOCAB, jnp.int32)
    labels = labels.at[1, -2:].set(PAD)   # exercise pad masking in the loss

    out = net.forward(input_ids, labels)
    jax.block_until_ready(out['translation_loss'])

    ref_logits, ref_loss = reference_forward(net, input_ids, labels)
    # bf16 MXU operands -> slightly looser logits tolerance; loss accumulates
    # in f32 and stays tight.
    assert jnp.allclose(out['logits'], ref_logits, rtol=2e-2, atol=2e-3), \
        "logits mismatch"
    assert jnp.allclose(out['translation_loss'], ref_loss,
                        rtol=1e-3, atol=1e-3), "loss mismatch"

    print("KERNEL_OK")
</pallas_src>

<mosaic_0001>
module attributes {stable_mosaic.version = 11 : i64} {
  func.func @_lmhead_xent_kernel(%arg0: i32, %arg1: i32, %arg2: memref<256x128xf32, #tpu.memory_space<vmem>>, %arg3: memref<128x256xbf16, #tpu.memory_space<vmem>>, %arg4: memref<1x256xf32, #tpu.memory_space<vmem>>, %arg5: memref<256x1xi32, #tpu.memory_space<vmem>>, %arg6: memref<256x256xf32, #tpu.memory_space<vmem>>, %arg7: memref<256x1xf32, #tpu.memory_space<vmem>>, %arg8: memref<256x1xf32, #tpu.memory_space<vmem>>, %arg9: memref<256x1xf32, #tpu.memory_space<vmem>>, %arg10: memref<256x1xf32, #tpu.memory_space<vmem>>, %arg11: memref<256x1xf32, #tpu.memory_space<vmem>>, %arg12: memref<256x1xf32, #tpu.memory_space<vmem>>) attributes {dimension_semantics = [#tpu.dimension_semantics<parallel>, #tpu.dimension_semantics<arbitrary>], iteration_bounds = array<i64: 1, 1>, scalar_prefetch = 0 : i64, scratch_operands = 5 : i64, tpu.core_type = #tpu.core_type<tc>, window_params = [{transform_indices = @transform_0, window_bounds = array<i64: 256, 128>}, {transform_indices = @transform_1, window_bounds = array<i64: 128, 256>}, {transform_indices = @transform_2, window_bounds = array<i64: 1, 256>}, {transform_indices = @transform_3, window_bounds = array<i64: 256, 1>}, {transform_indices = @transform_4, window_bounds = array<i64: 256, 256>}, {transform_indices = @transform_5, window_bounds = array<i64: 256, 1>}]} {
    %c0 = arith.constant 0 : index
    %c0_0 = arith.constant 0 : index
    %0 = vector.load %arg2[%c0, %c0_0] : memref<256x128xf32, #tpu.memory_space<vmem>>, vector<256x128xf32>
    %cst = arith.constant 11.3137083 : f32
    %1 = vector.broadcast %cst : f32 to vector<256x128xf32>
    %2 = arith.mulf %0, %1 : vector<256x128xf32>
    %3 = arith.truncf %2 : vector<256x128xf32> to vector<256x128xbf16>
    %c0_1 = arith.constant 0 : index
    %c0_2 = arith.constant 0 : index
    %4 = vector.load %arg3[%c0_1, %c0_2] : memref<128x256xbf16, #tpu.memory_space<vmem>>, vector<128x256xbf16>
    %cst_3 = arith.constant dense<0.000000e+00> : vector<256x256xf32>
    %5 = tpu.matmul %3, %4, %cst_3 {dimension_numbers = #tpu.dot_dimension_numbers<[1], [0], [0], [1], [0, 0, 1, 1], [], []>} : vector<256x128xbf16>, vector<128x256xbf16>, vector<256x256xf32> -> vector<256x256xf32>
    %c0_4 = arith.constant 0 : index
    %c0_5 = arith.constant 0 : index
    %6 = vector.load %arg4[%c0_4, %c0_5] : memref<1x256xf32, #tpu.memory_space<vmem>>, vector<1x256xf32>
    %7 = vector.broadcast %6 : vector<1x256xf32> to vector<256x256xf32>
    %8 = arith.addf %5, %7 : vector<256x256xf32>
    %c0_6 = arith.constant 0 : index
    %c0_7 = arith.constant 0 : index
    %9 = vector.load %arg6[%c0_6, %c0_7] : memref<256x256xf32, #tpu.memory_space<vmem>>, vector<256x256xf32>
    tpu.vector_store %arg6[%c0_6, %c0_7], %8 {strides = array<i32>} : memref<256x256xf32, #tpu.memory_space<vmem>>, vector<256x256xf32>,
    %c0_i32 = arith.constant 0 : i32
    %10 = arith.cmpi eq, %arg1, %c0_i32 : i32
    %11 = arith.extui %10 : i1 to i32
    %c0_i32_8 = arith.constant 0 : i32
    %12 = arith.cmpi ne, %11, %c0_i32_8 : i32
    scf.if %12 {
      %cst_42 = arith.constant 0xFF800000 : f32
      %61 = vector.broadcast %cst_42 : f32 to vector<256x1xf32>
      %c0_43 = arith.constant 0 : index
      %c0_44 = arith.constant 0 : index
      %62 = vector.load %arg8[%c0_43, %c0_44] : memref<256x1xf32, #tpu.memory_space<vmem>>, vector<256x1xf32>
      tpu.vector_store %arg8[%c0_43, %c0_44], %61 {strides = array<i32>} : memref<256x1xf32, #tpu.memory_space<vmem>>, vector<256x1xf32>,
      %cst_45 = arith.constant 0.000000e+00 : f32
      %63 = vector.broadcast %cst_45 : f32 to vector<256x1xf32>
      %c0_46 = arith.constant 0 : index
      %c0_47 = arith.constant 0 : index
      %64 = vector.load %arg9[%c0_46, %c0_47] : memref<256x1xf32, #tpu.memory_space<vmem>>, vector<256x1xf32>
      tpu.vector_store %arg9[%c0_46, %c0_47], %63 {strides = array<i32>} : memref<256x1xf32, #tpu.memory_space<vmem>>, vector<256x1xf32>,
      %cst_48 = arith.constant 0.000000e+00 : f32
      %65 = vector.broadcast %cst_48 : f32 to vector<256x1xf32>
      %c0_49 = arith.constant 0 : index
      %c0_50 = arith.constant 0 : index
      %66 = vector.load %arg10[%c0_49, %c0_50] : memref<256x1xf32, #tpu.memory_space<vmem>>, vector<256x1xf32>
      tpu.vector_store %arg10[%c0_49, %c0_50], %65 {strides = array<i32>} : memref<256x1xf32, #tpu.memory_space<vmem>>, vector<256x1xf32>,
      %cst_51 = arith.constant 0.000000e+00 : f32
      %67 = vector.broadcast %cst_51 : f32 to vector<256x1xf32>
      %c0_52 = arith.constant 0 : index
      %c0_53 = arith.constant 0 : index
      %68 = vector.load %arg11[%c0_52, %c0_53] : memref<256x1xf32, #tpu.memory_space<vmem>>, vector<256x1xf32>
      tpu.vector_store %arg11[%c0_52, %c0_53], %67 {strides = array<i32>} : memref<256x1xf32, #tpu.memory_space<vmem>>, vector<256x1xf32>,
      %cst_54 = arith.constant 0.000000e+00 : f32
      %69 = vector.broadcast %cst_54 : f32 to vector<256x1xf32>
      %c0_55 = arith.constant 0 : index
      %c0_56 = arith.constant 0 : index
      %70 = vector.load %arg12[%c0_55, %c0_56] : memref<256x1xf32, #tpu.memory_space<vmem>>, vector<256x1xf32>
      tpu.vector_store %arg12[%c0_55, %c0_56], %69 {strides = array<i32>} : memref<256x1xf32, #tpu.memory_space<vmem>>, vector<256x1xf32>,
    } else {
    }
    %cst_9 = arith.constant dense<0xFF800000> : vector<256xf32>
    %13 = vector.multi_reduction <maximumf>, %8, %cst_9 [1] : vector<256x256xf32> to vector<256xf32>
    %14 = vector.shape_cast %13 : vector<256xf32> to vector<256x1xf32>
    %c0_10 = arith.constant 0 : index
    %c0_11 = arith.constant 0 : index
    %15 = vector.load %arg8[%c0_10, %c0_11] : memref<256x1xf32, #tpu.memory_space<vmem>>, vector<256x1xf32>
    %16 = arith.maximumf %15, %14 : vector<256x1xf32>
    %c0_12 = arith.constant 0 : index
    %c0_13 = arith.constant 0 : index
    %17 = vector.load %arg9[%c0_12, %c0_13] : memref<256x1xf32, #tpu.memory_space<vmem>>, vector<256x1xf32>
    %c0_14 = arith.constant 0 : index
    %c0_15 = arith.constant 0 : index
    %18 = vector.load %arg8[%c0_14, %c0_15] : memref<256x1xf32, #tpu.memory_space<vmem>>, vector<256x1xf32>
    %19 = arith.subf %18, %16 : vector<256x1xf32>
    %20 = math.exp %19 : vector<256x1xf32>
    %21 = arith.mulf %17, %20 : vector<256x1xf32>
    %22 = vector.broadcast %16 : vector<256x1xf32> to vector<256x256xf32>
    %23 = arith.subf %8, %22 : vector<256x256xf32>
    %24 = math.exp %23 : vector<256x256xf32>
    %cst_16 = arith.constant dense<0.000000e+00> : vector<256xf32>
    %25 = vector.multi_reduction <add>, %24, %cst_16 [1] : vector<256x256xf32> to vector<256xf32>
    %26 = vector.shape_cast %25 : vector<256xf32> to vector<256x1xf32>
    %27 = arith.addf %21, %26 : vector<256x1xf32>
    %c0_17 = arith.constant 0 : index
    %c0_18 = arith.constant 0 : index
    %28 = vector.load %arg9[%c0_17, %c0_18] : memref<256x1xf32, #tpu.memory_space<vmem>>, vector<256x1xf32>
    tpu.vector_store %arg9[%c0_17, %c0_18], %27 {strides = array<i32>} : memref<256x1xf32, #tpu.memory_space<vmem>>, vector<256x1xf32>,
    %c0_19 = arith.constant 0 : index
    %c0_20 = arith.constant 0 : index
    %29 = vector.load %arg8[%c0_19, %c0_20] : memref<256x1xf32, #tpu.memory_space<vmem>>, vector<256x1xf32>
    tpu.vector_store %arg8[%c0_19, %c0_20], %16 {strides = array<i32>} : memref<256x1xf32, #tpu.memory_space<vmem>>, vector<256x1xf32>,
    %c0_21 = arith.constant 0 : index
    %c0_22 = arith.constant 0 : index
    %30 = vector.load %arg10[%c0_21, %c0_22] : memref<256x1xf32, #tpu.memory_space<vmem>>, vector<256x1xf32>
    %cst_23 = arith.constant dense<0.000000e+00> : vector<256xf32>
    %31 = vector.multi_reduction <add>, %8, %cst_23 [1] : vector<256x256xf32> to vector<256xf32>
    %32 = vector.shape_cast %31 : vector<256xf32> to vector<256x1xf32>
    %33 = arith.addf %30, %32 : vector<256x1xf32>
    %c0_24 = arith.constant 0 : index
    %c0_25 = arith.constant 0 : index
    %34 = vector.load %arg10[%c0_24, %c0_25] : memref<256x1xf32, #tpu.memory_space<vmem>>, vector<256x1xf32>
    tpu.vector_store %arg10[%c0_24, %c0_25], %33 {strides = array<i32>} : memref<256x1xf32, #tpu.memory_space<vmem>>, vector<256x1xf32>,
    %c0_26 = arith.constant 0 : index
    %c0_27 = arith.constant 0 : index
    %35 = vector.load %arg5[%c0_26, %c0_27] : memref<256x1xi32, #tpu.memory_space<vmem>>, vector<256x1xi32>
    %c256_i32 = arith.constant 256 : i32
    %36 = arith.muli %arg1, %c256_i32 : i32
    %37 = tpu.iota {dimensions = array<i32: 1>} : vector<256x256xi32>
    %38 = vector.broadcast %36 : i32 to vector<256x256xi32>
    %39 = arith.addi %38, %37 : vector<256x256xi32>
    %c0_28 = arith.constant 0 : index
    %c0_29 = arith.constant 0 : index
    %40 = vector.load %arg11[%c0_28, %c0_29] : memref<256x1xf32, #tpu.memory_space<vmem>>, vector<256x1xf32>
    %41 = vector.broadcast %35 : vector<256x1xi32> to vector<256x256xi32>
    %42 = arith.cmpi eq, %39, %41 : vector<256x256xi32>
    %cst_30 = arith.constant 0.000000e+00 : f32
    %43 = vector.broadcast %cst_30 : f32 to vector<256x256xf32>
    %44 = arith.select %42, %8, %43 : vector<256x256xi1>, vector<256x256xf32>
    %cst_31 = arith.constant dense<0.000000e+00> : vector<256xf32>
    %45 = vector.multi_reduction <add>, %44, %cst_31 [1] : vector<256x256xf32> to vector<256xf32>
    %46 = vector.shape_cast %45 : vector<256xf32> to vector<256x1xf32>
    %47 = arith.addf %40, %46 : vector<256x1xf32>
    %c0_32 = arith.constant 0 : index
    %c0_33 = arith.constant 0 : index
    %48 = vector.load %arg11[%c0_32, %c0_33] : memref<256x1xf32, #tpu.memory_space<vmem>>, vector<256x1xf32>
    tpu.vector_store %arg11[%c0_32, %c0_33], %47 {strides = array<i32>} : memref<256x1xf32, #tpu.memory_space<vmem>>, vector<256x1xf32>,
    %c0_34 = arith.constant 0 : index
    %c0_35 = arith.constant 0 : index
    %49 = vector.load %arg12[%c0_34, %c0_35] : memref<256x1xf32, #tpu.memory_space<vmem>>, vector<256x1xf32>
    %c1_i32 = arith.constant 1 : i32
    %50 = vector.broadcast %c1_i32 : i32 to vector<256x256xi32>
    %51 = arith.cmpi eq, %39, %50 : vector<256x256xi32>
    %cst_36 = arith.constant 0.000000e+00 : f32
    %52 = vector.broadcast %cst_36 : f32 to vector<256x256xf32>
    %53 = arith.select %51, %8, %52 : vector<256x256xi1>, vector<256x256xf32>
    %cst_37 = arith.constant dense<0.000000e+00> : vector<256xf32>
    %54 = vector.multi_reduction <add>, %53, %cst_37 [1] : vector<256x256xf32> to vector<256xf32>
    %55 = vector.shape_cast %54 : vector<256xf32> to vector<256x1xf32>
    %56 = arith.addf %49, %55 : vector<256x1xf32>
    %c0_38 = arith.constant 0 : index
    %c0_39 = arith.constant 0 : index
    %57 = vector.load %arg12[%c0_38, %c0_39] : memref<256x1xf32, #tpu.memory_space<vmem>>, vector<256x1xf32>
    tpu.vector_store %arg12[%c0_38, %c0_39], %56 {strides = array<i32>} : memref<256x1xf32, #tpu.memory_space<vmem>>, vector<256x1xf32>,
    %c0_i32_40 = arith.constant 0 : i32
    %58 = arith.cmpi eq, %arg1, %c0_i32_40 : i32
    %59 = arith.extui %58 : i1 to i32
    %c0_i32_41 = arith.constant 0 : i32
    %60 = arith.cmpi ne, %59, %c0_i32_41 : i32
    scf.if %60 {
      %c0_42 = arith.constant 0 : index
      %c0_43 = arith.constant 0 : index
      %61 = vector.load %arg8[%c0_42, %c0_43] : memref<256x1xf32, #tpu.memory_space<vmem>>, vector<256x1xf32>
      %c0_44 = arith.constant 0 : index
      %c0_45 = arith.constant 0 : index
      %62 = vector.load %arg9[%c0_44, %c0_45] : memref<256x1xf32, #tpu.memory_space<vmem>>, vector<256x1xf32>
      %63 = math.log %62 : vector<256x1xf32>
      %64 = arith.addf %61, %63 : vector<256x1xf32>
      %c0_46 = arith.constant 0 : index
      %c0_47 = arith.constant 0 : index
      %65 = vector.load %arg11[%c0_46, %c0_47] : memref<256x1xf32, #tpu.memory_space<vmem>>, vector<256x1xf32>
      %66 = arith.subf %65, %64 : vector<256x1xf32>
      %c0_48 = arith.constant 0 : index
      %c0_49 = arith.constant 0 : index
      %67 = vector.load %arg10[%c0_48, %c0_49] : memref<256x1xf32, #tpu.memory_space<vmem>>, vector<256x1xf32>
      %cst_50 = arith.constant 2.560000e+02 : f32
      %68 = vector.broadcast %cst_50 : f32 to vector<256x1xf32>
      %69 = arith.mulf %68, %64 : vector<256x1xf32>
      %70 = arith.subf %67, %69 : vector<256x1xf32>
      %c0_51 = arith.constant 0 : index
      %c0_52 = arith.constant 0 : index
      %71 = vector.load %arg12[%c0_51, %c0_52] : memref<256x1xf32, #tpu.memory_space<vmem>>, vector<256x1xf32>
      %72 = arith.subf %71, %64 : vector<256x1xf32>
      %cst_53 = arith.constant 8.000000e-01 : f32
      %73 = vector.broadcast %cst_53 : f32 to vector<256x1xf32>
      %74 = arith.mulf %73, %66 : vector<256x1xf32>
      %75 = arith.subf %70, %66 : vector<256x1xf32>
      %76 = arith.subf %75, %72 : vector<256x1xf32>
      %cst_54 = arith.constant 7.87401571E-4 : f32
      %77 = vector.broadcast %cst_54 : f32 to vector<256x1xf32>
      %78 = arith.mulf %77, %76 : vector<256x1xf32>
      %79 = arith.addf %74, %78 : vector<256x1xf32>
      %c1_i32_55 = arith.constant 1 : i32
      %80 = vector.broadcast %c1_i32_55 : i32 to vector<256x1xi32>
      %81 = arith.cmpi ne, %35, %80 : vector<256x1xi32>
      %82 = arith.extui %81 : vector<256x1xi1> to vector<256x1xi32>
      %83 = arith.sitofp %82 : vector<256x1xi32> to vector<256x1xf32>
      %cst_56 = arith.constant -1.60786927 : f32
      %84 = vector.broadcast %cst_56 : f32 to vector<256x1xf32>
      %85 = arith.subf %84, %79 : vector<256x1xf32>
      %86 = arith.mulf %83, %85 : vector<256x1xf32>
      %c0_57 = arith.constant 0 : index
      %c0_58 = arith.constant 0 : index
      %87 = vector.load %arg7[%c0_57, %c0_58] : memref<256x1xf32, #tpu.memory_space<vmem>>, vector<256x1xf32>
      tpu.vector_store %arg7[%c0_57, %c0_58], %86 {strides = array<i32>} : memref<256x1xf32, #tpu.memory_space<vmem>>, vector<256x1xf32>,
    } else {
    }
    return
  }
  func.func @transform_0(%arg0: i32, %arg1: i32) -> (i32, i32) {
    %c0_i32 = arith.constant 0 : i32
    %c0_i32_0 = arith.constant 0 : i32
    return %arg0, %c0_i32 : i32, i32
  }
  func.func @transform_1(%arg0: i32, %arg1: i32) -> (i32, i32) {
    %c0_i32 = arith.constant 0 : i32
    %c0_i32_0 = arith.constant 0 : i32
    return %c0_i32, %arg1 : i32, i32
  }
  func.func @transform_2(%arg0: i32, %arg1: i32) -> (i32, i32) {
    %c0_i32 = arith.constant 0 : i32
    %c0_i32_0 = arith.constant 0 : i32
    return %c0_i32, %arg1 : i32, i32
  }
  func.func @transform_3(%arg0: i32, %arg1: i32) -> (i32, i32) {
    %c0_i32 = arith.constant 0 : i32
    %c0_i32_0 = arith.constant 0 : i32
    return %arg0, %c0_i32 : i32, i32
  }
  func.func @transform_4(%arg0: i32, %arg1: i32) -> (i32, i32) {
    %c0_i32 = arith.constant 0 : i32
    return %arg0, %arg1 : i32, i32
  }
  func.func @transform_5(%arg0: i32, %arg1: i32) -> (i32, i32) {
    %c0_i32 = arith.constant 0 : i32
    %c0_i32_0 = arith.constant 0 : i32
    return %arg0, %c0_i32 : i32, i32
  }
}

</mosaic_0001>

<llo_original>
// kernel: tpu_custom_call.1
$region0: #{tpu_custom_call.1}
  #allocation0 [shape = 'u32[]', space=smem, size = 0x4, offset = 0x4, fixed_abs, tag = 'smem constant byte address 0x4 - core index']
  #allocation1 [shape = 'u32[72,128]{1,0:T(1,128)}', space=vmem, size = 0x9000, scoped, tag = 'internal scratch']
  #allocation2 [shape = 'f32[256,1]{1,0:T(8,128)}', space=vmem, size = 0x20000, scoped, tag = 'scratch operand']
  #allocation3 [shape = 'f32[256,1]{1,0:T(8,128)}', space=vmem, size = 0x20000, scoped, tag = 'scratch operand']
  #allocation4 [shape = 'f32[256,1]{1,0:T(8,128)}', space=vmem, size = 0x20000, scoped, tag = 'scratch operand']
  #allocation5 [shape = 'f32[256,1]{1,0:T(8,128)}', space=vmem, size = 0x20000, scoped, tag = 'scratch operand']
  #allocation6 [shape = 'f32[256,1]{1,0:T(8,128)}', space=vmem, size = 0x20000, scoped, tag = 'scratch operand']
  %s0 = inlined_call_operand.vmem [shape: f32[256,128], index: 0, kind: input, shape index: {}]
  %s1 = inlined_call_operand.hbm [shape: bf16[128,256], index: 1, kind: input, shape index: {}]
  %s2 = inlined_call_operand.vmem [shape: f32[1,256], index: 2, kind: input, shape index: {}]
  %s3 = inlined_call_operand.vmem [shape: s32[256,1], index: 3, kind: input, shape index: {}]
  %s4 = inlined_call_operand.hbm [shape: f32[256,256], index: 4, kind: output, shape index: {0}]
  %s5 = inlined_call_operand.vmem [shape: f32[256,1], index: 5, kind: output, shape index: {1}]
  %6 = xla_tuple %s4, %s5
  %s7 = sld [smem:[#allocation0]]
  $region46: #{tpu_custom_call.1} parent=0
    _
  %s9 = ssub.s32 1, %s7
  %s10 = scalar_select 0, %s9, %s7
  $region1: #{tpu_custom_call.1} parent=0
    #allocation7 [shape = 'u8[65536]{0}', space=vmem, size = 0x10000, scoped, tag = 'input window, operand 1, single buffered']
    #allocation8 [shape = 's32[1]{0}', space=sflag, size = 0x4, scoped, tag = 'scoped memory for tpu_custom_call.1']
    #allocation9 [shape = 's32[1]{0}', space=sflag, size = 0x4, scoped, tag = 'scoped memory for tpu_custom_call.1']
    #allocation10 [shape = 'u8[262144]{0}', space=vmem, size = 0x40000, scoped, tag = 'output window, operand 0, single buffered']
    %11 = vsyncpa [#allocation8], 0
    %12 = vsyncpa [#allocation9], 0
    // Predicated region
    $region2: #{tpu_custom_call.1} parent=1 // pred_check
      _
    $region3: #{tpu_custom_call.1} parent=1 // pred_check_branch
      %14 = sbr.rel (0) target = $region5
    $region4: #{tpu_custom_call.1} parent=1 // pred_region
      _
    $region5: #{tpu_custom_call.1} parent=1 // pred_fallthru
      _
    // Predicated region
    $region6: #{tpu_custom_call.1} parent=1 // pred_check
      _
    $region7: #{tpu_custom_call.1} parent=1 // pred_check_branch
      %16 = sbr.rel (0) target = $region9
    $region8: #{tpu_custom_call.1} parent=1 // pred_region
      %18 = vsyncadd [#allocation8], 0
      %s19 = sshll.u32 %s1, 4
      %s20 = int_to_ptr.hbm [resolvable:$true] %s19
      %s21 = sshll.u32 [#allocation7], 4
      %s22 = int_to_ptr.vmem [resolvable:$true] %s21
      %27 = dma.hbm_to_vmem [thread:$0]  %s20, 2048, %s22, [#allocation8], 128, 128, 8
    $region9: #{tpu_custom_call.1} parent=1 // pred_fallthru
      _
    // Predicated region
    $region10: #{tpu_custom_call.1} parent=1 // pred_check
      _
    $region11: #{tpu_custom_call.1} parent=1 // pred_check_branch
      %29 = sbr.rel (0) target = $region13
    $region12: #{tpu_custom_call.1} parent=1 // pred_region
      _
    $region13: #{tpu_custom_call.1} parent=1 // pred_fallthru
      _
    // Predicated region
    $region14: #{tpu_custom_call.1} parent=1 // pred_check
      _
    $region15: #{tpu_custom_call.1} parent=1 // pred_check_branch
      %31 = sbr.rel (0) target = $region17
    $region16: #{tpu_custom_call.1} parent=1 // pred_region
      _
    $region17: #{tpu_custom_call.1} parent=1 // pred_fallthru
      _
    // Predicated region
    $region18: #{tpu_custom_call.1} parent=1 // pred_check
      _
    $region19: #{tpu_custom_call.1} parent=1 // pred_check_branch
      %33 = sbr.rel (0) target = $region21
    $region20: #{tpu_custom_call.1} parent=1 // pred_region
      %35 = dma.done [#allocation8], 2048
    $region21: #{tpu_custom_call.1} parent=1 // pred_fallthru
      _
    %v36 = vld [vmem:[%s0] sm:$0xff]
    %v37 = vld [vmem:[%s0 + $0x8] sm:$0xff]
    %v38 = vld [vmem:[%s0 + $0x10] sm:$0xff]
    %v39 = vld [vmem:[%s0 + $0x18] sm:$0xff]
    %v40 = vld [vmem:[%s0 + $0x20] sm:$0xff]
    %v41 = vld [vmem:[%s0 + $0x28] sm:$0xff]
    %v42 = vld [vmem:[%s0 + $0x30] sm:$0xff]
    %v43 = vld [vmem:[%s0 + $0x38] sm:$0xff]
    %v44 = vld [vmem:[%s0 + $0x40] sm:$0xff]
    %v45 = vld [vmem:[%s0 + $0x48] sm:$0xff]
    %v46 = vld [vmem:[%s0 + $0x50] sm:$0xff]
    %v47 = vld [vmem:[%s0 + $0x58] sm:$0xff]
    %v48 = vld [vmem:[%s0 + $0x60] sm:$0xff]
    %v49 = vld [vmem:[%s0 + $0x68] sm:$0xff]
    %v50 = vld [vmem:[%s0 + $0x70] sm:$0xff]
    %v51 = vld [vmem:[%s0 + $0x78] sm:$0xff]
    %v52 = vld [vmem:[%s0 + $0x80] sm:$0xff]
    %v53 = vld [vmem:[%s0 + $0x88] sm:$0xff]
    %v54 = vld [vmem:[%s0 + $0x90] sm:$0xff]
    %v55 = vld [vmem:[%s0 + $0x98] sm:$0xff]
    %v56 = vld [vmem:[%s0 + $0xa0] sm:$0xff]
    %v57 = vld [vmem:[%s0 + $0xa8] sm:$0xff]
    %v58 = vld [vmem:[%s0 + $0xb0] sm:$0xff]
    %v59 = vld [vmem:[%s0 + $0xb8] sm:$0xff]
    %v60 = vld [vmem:[%s0 + $0xc0] sm:$0xff]
    %v61 = vld [vmem:[%s0 + $0xc8] sm:$0xff]
    %v62 = vld [vmem:[%s0 + $0xd0] sm:$0xff]
    %v63 = vld [vmem:[%s0 + $0xd8] sm:$0xff]
    %v64 = vld [vmem:[%s0 + $0xe0] sm:$0xff]
    %v65 = vld [vmem:[%s0 + $0xe8] sm:$0xff]
    %v66 = vld [vmem:[%s0 + $0xf0] sm:$0xff]
    %v67 = vld [vmem:[%s0 + $0xf8] sm:$0xff]
    %v68 = vmul.f32 %v36, 11.313708
    %v69 = vmul.f32 %v37, 11.313708
    %v70 = vmul.f32 %v38, 11.313708
    %v71 = vmul.f32 %v39, 11.313708
    %v72 = vmul.f32 %v40, 11.313708
    %v73 = vmul.f32 %v41, 11.313708
    %v74 = vmul.f32 %v42, 11.313708
    %v75 = vmul.f32 %v43, 11.313708
    %v76 = vmul.f32 %v44, 11.313708
    %v77 = vmul.f32 %v45, 11.313708
    %v78 = vmul.f32 %v46, 11.313708
    %v79 = vmul.f32 %v47, 11.313708
    %v80 = vmul.f32 %v48, 11.313708
    %v81 = vmul.f32 %v49, 11.313708
    %v82 = vmul.f32 %v50, 11.313708
    %v83 = vmul.f32 %v51, 11.313708
    %v84 = vmul.f32 %v52, 11.313708
    %v85 = vmul.f32 %v53, 11.313708
    %v86 = vmul.f32 %v54, 11.313708
    %v87 = vmul.f32 %v55, 11.313708
    %v88 = vmul.f32 %v56, 11.313708
    %v89 = vmul.f32 %v57, 11.313708
    %v90 = vmul.f32 %v58, 11.313708
    %v91 = vmul.f32 %v59, 11.313708
    %v92 = vmul.f32 %v60, 11.313708
    %v93 = vmul.f32 %v61, 11.313708
    %v94 = vmul.f32 %v62, 11.313708
    %v95 = vmul.f32 %v63, 11.313708
    %v96 = vmul.f32 %v64, 11.313708
    %v97 = vmul.f32 %v65, 11.313708
    %v98 = vmul.f32 %v66, 11.313708
    %v99 = vmul.f32 %v67, 11.313708
    %v100 = vpack.c.bf16 %v69, %v68
    %v101 = vpack.c.bf16 %v71, %v70
    %v102 = vpack.c.bf16 %v73, %v72
    %v103 = vpack.c.bf16 %v75, %v74
    %v104 = vpack.c.bf16 %v77, %v76
    %v105 = vpack.c.bf16 %v79, %v78
    %v106 = vpack.c.bf16 %v81, %v80
    %v107 = vpack.c.bf16 %v83, %v82
    %v108 = vpack.c.bf16 %v85, %v84
    %v109 = vpack.c.bf16 %v87, %v86
    %v110 = vpack.c.bf16 %v89, %v88
    %v111 = vpack.c.bf16 %v91, %v90
    %v112 = vpack.c.bf16 %v93, %v92
    %v113 = vpack.c.bf16 %v95, %v94
    %v114 = vpack.c.bf16 %v97, %v96
    %v115 = vpack.c.bf16 %v99, %v98
    %v116 = vld [vmem:[#allocation7] sm:$0xff]
    %v117 = vld [vmem:[#allocation7 + $0x8] sm:$0xff]
    %v118 = vld [vmem:[#allocation7 + $0x10] sm:$0xff]
    %v119 = vld [vmem:[#allocation7 + $0x18] sm:$0xff]
    %v120 = vld [vmem:[#allocation7 + $0x20] sm:$0xff]
    %v121 = vld [vmem:[#allocation7 + $0x28] sm:$0xff]
    %v122 = vld [vmem:[#allocation7 + $0x30] sm:$0xff]
    %v123 = vld [vmem:[#allocation7 + $0x38] sm:$0xff]
    %v124 = vld [vmem:[#allocation7 + $0x40] sm:$0xff]
    %v125 = vld [vmem:[#allocation7 + $0x48] sm:$0xff]
    %v126 = vld [vmem:[#allocation7 + $0x50] sm:$0xff]
    %v127 = vld [vmem:[#allocation7 + $0x58] sm:$0xff]
    %v128 = vld [vmem:[#allocation7 + $0x60] sm:$0xff]
    %v129 = vld [vmem:[#allocation7 + $0x68] sm:$0xff]
    %v130 = vld [vmem:[#allocation7 + $0x70] sm:$0xff]
    %v131 = vld [vmem:[#allocation7 + $0x78] sm:$0xff]
    %v132 = vld [vmem:[%s2] sm:$0x3]
    %v134 = vperm.slane %v132, 0
    %v135 = vperm.slane %v132, 1
    %v154 = vunpack.c.l.b16 %v116
    %v155 = vunpack.c.h.b16 %v116
    %v156 = vunpack.c.l.b16 %v117
    %v157 = vunpack.c.h.b16 %v117
    %v158 = vunpack.c.l.b16 %v118
    %v159 = vunpack.c.h.b16 %v118
    %v160 = vunpack.c.l.b16 %v119
    %v161 = vunpack.c.h.b16 %v119
    %v162 = vunpack.c.l.b16 %v120
    %v163 = vunpack.c.h.b16 %v120
    %v164 = vunpack.c.l.b16 %v121
    %v165 = vunpack.c.h.b16 %v121
    %v166 = vunpack.c.l.b16 %v122
    %v167 = vunpack.c.h.b16 %v122
    %v168 = vunpack.c.l.b16 %v123
    %v169 = vunpack.c.h.b16 %v123
    %v170 = vunpack.c.l.b16 %v124
    %v171 = vunpack.c.h.b16 %v124
    %v172 = vunpack.c.l.b16 %v125
    %v173 = vunpack.c.h.b16 %v125
    %v174 = vunpack.c.l.b16 %v126
    %v175 = vunpack.c.h.b16 %v126
    %v176 = vunpack.c.l.b16 %v127
    %v177 = vunpack.c.h.b16 %v127
    %v178 = vunpack.c.l.b16 %v128
    %v179 = vunpack.c.h.b16 %v128
    %v180 = vunpack.c.l.b16 %v129
    %v181 = vunpack.c.h.b16 %v129
    %v182 = vunpack.c.l.b16 %v130
    %v183 = vunpack.c.h.b16 %v130
    %v184 = vunpack.c.l.b16 %v131
    %v185 = vunpack.c.h.b16 %v131
    %v186 = vpack.c.b16 %v156, %v154
    %v187 = vpack.c.b16 %v157, %v155
    %v188 = vpack.c.b16 %v160, %v158
    %v189 = vpack.c.b16 %v161, %v159
    %v190 = vpack.c.b16 %v164, %v162
    %v191 = vpack.c.b16 %v165, %v163
    %v192 = vpack.c.b16 %v168, %v166
    %v193 = vpack.c.b16 %v169, %v167
    %v194 = vpack.c.b16 %v172, %v170
    %v195 = vpack.c.b16 %v173, %v171
    %v196 = vpack.c.b16 %v176, %v174
    %v197 = vpack.c.b16 %v177, %v175
    %v198 = vpack.c.b16 %v180, %v178
    %v199 = vpack.c.b16 %v181, %v179
    %v200 = vpack.c.b16 %v184, %v182
    %v201 = vpack.c.b16 %v185, %v183
    %218 = vmatpush.bf16.msra.mxu0 %v200
    %219 = vmatpush.bf16.msra.mxu0 %v198
    %220 = vmatpush.bf16.msra.mxu0 %v196
    %221 = vmatpush.bf16.msra.mxu0 %v194
    %222 = vmatpush.bf16.msra.mxu0 %v192
    %223 = vmatpush.bf16.msra.mxu0 %v190
    %224 = vmatpush.bf16.msra.mxu0 %v188
    %225 = vmatpush.bf16.msra.mxu0 %v186
    %226 = vmatmul.bf16.gmra.mxu0 %v100
    %v227 = vpop.f32.mrf.mxu0
    %v228 = vadd.f32 %v134, %v227
    %v229 = vpop.f32.mrf.mxu0
    %v230 = vadd.f32 %v134, %v229
    %231 = vmatmul.bf16.gmra.mxu0 %v101
    %v232 = vpop.f32.mrf.mxu0
    %v233 = vadd.f32 %v134, %v232
    %v234 = vpop.f32.mrf.mxu0
    %v235 = vadd.f32 %v134, %v234
    %236 = vmatmul.bf16.gmra.mxu0 %v102
    %v237 = vpop.f32.mrf.mxu0
    %v238 = vadd.f32 %v134, %v237
    %v239 = vpop.f32.mrf.mxu0
    %v240 = vadd.f32 %v134, %v239
    %241 = vmatmul.bf16.gmra.mxu0 %v103
    %v242 = vpop.f32.mrf.mxu0
    %v243 = vadd.f32 %v134, %v242
    %v244 = vpop.f32.mrf.mxu0
    %v245 = vadd.f32 %v134, %v244
    %246 = vmatmul.bf16.gmra.mxu0 %v104
    %v247 = vpop.f32.mrf.mxu0
    %v248 = vadd.f32 %v134, %v247
    %v249 = vpop.f32.mrf.mxu0
    %v250 = vadd.f32 %v134, %v249
    %251 = vmatmul.bf16.gmra.mxu0 %v105
    %v252 = vpop.f32.mrf.mxu0
    %v253 = vadd.f32 %v134, %v252
    %v254 = vpop.f32.mrf.mxu0
    %v255 = vadd.f32 %v134, %v254
    %256 = vmatmul.bf16.gmra.mxu0 %v106
    %v257 = vpop.f32.mrf.mxu0
    %v258 = vadd.f32 %v134, %v257
    %v259 = vpop.f32.mrf.mxu0
    %v260 = vadd.f32 %v134, %v259
    %261 = vmatmul.bf16.gmra.mxu0 %v107
    %v262 = vpop.f32.mrf.mxu0
    %v263 = vadd.f32 %v134, %v262
    %v264 = vpop.f32.mrf.mxu0
    %v265 = vadd.f32 %v134, %v264
    %266 = vmatmul.bf16.gmra.mxu0 %v108
    %v267 = vpop.f32.mrf.mxu0
    %v268 = vadd.f32 %v134, %v267
    %v269 = vpop.f32.mrf.mxu0
    %v270 = vadd.f32 %v134, %v269
    %271 = vmatmul.bf16.gmra.mxu0 %v109
    %v272 = vpop.f32.mrf.mxu0
    %v273 = vadd.f32 %v134, %v272
    %v274 = vpop.f32.mrf.mxu0
    %v275 = vadd.f32 %v134, %v274
    %276 = vmatmul.bf16.gmra.mxu0 %v110
    %v277 = vpop.f32.mrf.mxu0
    %v278 = vadd.f32 %v134, %v277
    %v279 = vpop.f32.mrf.mxu0
    %v280 = vadd.f32 %v134, %v279
    %281 = vmatmul.bf16.gmra.mxu0 %v111
    %v282 = vpop.f32.mrf.mxu0
    %v283 = vadd.f32 %v134, %v282
    %v284 = vpop.f32.mrf.mxu0
    %v285 = vadd.f32 %v134, %v284
    %286 = vmatmul.bf16.gmra.mxu0 %v112
    %v287 = vpop.f32.mrf.mxu0
    %v288 = vadd.f32 %v134, %v287
    %v289 = vpop.f32.mrf.mxu0
    %v290 = vadd.f32 %v134, %v289
    %291 = vmatmul.bf16.gmra.mxu0 %v113
    %v292 = vpop.f32.mrf.mxu0
    %v293 = vadd.f32 %v134, %v292
    %v294 = vpop.f32.mrf.mxu0
    %v295 = vadd.f32 %v134, %v294
    %296 = vmatmul.bf16.gmra.mxu0 %v114
    %v297 = vpop.f32.mrf.mxu0
    %v298 = vadd.f32 %v134, %v297
    %v299 = vpop.f32.mrf.mxu0
    %v300 = vadd.f32 %v134, %v299
    %301 = vmatmul.bf16.gmra.mxu0 %v115
    %v302 = vpop.f32.mrf.mxu0
    %v303 = vadd.f32 %v134, %v302
    %v304 = vpop.f32.mrf.mxu0
    %v305 = vadd.f32 %v134, %v304
    %306 = vdwg.mxu0
    %307 = vmatpush.bf16.msra.mxu0 %v201
    %308 = vmatpush.bf16.msra.mxu0 %v199
    %309 = vmatpush.bf16.msra.mxu0 %v197
    %310 = vmatpush.bf16.msra.mxu0 %v195
    %311 = vmatpush.bf16.msra.mxu0 %v193
    %312 = vmatpush.bf16.msra.mxu0 %v191
    %313 = vmatpush.bf16.msra.mxu0 %v189
    %314 = vmatpush.bf16.msra.mxu0 %v187
    %315 = vmatmul.bf16.gmra.mxu0 %v100
    %v316 = vpop.f32.mrf.mxu0
    %v317 = vadd.f32 %v135, %v316
    %v318 = vpop.f32.mrf.mxu0
    %v319 = vadd.f32 %v135, %v318
    %320 = vmatmul.bf16.gmra.mxu0 %v101
    %v321 = vpop.f32.mrf.mxu0
    %v322 = vadd.f32 %v135, %v321
    %v323 = vpop.f32.mrf.mxu0
    %v324 = vadd.f32 %v135, %v323
    %325 = vmatmul.bf16.gmra.mxu0 %v102
    %v326 = vpop.f32.mrf.mxu0
    %v327 = vadd.f32 %v135, %v326
    %v328 = vpop.f32.mrf.mxu0
    %v329 = vadd.f32 %v135, %v328
    %330 = vmatmul.bf16.gmra.mxu0 %v103
    %v331 = vpop.f32.mrf.mxu0
    %v332 = vadd.f32 %v135, %v331
    %v333 = vpop.f32.mrf.mxu0
    %v334 = vadd.f32 %v135, %v333
    %335 = vmatmul.bf16.gmra.mxu0 %v104
    %v336 = vpop.f32.mrf.mxu0
    %v337 = vadd.f32 %v135, %v336
    %v338 = vpop.f32.mrf.mxu0
    %v339 = vadd.f32 %v135, %v338
    %340 = vmatmul.bf16.gmra.mxu0 %v105
    %v341 = vpop.f32.mrf.mxu0
    %v342 = vadd.f32 %v135, %v341
    %v343 = vpop.f32.mrf.mxu0
    %v344 = vadd.f32 %v135, %v343
    %345 = vmatmul.bf16.gmra.mxu0 %v106
    %v346 = vpop.f32.mrf.mxu0
    %v347 = vadd.f32 %v135, %v346
    %v348 = vpop.f32.mrf.mxu0
    %v349 = vadd.f32 %v135, %v348
    %350 = vmatmul.bf16.gmra.mxu0 %v107
    %v351 = vpop.f32.mrf.mxu0
    %v352 = vadd.f32 %v135, %v351
    %v353 = vpop.f32.mrf.mxu0
    %v354 = vadd.f32 %v135, %v353
    %355 = vmatmul.bf16.gmra.mxu0 %v108
    %v356 = vpop.f32.mrf.mxu0
    %v357 = vadd.f32 %v135, %v356
    %v358 = vpop.f32.mrf.mxu0
    %v359 = vadd.f32 %v135, %v358
    %360 = vmatmul.bf16.gmra.mxu0 %v109
    %v361 = vpop.f32.mrf.mxu0
    %v362 = vadd.f32 %v135, %v361
    %v363 = vpop.f32.mrf.mxu0
    %v364 = vadd.f32 %v135, %v363
    %365 = vmatmul.bf16.gmra.mxu0 %v110
    %v366 = vpop.f32.mrf.mxu0
    %v367 = vadd.f32 %v135, %v366
    %v368 = vpop.f32.mrf.mxu0
    %v369 = vadd.f32 %v135, %v368
    %370 = vmatmul.bf16.gmra.mxu0 %v111
    %v371 = vpop.f32.mrf.mxu0
    %v372 = vadd.f32 %v135, %v371
    %v373 = vpop.f32.mrf.mxu0
    %v374 = vadd.f32 %v135, %v373
    %375 = vmatmul.bf16.gmra.mxu0 %v112
    %v376 = vpop.f32.mrf.mxu0
    %v377 = vadd.f32 %v135, %v376
    %v378 = vpop.f32.mrf.mxu0
    %v379 = vadd.f32 %v135, %v378
    %380 = vmatmul.bf16.gmra.mxu0 %v113
    %v381 = vpop.f32.mrf.mxu0
    %v382 = vadd.f32 %v135, %v381
    %v383 = vpop.f32.mrf.mxu0
    %v384 = vadd.f32 %v135, %v383
    %385 = vmatmul.bf16.gmra.mxu0 %v114
    %v386 = vpop.f32.mrf.mxu0
    %v387 = vadd.f32 %v135, %v386
    %v388 = vpop.f32.mrf.mxu0
    %v389 = vadd.f32 %v135, %v388
    %390 = vmatmul.bf16.gmra.mxu0 %v115
    %v391 = vpop.f32.mrf.mxu0
    %v392 = vadd.f32 %v135, %v391
    %v393 = vpop.f32.mrf.mxu0
    %v394 = vadd.f32 %v135, %v393
    %395 = vdwg.mxu0
    %396 = vst [vmem:[#allocation10] sm:$0xff] %v228
    %397 = vst [vmem:[#allocation10 + $0x8] sm:$0xff] %v317
    %398 = vst [vmem:[#allocation10 + $0x10] sm:$0xff] %v230
    %399 = vst [vmem:[#allocation10 + $0x18] sm:$0xff] %v319
    %400 = vst [vmem:[#allocation10 + $0x20] sm:$0xff] %v233
    %401 = vst [vmem:[#allocation10 + $0x28] sm:$0xff] %v322
    %402 = vst [vmem:[#allocation10 + $0x30] sm:$0xff] %v235
    %403 = vst [vmem:[#allocation10 + $0x38] sm:$0xff] %v324
    %404 = vst [vmem:[#allocation10 + $0x40] sm:$0xff] %v238
    %405 = vst [vmem:[#allocation10 + $0x48] sm:$0xff] %v327
    %406 = vst [vmem:[#allocation10 + $0x50] sm:$0xff] %v240
    %407 = vst [vmem:[#allocation10 + $0x58] sm:$0xff] %v329
    %408 = vst [vmem:[#allocation10 + $0x60] sm:$0xff] %v243
    %409 = vst [vmem:[#allocation10 + $0x68] sm:$0xff] %v332
    %410 = vst [vmem:[#allocation10 + $0x70] sm:$0xff] %v245
    %411 = vst [vmem:[#allocation10 + $0x78] sm:$0xff] %v334
    %412 = vst [vmem:[#allocation10 + $0x80] sm:$0xff] %v248
    %413 = vst [vmem:[#allocation10 + $0x88] sm:$0xff] %v337
    %414 = vst [vmem:[#allocation10 + $0x90] sm:$0xff] %v250
    %415 = vst [vmem:[#allocation10 + $0x98] sm:$0xff] %v339
    %416 = vst [vmem:[#allocation10 + $0xa0] sm:$0xff] %v253
    %417 = vst [vmem:[#allocation10 + $0xa8] sm:$0xff] %v342
    %418 = vst [vmem:[#allocation10 + $0xb0] sm:$0xff] %v255
    %419 = vst [vmem:[#allocation10 + $0xb8] sm:$0xff] %v344
    %420 = vst [vmem:[#allocation10 + $0xc0] sm:$0xff] %v258
    %421 = vst [vmem:[#allocation10 + $0xc8] sm:$0xff] %v347
    %422 = vst [vmem:[#allocation10 + $0xd0] sm:$0xff] %v260
    %423 = vst [vmem:[#allocation10 + $0xd8] sm:$0xff] %v349
    %424 = vst [vmem:[#allocation10 + $0xe0] sm:$0xff] %v263
    %425 = vst [vmem:[#allocation10 + $0xe8] sm:$0xff] %v352
    %426 = vst [vmem:[#allocation10 + $0xf0] sm:$0xff] %v265
    %427 = vst [vmem:[#allocation10 + $0xf8] sm:$0xff] %v354
    %428 = vst [vmem:[#allocation10 + $0x100] sm:$0xff] %v268
    %429 = vst [vmem:[#allocation10 + $0x108] sm:$0xff] %v357
    %430 = vst [vmem:[#allocation10 + $0x110] sm:$0xff] %v270
    %431 = vst [vmem:[#allocation10 + $0x118] sm:$0xff] %v359
    %432 = vst [vmem:[#allocation10 + $0x120] sm:$0xff] %v273
    %433 = vst [vmem:[#allocation10 + $0x128] sm:$0xff] %v362
    %434 = vst [vmem:[#allocation10 + $0x130] sm:$0xff] %v275
    %435 = vst [vmem:[#allocation10 + $0x138] sm:$0xff] %v364
    %436 = vst [vmem:[#allocation10 + $0x140] sm:$0xff] %v278
    %437 = vst [vmem:[#allocation10 + $0x148] sm:$0xff] %v367
    %438 = vst [vmem:[#allocation10 + $0x150] sm:$0xff] %v280
    %439 = vst [vmem:[#allocation10 + $0x158] sm:$0xff] %v369
    %440 = vst [vmem:[#allocation10 + $0x160] sm:$0xff] %v283
    %441 = vst [vmem:[#allocation10 + $0x168] sm:$0xff] %v372
    %442 = vst [vmem:[#allocation10 + $0x170] sm:$0xff] %v285
    %443 = vst [vmem:[#allocation10 + $0x178] sm:$0xff] %v374
    %444 = vst [vmem:[#allocation10 + $0x180] sm:$0xff] %v288
    %445 = vst [vmem:[#allocation10 + $0x188] sm:$0xff] %v377
    %446 = vst [vmem:[#allocation10 + $0x190] sm:$0xff] %v290
    %447 = vst [vmem:[#allocation10 + $0x198] sm:$0xff] %v379
    %448 = vst [vmem:[#allocation10 + $0x1a0] sm:$0xff] %v293
    %449 = vst [vmem:[#allocation10 + $0x1a8] sm:$0xff] %v382
    %450 = vst [vmem:[#allocation10 + $0x1b0] sm:$0xff] %v295
    %451 = vst [vmem:[#allocation10 + $0x1b8] sm:$0xff] %v384
    %452 = vst [vmem:[#allocation10 + $0x1c0] sm:$0xff] %v298
    %453 = vst [vmem:[#allocation10 + $0x1c8] sm:$0xff] %v387
    %454 = vst [vmem:[#allocation10 + $0x1d0] sm:$0xff] %v300
    %455 = vst [vmem:[#allocation10 + $0x1d8] sm:$0xff] %v389
    %456 = vst [vmem:[#allocation10 + $0x1e0] sm:$0xff] %v303
    %457 = vst [vmem:[#allocation10 + $0x1e8] sm:$0xff] %v392
    %458 = vst [vmem:[#allocation10 + $0x1f0] sm:$0xff] %v305
    %459 = vst [vmem:[#allocation10 + $0x1f8] sm:$0xff] %v394
    %p460 = scmp.eq.s32.totalorder 0, 0
    // Predicated region
    $region22: #{tpu_custom_call.1} parent=1 // pred_check
      %p461 = pneg %p460
    $region23: #{tpu_custom_call.1} parent=1 // pred_check_branch
      %463 = sbr.rel (%p461) target = $region25
    $region24: #{tpu_custom_call.1} parent=1 // pred_region
      %vm464 = vcmask 7168
      %465 = vst.msk [vmem:[#allocation2] sm:$0xff] %vm464, -inf
      %466 = vst.msk [vmem:[#allocation2 + $0x8] sm:$0xff] %vm464, -inf
      %467 = vst.msk [vmem:[#allocation2 + $0x10] sm:$0xff] %vm464, -inf
      %468 = vst.msk [vmem:[#allocation2 + $0x18] sm:$0xff] %vm464, -inf
      %469 = vst.msk [vmem:[#allocation2 + $0x20] sm:$0xff] %vm464, -inf
      %470 = vst.msk [vmem:[#allocation2 + $0x28] sm:$0xff] %vm464, -inf
      %471 = vst.msk [vmem:[#allocation2 + $0x30] sm:$0xff] %vm464, -inf
      %472 = vst.msk [vmem:[#allocation2 + $0x38] sm:$0xff] %vm464, -inf
      %473 = vst.msk [vmem:[#allocation2 + $0x40] sm:$0xff] %vm464, -inf
      %474 = vst.msk [vmem:[#allocation2 + $0x48] sm:$0xff] %vm464, -inf
      %475 = vst.msk [vmem:[#allocation2 + $0x50] sm:$0xff] %vm464, -inf
      %476 = vst.msk [vmem:[#allocation2 + $0x58] sm:$0xff] %vm464, -inf
      %477 = vst.msk [vmem:[#allocation2 + $0x60] sm:$0xff] %vm464, -inf
      %478 = vst.msk [vmem:[#allocation2 + $0x68] sm:$0xff] %vm464, -inf
      %479 = vst.msk [vmem:[#allocation2 + $0x70] sm:$0xff] %vm464, -inf
      %480 = vst.msk [vmem:[#allocation2 + $0x78] sm:$0xff] %vm464, -inf
      %481 = vst.msk [vmem:[#allocation2 + $0x80] sm:$0xff] %vm464, -inf
      %482 = vst.msk [vmem:[#allocation2 + $0x88] sm:$0xff] %vm464, -inf
      %483 = vst.msk [vmem:[#allocation2 + $0x90] sm:$0xff] %vm464, -inf
      %484 = vst.msk [vmem:[#allocation2 + $0x98] sm:$0xff] %vm464, -inf
      %485 = vst.msk [vmem:[#allocation2 + $0xa0] sm:$0xff] %vm464, -inf
      %486 = vst.msk [vmem:[#allocation2 + $0xa8] sm:$0xff] %vm464, -inf
      %487 = vst.msk [vmem:[#allocation2 + $0xb0] sm:$0xff] %vm464, -inf
      %488 = vst.msk [vmem:[#allocation2 + $0xb8] sm:$0xff] %vm464, -inf
      %489 = vst.msk [vmem:[#allocation2 + $0xc0] sm:$0xff] %vm464, -inf
      %490 = vst.msk [vmem:[#allocation2 + $0xc8] sm:$0xff] %vm464, -inf
      %491 = vst.msk [vmem:[#allocation2 + $0xd0] sm:$0xff] %vm464, -inf
      %492 = vst.msk [vmem:[#allocation2 + $0xd8] sm:$0xff] %vm464, -inf
      %493 = vst.msk [vmem:[#allocation2 + $0xe0] sm:$0xff] %vm464, -inf
      %494 = vst.msk [vmem:[#allocation2 + $0xe8] sm:$0xff] %vm464, -inf
      %495 = vst.msk [vmem:[#allocation2 + $0xf0] sm:$0xff] %vm464, -inf
      %496 = vst.msk [vmem:[#allocation2 + $0xf8] sm:$0xff] %vm464, -inf
      %497 = vst.msk [vmem:[#allocation3] sm:$0xff] %vm464, 0.0
      %498 = vst.msk [vmem:[#allocation3 + $0x8] sm:$0xff] %vm464, 0.0
      %499 = vst.msk [vmem:[#allocation3 + $0x10] sm:$0xff] %vm464, 0.0
      %500 = vst.msk [vmem:[#allocation3 + $0x18] sm:$0xff] %vm464, 0.0
      %501 = vst.msk [vmem:[#allocation3 + $0x20] sm:$0xff] %vm464, 0.0
      %502 = vst.msk [vmem:[#allocation3 + $0x28] sm:$0xff] %vm464, 0.0
      %503 = vst.msk [vmem:[#allocation3 + $0x30] sm:$0xff] %vm464, 0.0
      %504 = vst.msk [vmem:[#allocation3 + $0x38] sm:$0xff] %vm464, 0.0
      %505 = vst.msk [vmem:[#allocation3 + $0x40] sm:$0xff] %vm464, 0.0
      %506 = vst.msk [vmem:[#allocation3 + $0x48] sm:$0xff] %vm464, 0.0
      %507 = vst.msk [vmem:[#allocation3 + $0x50] sm:$0xff] %vm464, 0.0
      %508 = vst.msk [vmem:[#allocation3 + $0x58] sm:$0xff] %vm464, 0.0
      %509 = vst.msk [vmem:[#allocation3 + $0x60] sm:$0xff] %vm464, 0.0
      %510 = vst.msk [vmem:[#allocation3 + $0x68] sm:$0xff] %vm464, 0.0
      %511 = vst.msk [vmem:[#allocation3 + $0x70] sm:$0xff] %vm464, 0.0
      %512 = vst.msk [vmem:[#allocation3 + $0x78] sm:$0xff] %vm464, 0.0
      %513 = vst.msk [vmem:[#allocation3 + $0x80] sm:$0xff] %vm464, 0.0
      %514 = vst.msk [vmem:[#allocation3 + $0x88] sm:$0xff] %vm464, 0.0
      %515 = vst.msk [vmem:[#allocation3 + $0x90] sm:$0xff] %vm464, 0.0
      %516 = vst.msk [vmem:[#allocation3 + $0x98] sm:$0xff] %vm464, 0.0
      %517 = vst.msk [vmem:[#allocation3 + $0xa0] sm:$0xff] %vm464, 0.0
      %518 = vst.msk [vmem:[#allocation3 + $0xa8] sm:$0xff] %vm464, 0.0
      %519 = vst.msk [vmem:[#allocation3 + $0xb0] sm:$0xff] %vm464, 0.0
      %520 = vst.msk [vmem:[#allocation3 + $0xb8] sm:$0xff] %vm464, 0.0
      %521 = vst.msk [vmem:[#allocation3 + $0xc0] sm:$0xff] %vm464, 0.0
      %522 = vst.msk [vmem:[#allocation3 + $0xc8] sm:$0xff] %vm464, 0.0
      %523 = vst.msk [vmem:[#allocation3 + $0xd0] sm:$0xff] %vm464, 0.0
      %524 = vst.msk [vmem:[#allocation3 + $0xd8] sm:$0xff] %vm464, 0.0
      %525 = vst.msk [vmem:[#allocation3 + $0xe0] sm:$0xff] %vm464, 0.0
      %526 = vst.msk [vmem:[#allocation3 + $0xe8] sm:$0xff] %vm464, 0.0
      %527 = vst.msk [vmem:[#allocation3 + $0xf0] sm:$0xff] %vm464, 0.0
      %528 = vst.msk [vmem:[#allocation3 + $0xf8] sm:$0xff] %vm464, 0.0
      %529 = vst.msk [vmem:[#allocation4] sm:$0xff] %vm464, 0.0
      %530 = vst.msk [vmem:[#allocation4 + $0x8] sm:$0xff] %vm464, 0.0
      %531 = vst.msk [vmem:[#allocation4 + $0x10] sm:$0xff] %vm464, 0.0
      %532 = vst.msk [vmem:[#allocation4 + $0x18] sm:$0xff] %vm464, 0.0
      %533 = vst.msk [vmem:[#allocation4 + $0x20] sm:$0xff] %vm464, 0.0
      %534 = vst.msk [vmem:[#allocation4 + $0x28] sm:$0xff] %vm464, 0.0
      %535 = vst.msk [vmem:[#allocation4 + $0x30] sm:$0xff] %vm464, 0.0
      %536 = vst.msk [vmem:[#allocation4 + $0x38] sm:$0xff] %vm464, 0.0
      %537 = vst.msk [vmem:[#allocation4 + $0x40] sm:$0xff] %vm464, 0.0
      %538 = vst.msk [vmem:[#allocation4 + $0x48] sm:$0xff] %vm464, 0.0
      %539 = vst.msk [vmem:[#allocation4 + $0x50] sm:$0xff] %vm464, 0.0
      %540 = vst.msk [vmem:[#allocation4 + $0x58] sm:$0xff] %vm464, 0.0
      %541 = vst.msk [vmem:[#allocation4 + $0x60] sm:$0xff] %vm464, 0.0
      %542 = vst.msk [vmem:[#allocation4 + $0x68] sm:$0xff] %vm464, 0.0
      %543 = vst.msk [vmem:[#allocation4 + $0x70] sm:$0xff] %vm464, 0.0
      %544 = vst.msk [vmem:[#allocation4 + $0x78] sm:$0xff] %vm464, 0.0
      %545 = vst.msk [vmem:[#allocation4 + $0x80] sm:$0xff] %vm464, 0.0
      %546 = vst.msk [vmem:[#allocation4 + $0x88] sm:$0xff] %vm464, 0.0
      %547 = vst.msk [vmem:[#allocation4 + $0x90] sm:$0xff] %vm464, 0.0
      %548 = vst.msk [vmem:[#allocation4 + $0x98] sm:$0xff] %vm464, 0.0
      %549 = vst.msk [vmem:[#allocation4 + $0xa0] sm:$0xff] %vm464, 0.0
      %550 = vst.msk [vmem:[#allocation4 + $0xa8] sm:$0xff] %vm464, 0.0
      %551 = vst.msk [vmem:[#allocation4 + $0xb0] sm:$0xff] %vm464, 0.0
      %552 = vst.msk [vmem:[#allocation4 + $0xb8] sm:$0xff] %vm464, 0.0
      %553 = vst.msk [vmem:[#allocation4 + $0xc0] sm:$0xff] %vm464, 0.0
      %554 = vst.msk [vmem:[#allocation4 + $0xc8] sm:$0xff] %vm464, 0.0
      %555 = vst.msk [vmem:[#allocation4 + $0xd0] sm:$0xff] %vm464, 0.0
      %556 = vst.msk [vmem:[#allocation4 + $0xd8] sm:$0xff] %vm464, 0.0
      %557 = vst.msk [vmem:[#allocation4 + $0xe0] sm:$0xff] %vm464, 0.0
      %558 = vst.msk [vmem:[#allocation4 + $0xe8] sm:$0xff] %vm464, 0.0
      %559 = vst.msk [vmem:[#allocation4 + $0xf0] sm:$0xff] %vm464, 0.0
      %560 = vst.msk [vmem:[#allocation4 + $0xf8] sm:$0xff] %vm464, 0.0
      %561 = vst.msk [vmem:[#allocation5] sm:$0xff] %vm464, 0.0
      %562 = vst.msk [vmem:[#allocation5 + $0x8] sm:$0xff] %vm464, 0.0
      %563 = vst.msk [vmem:[#allocation5 + $0x10] sm:$0xff] %vm464, 0.0
      %564 = vst.msk [vmem:[#allocation5 + $0x18] sm:$0xff] %vm464, 0.0
      %565 = vst.msk [vmem:[#allocation5 + $0x20] sm:$0xff] %vm464, 0.0
      %566 = vst.msk [vmem:[#allocation5 + $0x28] sm:$0xff] %vm464, 0.0
      %567 = vst.msk [vmem:[#allocation5 + $0x30] sm:$0xff] %vm464, 0.0
      %568 = vst.msk [vmem:[#allocation5 + $0x38] sm:$0xff] %vm464, 0.0
      %569 = vst.msk [vmem:[#allocation5 + $0x40] sm:$0xff] %vm464, 0.0
      %570 = vst.msk [vmem:[#allocation5 + $0x48] sm:$0xff] %vm464, 0.0
      %571 = vst.msk [vmem:[#allocation5 + $0x50] sm:$0xff] %vm464, 0.0
      %572 = vst.msk [vmem:[#allocation5 + $0x58] sm:$0xff] %vm464, 0.0
      %573 = vst.msk [vmem:[#allocation5 + $0x60] sm:$0xff] %vm464, 0.0
      %574 = vst.msk [vmem:[#allocation5 + $0x68] sm:$0xff] %vm464, 0.0
      %575 = vst.msk [vmem:[#allocation5 + $0x70] sm:$0xff] %vm464, 0.0
      %576 = vst.msk [vmem:[#allocation5 + $0x78] sm:$0xff] %vm464, 0.0
      %577 = vst.msk [vmem:[#allocation5 + $0x80] sm:$0xff] %vm464, 0.0
      %578 = vst.msk [vmem:[#allocation5 + $0x88] sm:$0xff] %vm464, 0.0
      %579 = vst.msk [vmem:[#allocation5 + $0x90] sm:$0xff] %vm464, 0.0
      %580 = vst.msk [vmem:[#allocation5 + $0x98] sm:$0xff] %vm464, 0.0
      %581 = vst.msk [vmem:[#allocation5 + $0xa0] sm:$0xff] %vm464, 0.0
      %582 = vst.msk [vmem:[#allocation5 + $0xa8] sm:$0xff] %vm464, 0.0
      %583 = vst.msk [vmem:[#allocation5 + $0xb0] sm:$0xff] %vm464, 0.0
      %584 = vst.msk [vmem:[#allocation5 + $0xb8] sm:$0xff] %vm464, 0.0
      %585 = vst.msk [vmem:[#allocation5 + $0xc0] sm:$0xff] %vm464, 0.0
      %586 = vst.msk [vmem:[#allocation5 + $0xc8] sm:$0xff] %vm464, 0.0
      %587 = vst.msk [vmem:[#allocation5 + $0xd0] sm:$0xff] %vm464, 0.0
      %588 = vst.msk [vmem:[#allocation5 + $0xd8] sm:$0xff] %vm464, 0.0
      %589 = vst.msk [vmem:[#allocation5 + $0xe0] sm:$0xff] %vm464, 0.0
      %590 = vst.msk [vmem:[#allocation5 + $0xe8] sm:$0xff] %vm464, 0.0
      %591 = vst.msk [vmem:[#allocation5 + $0xf0] sm:$0xff] %vm464, 0.0
      %592 = vst.msk [vmem:[#allocation5 + $0xf8] sm:$0xff] %vm464, 0.0
      %593 = vst.msk [vmem:[#allocation6] sm:$0xff] %vm464, 0.0
      %594 = vst.msk [vmem:[#allocation6 + $0x8] sm:$0xff] %vm464, 0.0
      %595 = vst.msk [vmem:[#allocation6 + $0x10] sm:$0xff] %vm464, 0.0
      %596 = vst.msk [vmem:[#allocation6 + $0x18] sm:$0xff] %vm464, 0.0
      %597 = vst.msk [vmem:[#allocation6 + $0x20] sm:$0xff] %vm464, 0.0
      %598 = vst.msk [vmem:[#allocation6 + $0x28] sm:$0xff] %vm464, 0.0
      %599 = vst.msk [vmem:[#allocation6 + $0x30] sm:$0xff] %vm464, 0.0
      %600 = vst.msk [vmem:[#allocation6 + $0x38] sm:$0xff] %vm464, 0.0
      %601 = vst.msk [vmem:[#allocation6 + $0x40] sm:$0xff] %vm464, 0.0
      %602 = vst.msk [vmem:[#allocation6 + $0x48] sm:$0xff] %vm464, 0.0
      %603 = vst.msk [vmem:[#allocation6 + $0x50] sm:$0xff] %vm464, 0.0
      %604 = vst.msk [vmem:[#allocation6 + $0x58] sm:$0xff] %vm464, 0.0
      %605 = vst.msk [vmem:[#allocation6 + $0x60] sm:$0xff] %vm464, 0.0
      %606 = vst.msk [vmem:[#allocation6 + $0x68] sm:$0xff] %vm464, 0.0
      %607 = vst.msk [vmem:[#allocation6 + $0x70] sm:$0xff] %vm464, 0.0
      %608 = vst.msk [vmem:[#allocation6 + $0x78] sm:$0xff] %vm464, 0.0
      %609 = vst.msk [vmem:[#allocation6 + $0x80] sm:$0xff] %vm464, 0.0
      %610 = vst.msk [vmem:[#allocation6 + $0x88] sm:$0xff] %vm464, 0.0
      %611 = vst.msk [vmem:[#allocation6 + $0x90] sm:$0xff] %vm464, 0.0
      %612 = vst.msk [vmem:[#allocation6 + $0x98] sm:$0xff] %vm464, 0.0
      %613 = vst.msk [vmem:[#allocation6 + $0xa0] sm:$0xff] %vm464, 0.0
      %614 = vst.msk [vmem:[#allocation6 + $0xa8] sm:$0xff] %vm464, 0.0
      %615 = vst.msk [vmem:[#allocation6 + $0xb0] sm:$0xff] %vm464, 0.0
      %616 = vst.msk [vmem:[#allocation6 + $0xb8] sm:$0xff] %vm464, 0.0
      %617 = vst.msk [vmem:[#allocation6 + $0xc0] sm:$0xff] %vm464, 0.0
      %618 = vst.msk [vmem:[#allocation6 + $0xc8] sm:$0xff] %vm464, 0.0
      %619 = vst.msk [vmem:[#allocation6 + $0xd0] sm:$0xff] %vm464, 0.0
      %620 = vst.msk [vmem:[#allocation6 + $0xd8] sm:$0xff] %vm464, 0.0
      %621 = vst.msk [vmem:[#allocation6 + $0xe0] sm:$0xff] %vm464, 0.0
      %622 = vst.msk [vmem:[#allocation6 + $0xe8] sm:$0xff] %vm464, 0.0
      %623 = vst.msk [vmem:[#allocation6 + $0xf0] sm:$0xff] %vm464, 0.0
      %624 = vst.msk [vmem:[#allocation6 + $0xf8] sm:$0xff] %vm464, 0.0
    $region25: #{tpu_custom_call.1} parent=1 // pred_fallthru
      _
    %v625 = vmax.f32 %v228, %v317
    %626 = vmax.xlane.f32.xlu0 %v625
    %v627 = vpop.xlane.xlu0 %626
    %v628 = vmax.f32 %v230, %v319
    %629 = vmax.xlane.f32.xlu0 %v628
    %v630 = vpop.xlane.xlu0 %629
    %v631 = vmax.f32 %v233, %v322
    %632 = vmax.xlane.f32.xlu0 %v631
    %v633 = vpop.xlane.xlu0 %632
    %v634 = vmax.f32 %v235, %v324
    %635 = vmax.xlane.f32.xlu0 %v634
    %v636 = vpop.xlane.xlu0 %635
    %v637 = vmax.f32 %v238, %v327
    %638 = vmax.xlane.f32.xlu0 %v637
    %v639 = vpop.xlane.xlu0 %638
    %v640 = vmax.f32 %v240, %v329
    %641 = vmax.xlane.f32.xlu0 %v640
    %v642 = vpop.xlane.xlu0 %641
    %v643 = vmax.f32 %v243, %v332
    %644 = vmax.xlane.f32.xlu0 %v643
    %v645 = vpop.xlane.xlu0 %644
    %v646 = vmax.f32 %v245, %v334
    %647 = vmax.xlane.f32.xlu0 %v646
    %v648 = vpop.xlane.xlu0 %647
    %v649 = vmax.f32 %v248, %v337
    %650 = vmax.xlane.f32.xlu0 %v649
    %v651 = vpop.xlane.xlu0 %650
    %v652 = vmax.f32 %v250, %v339
    %653 = vmax.xlane.f32.xlu0 %v652
    %v654 = vpop.xlane.xlu0 %653
    %v655 = vmax.f32 %v253, %v342
    %656 = vmax.xlane.f32.xlu0 %v655
    %v657 = vpop.xlane.xlu0 %656
    %v658 = vmax.f32 %v255, %v344
    %659 = vmax.xlane.f32.xlu0 %v658
    %v660 = vpop.xlane.xlu0 %659
    %v661 = vmax.f32 %v258, %v347
    %662 = vmax.xlane.f32.xlu0 %v661
    %v663 = vpop.xlane.xlu0 %662
    %v664 = vmax.f32 %v260, %v349
    %665 = vmax.xlane.f32.xlu0 %v664
    %v666 = vpop.xlane.xlu0 %665
    %v667 = vmax.f32 %v263, %v352
    %668 = vmax.xlane.f32.xlu0 %v667
    %v669 = vpop.xlane.xlu0 %668
    %v670 = vmax.f32 %v265, %v354
    %671 = vmax.xlane.f32.xlu0 %v670
    %v672 = vpop.xlane.xlu0 %671
    %v673 = vmax.f32 %v268, %v357
    %674 = vmax.xlane.f32.xlu0 %v673
    %v675 = vpop.xlane.xlu0 %674
    %v676 = vmax.f32 %v270, %v359
    %677 = vmax.xlane.f32.xlu0 %v676
    %v678 = vpop.xlane.xlu0 %677
    %v679 = vmax.f32 %v273, %v362
    %680 = vmax.xlane.f32.xlu0 %v679
    %v681 = vpop.xlane.xlu0 %680
    %v682 = vmax.f32 %v275, %v364
    %683 = vmax.xlane.f32.xlu0 %v682
    %v684 = vpop.xlane.xlu0 %683
    %v685 = vmax.f32 %v278, %v367
    %686 = vmax.xlane.f32.xlu0 %v685
    %v687 = vpop.xlane.xlu0 %686
    %v688 = vmax.f32 %v280, %v369
    %689 = vmax.xlane.f32.xlu0 %v688
    %v690 = vpop.xlane.xlu0 %689
    %v691 = vmax.f32 %v283, %v372
    %692 = vmax.xlane.f32.xlu0 %v691
    %v693 = vpop.xlane.xlu0 %692
    %v694 = vmax.f32 %v285, %v374
    %695 = vmax.xlane.f32.xlu0 %v694
    %v696 = vpop.xlane.xlu0 %695
    %v697 = vmax.f32 %v288, %v377
    %698 = vmax.xlane.f32.xlu0 %v697
    %v699 = vpop.xlane.xlu0 %698
    %v700 = vmax.f32 %v290, %v379
    %701 = vmax.xlane.f32.xlu0 %v700
    %v702 = vpop.xlane.xlu0 %701
    %v703 = vmax.f32 %v293, %v382
    %704 = vmax.xlane.f32.xlu0 %v703
    %v705 = vpop.xlane.xlu0 %704
    %v706 = vmax.f32 %v295, %v384
    %707 = vmax.xlane.f32.xlu0 %v706
    %v708 = vpop.xlane.xlu0 %707
    %v709 = vmax.f32 %v298, %v387
    %710 = vmax.xlane.f32.xlu0 %v709
    %v711 = vpop.xlane.xlu0 %710
    %v712 = vmax.f32 %v300, %v389
    %713 = vmax.xlane.f32.xlu0 %v712
    %v714 = vpop.xlane.xlu0 %713
    %v715 = vmax.f32 %v303, %v392
    %716 = vmax.xlane.f32.xlu0 %v715
    %v717 = vpop.xlane.xlu0 %716
    %v718 = vmax.f32 %v305, %v394
    %719 = vmax.xlane.f32.xlu0 %v718
    %v720 = vpop.xlane.xlu0 %719
    %v721 = vld [vmem:[#allocation2] sm:$0xff]
    %v722 = vld [vmem:[#allocation2 + $0x8] sm:$0xff]
    %v723 = vld [vmem:[#allocation2 + $0x10] sm:$0xff]
    %v724 = vld [vmem:[#allocation2 + $0x18] sm:$0xff]
    %v725 = vld [vmem:[#allocation2 + $0x20] sm:$0xff]
    %v726 = vld [vmem:[#allocation2 + $0x28] sm:$0xff]
    %v727 = vld [vmem:[#allocation2 + $0x30] sm:$0xff]
    %v728 = vld [vmem:[#allocation2 + $0x38] sm:$0xff]
    %v729 = vld [vmem:[#allocation2 + $0x40] sm:$0xff]
    %v730 = vld [vmem:[#allocation2 + $0x48] sm:$0xff]
    %v731 = vld [vmem:[#allocation2 + $0x50] sm:$0xff]
    %v732 = vld [vmem:[#allocation2 + $0x58] sm:$0xff]
    %v733 = vld [vmem:[#allocation2 + $0x60] sm:$0xff]
    %v734 = vld [vmem:[#allocation2 + $0x68] sm:$0xff]
    %v735 = vld [vmem:[#allocation2 + $0x70] sm:$0xff]
    %v736 = vld [vmem:[#allocation2 + $0x78] sm:$0xff]
    %v737 = vld [vmem:[#allocation2 + $0x80] sm:$0xff]
    %v738 = vld [vmem:[#allocation2 + $0x88] sm:$0xff]
    %v739 = vld [vmem:[#allocation2 + $0x90] sm:$0xff]
    %v740 = vld [vmem:[#allocation2 + $0x98] sm:$0xff]
    %v741 = vld [vmem:[#allocation2 + $0xa0] sm:$0xff]
    %v742 = vld [vmem:[#allocation2 + $0xa8] sm:$0xff]
    %v743 = vld [vmem:[#allocation2 + $0xb0] sm:$0xff]
    %v744 = vld [vmem:[#allocation2 + $0xb8] sm:$0xff]
    %v745 = vld [vmem:[#allocation2 + $0xc0] sm:$0xff]
    %v746 = vld [vmem:[#allocation2 + $0xc8] sm:$0xff]
    %v747 = vld [vmem:[#allocation2 + $0xd0] sm:$0xff]
    %v748 = vld [vmem:[#allocation2 + $0xd8] sm:$0xff]
    %v749 = vld [vmem:[#allocation2 + $0xe0] sm:$0xff]
    %v750 = vld [vmem:[#allocation2 + $0xe8] sm:$0xff]
    %v751 = vld [vmem:[#allocation2 + $0xf0] sm:$0xff]
    %v752 = vld [vmem:[#allocation2 + $0xf8] sm:$0xff]
    %v753 = vmax.f32 %v721, %v627
    %v754 = vmax.f32 %v722, %v630
    %v755 = vmax.f32 %v723, %v633
    %v756 = vmax.f32 %v724, %v636
    %v757 = vmax.f32 %v725, %v639
    %v758 = vmax.f32 %v726, %v642
    %v759 = vmax.f32 %v727, %v645
    %v760 = vmax.f32 %v728, %v648
    %v761 = vmax.f32 %v729, %v651
    %v762 = vmax.f32 %v730, %v654
    %v763 = vmax.f32 %v731, %v657
    %v764 = vmax.f32 %v732, %v660
    %v765 = vmax.f32 %v733, %v663
    %v766 = vmax.f32 %v734, %v666
    %v767 = vmax.f32 %v735, %v669
    %v768 = vmax.f32 %v736, %v672
    %v769 = vmax.f32 %v737, %v675
    %v770 = vmax.f32 %v738, %v678
    %v771 = vmax.f32 %v739, %v681
    %v772 = vmax.f32 %v740, %v684
    %v773 = vmax.f32 %v741, %v687
    %v774 = vmax.f32 %v742, %v690
    %v775 = vmax.f32 %v743, %v693
    %v776 = vmax.f32 %v744, %v696
    %v777 = vmax.f32 %v745, %v699
    %v778 = vmax.f32 %v746, %v702
    %v779 = vmax.f32 %v747, %v705
    %v780 = vmax.f32 %v748, %v708
    %v781 = vmax.f32 %v749, %v711
    %v782 = vmax.f32 %v750, %v714
    %v783 = vmax.f32 %v751, %v717
    %v784 = vmax.f32 %v752, %v720
    %v785 = vld [vmem:[#allocation3] sm:$0xff]
    %v786 = vld [vmem:[#allocation3 + $0x8] sm:$0xff]
    %v787 = vld [vmem:[#allocation3 + $0x10] sm:$0xff]
    %v788 = vld [vmem:[#allocation3 + $0x18] sm:$0xff]
    %v789 = vld [vmem:[#allocation3 + $0x20] sm:$0xff]
    %v790 = vld [vmem:[#allocation3 + $0x28] sm:$0xff]
    %v791 = vld [vmem:[#allocation3 + $0x30] sm:$0xff]
    %v792 = vld [vmem:[#allocation3 + $0x38] sm:$0xff]
    %v793 = vld [vmem:[#allocation3 + $0x40] sm:$0xff]
    %v794 = vld [vmem:[#allocation3 + $0x48] sm:$0xff]
    %v795 = vld [vmem:[#allocation3 + $0x50] sm:$0xff]
    %v796 = vld [vmem:[#allocation3 + $0x58] sm:$0xff]
    %v797 = vld [vmem:[#allocation3 + $0x60] sm:$0xff]
    %v798 = vld [vmem:[#allocation3 + $0x68] sm:$0xff]
    %v799 = vld [vmem:[#allocation3 + $0x70] sm:$0xff]
    %v800 = vld [vmem:[#allocation3 + $0x78] sm:$0xff]
    %v801 = vld [vmem:[#allocation3 + $0x80] sm:$0xff]
    %v802 = vld [vmem:[#allocation3 + $0x88] sm:$0xff]
    %v803 = vld [vmem:[#allocation3 + $0x90] sm:$0xff]
    %v804 = vld [vmem:[#allocation3 + $0x98] sm:$0xff]
    %v805 = vld [vmem:[#allocation3 + $0xa0] sm:$0xff]
    %v806 = vld [vmem:[#allocation3 + $0xa8] sm:$0xff]
    %v807 = vld [vmem:[#allocation3 + $0xb0] sm:$0xff]
    %v808 = vld [vmem:[#allocation3 + $0xb8] sm:$0xff]
    %v809 = vld [vmem:[#allocation3 + $0xc0] sm:$0xff]
    %v810 = vld [vmem:[#allocation3 + $0xc8] sm:$0xff]
    %v811 = vld [vmem:[#allocation3 + $0xd0] sm:$0xff]
    %v812 = vld [vmem:[#allocation3 + $0xd8] sm:$0xff]
    %v813 = vld [vmem:[#allocation3 + $0xe0] sm:$0xff]
    %v814 = vld [vmem:[#allocation3 + $0xe8] sm:$0xff]
    %v815 = vld [vmem:[#allocation3 + $0xf0] sm:$0xff]
    %v816 = vld [vmem:[#allocation3 + $0xf8] sm:$0xff]
    %v817 = vsub.f32 %v721, %v753
    %v818 = vsub.f32 %v722, %v754
    %v819 = vsub.f32 %v723, %v755
    %v820 = vsub.f32 %v724, %v756
    %v821 = vsub.f32 %v725, %v757
    %v822 = vsub.f32 %v726, %v758
    %v823 = vsub.f32 %v727, %v759
    %v824 = vsub.f32 %v728, %v760
    %v825 = vsub.f32 %v729, %v761
    %v826 = vsub.f32 %v730, %v762
    %v827 = vsub.f32 %v731, %v763
    %v828 = vsub.f32 %v732, %v764
    %v829 = vsub.f32 %v733, %v765
    %v830 = vsub.f32 %v734, %v766
    %v831 = vsub.f32 %v735, %v767
    %v832 = vsub.f32 %v736, %v768
    %v833 = vsub.f32 %v737, %v769
    %v834 = vsub.f32 %v738, %v770
    %v835 = vsub.f32 %v739, %v771
    %v836 = vsub.f32 %v740, %v772
    %v837 = vsub.f32 %v741, %v773
    %v838 = vsub.f32 %v742, %v774
    %v839 = vsub.f32 %v743, %v775
    %v840 = vsub.f32 %v744, %v776
    %v841 = vsub.f32 %v745, %v777
    %v842 = vsub.f32 %v746, %v778
    %v843 = vsub.f32 %v747, %v779
    %v844 = vsub.f32 %v748, %v780
    %v845 = vsub.f32 %v749, %v781
    %v846 = vsub.f32 %v750, %v782
    %v847 = vsub.f32 %v751, %v783
    %v848 = vsub.f32 %v752, %v784
    %v849 = vmul.f32 %v817, 1.442695
    %v850 = vpow.pop %v849
    %v851 = vmul.f32 %v818, 1.442695
    %v852 = vpow.pop %v851
    %v853 = vmul.f32 %v819, 1.442695
    %v854 = vpow.pop %v853
    %v855 = vmul.f32 %v820, 1.442695
    %v856 = vpow.pop %v855
    %v857 = vmul.f32 %v821, 1.442695
    %v858 = vpow.pop %v857
    %v859 = vmul.f32 %v822, 1.442695
    %v860 = vpow.pop %v859
    %v861 = vmul.f32 %v823, 1.442695
    %v862 = vpow.pop %v861
    %v863 = vmul.f32 %v824, 1.442695
    %v864 = vpow.pop %v863
    %v865 = vmul.f32 %v825, 1.442695
    %v866 = vpow.pop %v865
    %v867 = vmul.f32 %v826, 1.442695
    %v868 = vpow.pop %v867
    %v869 = vmul.f32 %v827, 1.442695
    %v870 = vpow.pop %v869
    %v871 = vmul.f32 %v828, 1.442695
    %v872 = vpow.pop %v871
    %v873 = vmul.f32 %v829, 1.442695
    %v874 = vpow.pop %v873
    %v875 = vmul.f32 %v830, 1.442695
    %v876 = vpow.pop %v875
    %v877 = vmul.f32 %v831, 1.442695
    %v878 = vpow.pop %v877
    %v879 = vmul.f32 %v832, 1.442695
    %v880 = vpow.pop %v879
    %v881 = vmul.f32 %v833, 1.442695
    %v882 = vpow.pop %v881
    %v883 = vmul.f32 %v834, 1.442695
    %v884 = vpow.pop %v883
    %v885 = vmul.f32 %v835, 1.442695
    %v886 = vpow.pop %v885
    %v887 = vmul.f32 %v836, 1.442695
    %v888 = vpow.pop %v887
    %v889 = vmul.f32 %v837, 1.442695
    %v890 = vpow.pop %v889
    %v891 = vmul.f32 %v838, 1.442695
    %v892 = vpow.pop %v891
    %v893 = vmul.f32 %v839, 1.442695
    %v894 = vpow.pop %v893
    %v895 = vmul.f32 %v840, 1.442695
    %v896 = vpow.pop %v895
    %v897 = vmul.f32 %v841, 1.442695
    %v898 = vpow.pop %v897
    %v899 = vmul.f32 %v842, 1.442695
    %v900 = vpow.pop %v899
    %v901 = vmul.f32 %v843, 1.442695
    %v902 = vpow.pop %v901
    %v903 = vmul.f32 %v844, 1.442695
    %v904 = vpow.pop %v903
    %v905 = vmul.f32 %v845, 1.442695
    %v906 = vpow.pop %v905
    %v907 = vmul.f32 %v846, 1.442695
    %v908 = vpow.pop %v907
    %v909 = vmul.f32 %v847, 1.442695
    %v910 = vpow.pop %v909
    %v911 = vmul.f32 %v848, 1.442695
    %v912 = vpow.pop %v911
    %v913 = vmul.f32 %v785, %v850
    %v914 = vmul.f32 %v786, %v852
    %v915 = vmul.f32 %v787, %v854
    %v916 = vmul.f32 %v788, %v856
    %v917 = vmul.f32 %v789, %v858
    %v918 = vmul.f32 %v790, %v860
    %v919 = vmul.f32 %v791, %v862
    %v920 = vmul.f32 %v792, %v864
    %v921 = vmul.f32 %v793, %v866
    %v922 = vmul.f32 %v794, %v868
    %v923 = vmul.f32 %v795, %v870
    %v924 = vmul.f32 %v796, %v872
    %v925 = vmul.f32 %v797, %v874
    %v926 = vmul.f32 %v798, %v876
    %v927 = vmul.f32 %v799, %v878
    %v928 = vmul.f32 %v800, %v880
    %v929 = vmul.f32 %v801, %v882
    %v930 = vmul.f32 %v802, %v884
    %v931 = vmul.f32 %v803, %v886
    %v932 = vmul.f32 %v804, %v888
    %v933 = vmul.f32 %v805, %v890
    %v934 = vmul.f32 %v806, %v892
    %v935 = vmul.f32 %v807, %v894
    %v936 = vmul.f32 %v808, %v896
    %v937 = vmul.f32 %v809, %v898
    %v938 = vmul.f32 %v810, %v900
    %v939 = vmul.f32 %v811, %v902
    %v940 = vmul.f32 %v812, %v904
    %v941 = vmul.f32 %v813, %v906
    %v942 = vmul.f32 %v814, %v908
    %v943 = vmul.f32 %v815, %v910
    %v944 = vmul.f32 %v816, %v912
    %946 = vset.pattern.permute.xlu0 0
    %947 = vperm.xlu0 %946, %v753
    %v948 = vpop.permute.xlu0 %947
    %951 = vset.pattern.permute.xlu0 0
    %952 = vperm.xlu0 %951, %v754
    %v953 = vpop.permute.xlu0 %952
    %956 = vset.pattern.permute.xlu0 0
    %957 = vperm.xlu0 %956, %v755
    %v958 = vpop.permute.xlu0 %957
    %961 = vset.pattern.permute.xlu0 0
    %962 = vperm.xlu0 %961, %v756
    %v963 = vpop.permute.xlu0 %962
    %966 = vset.pattern.permute.xlu0 0
    %967 = vperm.xlu0 %966, %v757
    %v968 = vpop.permute.xlu0 %967
    %971 = vset.pattern.permute.xlu0 0
    %972 = vperm.xlu0 %971, %v758
    %v973 = vpop.permute.xlu0 %972
    %976 = vset.pattern.permute.xlu0 0
    %977 = vperm.xlu0 %976, %v759
    %v978 = vpop.permute.xlu0 %977
    %981 = vset.pattern.permute.xlu0 0
    %982 = vperm.xlu0 %981, %v760
    %v983 = vpop.permute.xlu0 %982
    %986 = vset.pattern.permute.xlu0 0
    %987 = vperm.xlu0 %986, %v761
    %v988 = vpop.permute.xlu0 %987
    %991 = vset.pattern.permute.xlu0 0
    %992 = vperm.xlu0 %991, %v762
    %v993 = vpop.permute.xlu0 %992
    %996 = vset.pattern.permute.xlu0 0
    %997 = vperm.xlu0 %996, %v763
    %v998 = vpop.permute.xlu0 %997
    %1001 = vset.pattern.permute.xlu0 0
    %1002 = vperm.xlu0 %1001, %v764
    %v1003 = vpop.permute.xlu0 %1002
    %1006 = vset.pattern.permute.xlu0 0
    %1007 = vperm.xlu0 %1006, %v765
    %v1008 = vpop.permute.xlu0 %1007
    %1011 = vset.pattern.permute.xlu0 0
    %1012 = vperm.xlu0 %1011, %v766
    %v1013 = vpop.permute.xlu0 %1012
    %1016 = vset.pattern.permute.xlu0 0
    %1017 = vperm.xlu0 %1016, %v767
    %v1018 = vpop.permute.xlu0 %1017
    %1021 = vset.pattern.permute.xlu0 0
    %1022 = vperm.xlu0 %1021, %v768
    %v1023 = vpop.permute.xlu0 %1022
    %1026 = vset.pattern.permute.xlu0 0
    %1027 = vperm.xlu0 %1026, %v769
    %v1028 = vpop.permute.xlu0 %1027
    %1031 = vset.pattern.permute.xlu0 0
    %1032 = vperm.xlu0 %1031, %v770
    %v1033 = vpop.permute.xlu0 %1032
    %1036 = vset.pattern.permute.xlu0 0
    %1037 = vperm.xlu0 %1036, %v771
    %v1038 = vpop.permute.xlu0 %1037
    %1041 = vset.pattern.permute.xlu0 0
    %1042 = vperm.xlu0 %1041, %v772
    %v1043 = vpop.permute.xlu0 %1042
    %1046 = vset.pattern.permute.xlu0 0
    %1047 = vperm.xlu0 %1046, %v773
    %v1048 = vpop.permute.xlu0 %1047
    %1051 = vset.pattern.permute.xlu0 0
    %1052 = vperm.xlu0 %1051, %v774
    %v1053 = vpop.permute.xlu0 %1052
    %1056 = vset.pattern.permute.xlu0 0
    %1057 = vperm.xlu0 %1056, %v775
    %v1058 = vpop.permute.xlu0 %1057
    %1061 = vset.pattern.permute.xlu0 0
    %1062 = vperm.xlu0 %1061, %v776
    %v1063 = vpop.permute.xlu0 %1062
    %1066 = vset.pattern.permute.xlu0 0
    %1067 = vperm.xlu0 %1066, %v777
    %v1068 = vpop.permute.xlu0 %1067
    %1071 = vset.pattern.permute.xlu0 0
    %1072 = vperm.xlu0 %1071, %v778
    %v1073 = vpop.permute.xlu0 %1072
    %1076 = vset.pattern.permute.xlu0 0
    %1077 = vperm.xlu0 %1076, %v779
    %v1078 = vpop.permute.xlu0 %1077
    %1081 = vset.pattern.permute.xlu0 0
    %1082 = vperm.xlu0 %1081, %v780
    %v1083 = vpop.permute.xlu0 %1082
    %1086 = vset.pattern.permute.xlu0 0
    %1087 = vperm.xlu0 %1086, %v781
    %v1088 = vpop.permute.xlu0 %1087
    %1091 = vset.pattern.permute.xlu0 0
    %1092 = vperm.xlu0 %1091, %v782
    %v1093 = vpop.permute.xlu0 %1092
    %1096 = vset.pattern.permute.xlu0 0
    %1097 = vperm.xlu0 %1096, %v783
    %v1098 = vpop.permute.xlu0 %1097
    %1101 = vset.pattern.permute.xlu0 0
    %1102 = vperm.xlu0 %1101, %v784
    %v1103 = vpop.permute.xlu0 %1102
    %v1105 = vsub.f32 %v228, %v948
    %v1106 = vsub.f32 %v317, %v948
    %v1107 = vsub.f32 %v230, %v953
    %v1108 = vsub.f32 %v319, %v953
    %v1109 = vsub.f32 %v233, %v958
    %v1110 = vsub.f32 %v322, %v958
    %v1111 = vsub.f32 %v235, %v963
    %v1112 = vsub.f32 %v324, %v963
    %v1113 = vsub.f32 %v238, %v968
    %v1114 = vsub.f32 %v327, %v968
    %v1115 = vsub.f32 %v240, %v973
    %v1116 = vsub.f32 %v329, %v973
    %v1117 = vsub.f32 %v243, %v978
    %v1118 = vsub.f32 %v332, %v978
    %v1119 = vsub.f32 %v245, %v983
    %v1120 = vsub.f32 %v334, %v983
    %v1121 = vsub.f32 %v248, %v988
    %v1122 = vsub.f32 %v337, %v988
    %v1123 = vsub.f32 %v250, %v993
    %v1124 = vsub.f32 %v339, %v993
    %v1125 = vsub.f32 %v253, %v998
    %v1126 = vsub.f32 %v342, %v998
    %v1127 = vsub.f32 %v255, %v1003
    %v1128 = vsub.f32 %v344, %v1003
    %v1129 = vsub.f32 %v258, %v1008
    %v1130 = vsub.f32 %v347, %v1008
    %v1131 = vsub.f32 %v260, %v1013
    %v1132 = vsub.f32 %v349, %v1013
    %v1133 = vsub.f32 %v263, %v1018
    %v1134 = vsub.f32 %v352, %v1018
    %v1135 = vsub.f32 %v265, %v1023
    %v1136 = vsub.f32 %v354, %v1023
    %v1137 = vsub.f32 %v268, %v1028
    %v1138 = vsub.f32 %v357, %v1028
    %v1139 = vsub.f32 %v270, %v1033
    %v1140 = vsub.f32 %v359, %v1033
    %v1141 = vsub.f32 %v273, %v1038
    %v1142 = vsub.f32 %v362, %v1038
    %v1143 = vsub.f32 %v275, %v1043
    %v1144 = vsub.f32 %v364, %v1043
    %v1145 = vsub.f32 %v278, %v1048
    %v1146 = vsub.f32 %v367, %v1048
    %v1147 = vsub.f32 %v280, %v1053
    %v1148 = vsub.f32 %v369, %v1053
    %v1149 = vsub.f32 %v283, %v1058
    %v1150 = vsub.f32 %v372, %v1058
    %v1151 = vsub.f32 %v285, %v1063
    %v1152 = vsub.f32 %v374, %v1063
    %v1153 = vsub.f32 %v288, %v1068
    %v1154 = vsub.f32 %v377, %v1068
    %v1155 = vsub.f32 %v290, %v1073
    %v1156 = vsub.f32 %v379, %v1073
    %v1157 = vsub.f32 %v293, %v1078
    %v1158 = vsub.f32 %v382, %v1078
    %v1159 = vsub.f32 %v295, %v1083
    %v1160 = vsub.f32 %v384, %v1083
    %v1161 = vsub.f32 %v298, %v1088
    %v1162 = vsub.f32 %v387, %v1088
    %v1163 = vsub.f32 %v300, %v1093
    %v1164 = vsub.f32 %v389, %v1093
    %v1165 = vsub.f32 %v303, %v1098
    %v1166 = vsub.f32 %v392, %v1098
    %v1167 = vsub.f32 %v305, %v1103
    %v1168 = vsub.f32 %v394, %v1103
    %v1169 = vmul.f32 %v1105, 1.442695
    %v1170 = vpow.pop %v1169
    %v1171 = vmul.f32 %v1106, 1.442695
    %v1172 = vpow.pop %v1171
    %v1173 = vmul.f32 %v1107, 1.442695
    %v1174 = vpow.pop %v1173
    %v1175 = vmul.f32 %v1108, 1.442695
    %v1176 = vpow.pop %v1175
    %v1177 = vmul.f32 %v1109, 1.442695
    %v1178 = vpow.pop %v1177
    %v1179 = vmul.f32 %v1110, 1.442695
    %v1180 = vpow.pop %v1179
    %v1181 = vmul.f32 %v1111, 1.442695
    %v1182 = vpow.pop %v1181
    %v1183 = vmul.f32 %v1112, 1.442695
    %v1184 = vpow.pop %v1183
    %v1185 = vmul.f32 %v1113, 1.442695
    %v1186 = vpow.pop %v1185
    %v1187 = vmul.f32 %v1114, 1.442695
    %v1188 = vpow.pop %v1187
    %v1189 = vmul.f32 %v1115, 1.442695
    %v1190 = vpow.pop %v1189
    %v1191 = vmul.f32 %v1116, 1.442695
    %v1192 = vpow.pop %v1191
    %v1193 = vmul.f32 %v1117, 1.442695
    %v1194 = vpow.pop %v1193
    %v1195 = vmul.f32 %v1118, 1.442695
    %v1196 = vpow.pop %v1195
    %v1197 = vmul.f32 %v1119, 1.442695
    %v1198 = vpow.pop %v1197
    %v1199 = vmul.f32 %v1120, 1.442695
    %v1200 = vpow.pop %v1199
    %v1201 = vmul.f32 %v1121, 1.442695
    %v1202 = vpow.pop %v1201
    %v1203 = vmul.f32 %v1122, 1.442695
    %v1204 = vpow.pop %v1203
    %v1205 = vmul.f32 %v1123, 1.442695
    %v1206 = vpow.pop %v1205
    %v1207 = vmul.f32 %v1124, 1.442695
    %v1208 = vpow.pop %v1207
    %v1209 = vmul.f32 %v1125, 1.442695
    %v1210 = vpow.pop %v1209
    %v1211 = vmul.f32 %v1126, 1.442695
    %v1212 = vpow.pop %v1211
    %v1213 = vmul.f32 %v1127, 1.442695
    %v1214 = vpow.pop %v1213
    %v1215 = vmul.f32 %v1128, 1.442695
    %v1216 = vpow.pop %v1215
    %v1217 = vmul.f32 %v1129, 1.442695
    %v1218 = vpow.pop %v1217
    %v1219 = vmul.f32 %v1130, 1.442695
    %v1220 = vpow.pop %v1219
    %v1221 = vmul.f32 %v1131, 1.442695
    %v1222 = vpow.pop %v1221
    %v1223 = vmul.f32 %v1132, 1.442695
    %v1224 = vpow.pop %v1223
    %v1225 = vmul.f32 %v1133, 1.442695
    %v1226 = vpow.pop %v1225
    %v1227 = vmul.f32 %v1134, 1.442695
    %v1228 = vpow.pop %v1227
    %v1229 = vmul.f32 %v1135, 1.442695
    %v1230 = vpow.pop %v1229
    %v1231 = vmul.f32 %v1136, 1.442695
    %v1232 = vpow.pop %v1231
    %v1233 = vmul.f32 %v1137, 1.442695
    %v1234 = vpow.pop %v1233
    %v1235 = vmul.f32 %v1138, 1.442695
    %v1236 = vpow.pop %v1235
    %v1237 = vmul.f32 %v1139, 1.442695
    %v1238 = vpow.pop %v1237
    %v1239 = vmul.f32 %v1140, 1.442695
    %v1240 = vpow.pop %v1239
    %v1241 = vmul.f32 %v1141, 1.442695
    %v1242 = vpow.pop %v1241
    %v1243 = vmul.f32 %v1142, 1.442695
    %v1244 = vpow.pop %v1243
    %v1245 = vmul.f32 %v1143, 1.442695
    %v1246 = vpow.pop %v1245
    %v1247 = vmul.f32 %v1144, 1.442695
    %v1248 = vpow.pop %v1247
    %v1249 = vmul.f32 %v1145, 1.442695
    %v1250 = vpow.pop %v1249
    %v1251 = vmul.f32 %v1146, 1.442695
    %v1252 = vpow.pop %v1251
    %v1253 = vmul.f32 %v1147, 1.442695
    %v1254 = vpow.pop %v1253
    %v1255 = vmul.f32 %v1148, 1.442695
    %v1256 = vpow.pop %v1255
    %v1257 = vmul.f32 %v1149, 1.442695
    %v1258 = vpow.pop %v1257
    %v1259 = vmul.f32 %v1150, 1.442695
    %v1260 = vpow.pop %v1259
    %v1261 = vmul.f32 %v1151, 1.442695
    %v1262 = vpow.pop %v1261
    %v1263 = vmul.f32 %v1152, 1.442695
    %v1264 = vpow.pop %v1263
    %v1265 = vmul.f32 %v1153, 1.442695
    %v1266 = vpow.pop %v1265
    %v1267 = vmul.f32 %v1154, 1.442695
    %v1268 = vpow.pop %v1267
    %v1269 = vmul.f32 %v1155, 1.442695
    %v1270 = vpow.pop %v1269
    %v1271 = vmul.f32 %v1156, 1.442695
    %v1272 = vpow.pop %v1271
    %v1273 = vmul.f32 %v1157, 1.442695
    %v1274 = vpow.pop %v1273
    %v1275 = vmul.f32 %v1158, 1.442695
    %v1276 = vpow.pop %v1275
    %v1277 = vmul.f32 %v1159, 1.442695
    %v1278 = vpow.pop %v1277
    %v1279 = vmul.f32 %v1160, 1.442695
    %v1280 = vpow.pop %v1279
    %v1281 = vmul.f32 %v1161, 1.442695
    %v1282 = vpow.pop %v1281
    %v1283 = vmul.f32 %v1162, 1.442695
    %v1284 = vpow.pop %v1283
    %v1285 = vmul.f32 %v1163, 1.442695
    %v1286 = vpow.pop %v1285
    %v1287 = vmul.f32 %v1164, 1.442695
    %v1288 = vpow.pop %v1287
    %v1289 = vmul.f32 %v1165, 1.442695
    %v1290 = vpow.pop %v1289
    %v1291 = vmul.f32 %v1166, 1.442695
    %v1292 = vpow.pop %v1291
    %v1293 = vmul.f32 %v1167, 1.442695
    %v1294 = vpow.pop %v1293
    %v1295 = vmul.f32 %v1168, 1.442695
    %v1296 = vpow.pop %v1295
    %v1297 = vadd.f32 %v1170, %v1172
    %1298 = vadd.xlane.f32.xlu0 %v1297
    %v1299 = vpop.xlane.xlu0 %1298
    %v1300 = vadd.f32 %v1174, %v1176
    %1301 = vadd.xlane.f32.xlu0 %v1300
    %v1302 = vpop.xlane.xlu0 %1301
    %v1303 = vadd.f32 %v1178, %v1180
    %1304 = vadd.xlane.f32.xlu0 %v1303
    %v1305 = vpop.xlane.xlu0 %1304
    %v1306 = vadd.f32 %v1182, %v1184
    %1307 = vadd.xlane.f32.xlu0 %v1306
    %v1308 = vpop.xlane.xlu0 %1307
    %v1309 = vadd.f32 %v1186, %v1188
    %1310 = vadd.xlane.f32.xlu0 %v1309
    %v1311 = vpop.xlane.xlu0 %1310
    %v1312 = vadd.f32 %v1190, %v1192
    %1313 = vadd.xlane.f32.xlu0 %v1312
    %v1314 = vpop.xlane.xlu0 %1313
    %v1315 = vadd.f32 %v1194, %v1196
    %1316 = vadd.xlane.f32.xlu0 %v1315
    %v1317 = vpop.xlane.xlu0 %1316
    %v1318 = vadd.f32 %v1198, %v1200
    %1319 = vadd.xlane.f32.xlu0 %v1318
    %v1320 = vpop.xlane.xlu0 %1319
    %v1321 = vadd.f32 %v1202, %v1204
    %1322 = vadd.xlane.f32.xlu0 %v1321
    %v1323 = vpop.xlane.xlu0 %1322
    %v1324 = vadd.f32 %v1206, %v1208
    %1325 = vadd.xlane.f32.xlu0 %v1324
    %v1326 = vpop.xlane.xlu0 %1325
    %v1327 = vadd.f32 %v1210, %v1212
    %1328 = vadd.xlane.f32.xlu0 %v1327
    %v1329 = vpop.xlane.xlu0 %1328
    %v1330 = vadd.f32 %v1214, %v1216
    %1331 = vadd.xlane.f32.xlu0 %v1330
    %v1332 = vpop.xlane.xlu0 %1331
    %v1333 = vadd.f32 %v1218, %v1220
    %1334 = vadd.xlane.f32.xlu0 %v1333
    %v1335 = vpop.xlane.xlu0 %1334
    %v1336 = vadd.f32 %v1222, %v1224
    %1337 = vadd.xlane.f32.xlu0 %v1336
    %v1338 = vpop.xlane.xlu0 %1337
    %v1339 = vadd.f32 %v1226, %v1228
    %1340 = vadd.xlane.f32.xlu0 %v1339
    %v1341 = vpop.xlane.xlu0 %1340
    %v1342 = vadd.f32 %v1230, %v1232
    %1343 = vadd.xlane.f32.xlu0 %v1342
    %v1344 = vpop.xlane.xlu0 %1343
    %v1345 = vadd.f32 %v1234, %v1236
    %1346 = vadd.xlane.f32.xlu0 %v1345
    %v1347 = vpop.xlane.xlu0 %1346
    %v1348 = vadd.f32 %v1238, %v1240
    %1349 = vadd.xlane.f32.xlu0 %v1348
    %v1350 = vpop.xlane.xlu0 %1349
    %v1351 = vadd.f32 %v1242, %v1244
    %1352 = vadd.xlane.f32.xlu0 %v1351
    %v1353 = vpop.xlane.xlu0 %1352
    %v1354 = vadd.f32 %v1246, %v1248
    %1355 = vadd.xlane.f32.xlu0 %v1354
    %v1356 = vpop.xlane.xlu0 %1355
    %v1357 = vadd.f32 %v1250, %v1252
    %1358 = vadd.xlane.f32.xlu0 %v1357
    %v1359 = vpop.xlane.xlu0 %1358
    %v1360 = vadd.f32 %v1254, %v1256
    %1361 = vadd.xlane.f32.xlu0 %v1360
    %v1362 = vpop.xlane.xlu0 %1361
    %v1363 = vadd.f32 %v1258, %v1260
    %1364 = vadd.xlane.f32.xlu0 %v1363
    %v1365 = vpop.xlane.xlu0 %1364
    %v1366 = vadd.f32 %v1262, %v1264
    %1367 = vadd.xlane.f32.xlu0 %v1366
    %v1368 = vpop.xlane.xlu0 %1367
    %v1369 = vadd.f32 %v1266, %v1268
    %1370 = vadd.xlane.f32.xlu0 %v1369
    %v1371 = vpop.xlane.xlu0 %1370
    %v1372 = vadd.f32 %v1270, %v1272
    %1373 = vadd.xlane.f32.xlu0 %v1372
    %v1374 = vpop.xlane.xlu0 %1373
    %v1375 = vadd.f32 %v1274, %v1276
    %1376 = vadd.xlane.f32.xlu0 %v1375
    %v1377 = vpop.xlane.xlu0 %1376
    %v1378 = vadd.f32 %v1278, %v1280
    %1379 = vadd.xlane.f32.xlu0 %v1378
    %v1380 = vpop.xlane.xlu0 %1379
    %v1381 = vadd.f32 %v1282, %v1284
    %1382 = vadd.xlane.f32.xlu0 %v1381
    %v1383 = vpop.xlane.xlu0 %1382
    %v1384 = vadd.f32 %v1286, %v1288
    %1385 = vadd.xlane.f32.xlu0 %v1384
    %v1386 = vpop.xlane.xlu0 %1385
    %v1387 = vadd.f32 %v1290, %v1292
    %1388 = vadd.xlane.f32.xlu0 %v1387
    %v1389 = vpop.xlane.xlu0 %1388
    %v1390 = vadd.f32 %v1294, %v1296
    %1391 = vadd.xlane.f32.xlu0 %v1390
    %v1392 = vpop.xlane.xlu0 %1391
    %v1393 = vadd.f32 %v913, %v1299
    %v1394 = vadd.f32 %v914, %v1302
    %v1395 = vadd.f32 %v915, %v1305
    %v1396 = vadd.f32 %v916, %v1308
    %v1397 = vadd.f32 %v917, %v1311
    %v1398 = vadd.f32 %v918, %v1314
    %v1399 = vadd.f32 %v919, %v1317
    %v1400 = vadd.f32 %v920, %v1320
    %v1401 = vadd.f32 %v921, %v1323
    %v1402 = vadd.f32 %v922, %v1326
    %v1403 = vadd.f32 %v923, %v1329
    %v1404 = vadd.f32 %v924, %v1332
    %v1405 = vadd.f32 %v925, %v1335
    %v1406 = vadd.f32 %v926, %v1338
    %v1407 = vadd.f32 %v927, %v1341
    %v1408 = vadd.f32 %v928, %v1344
    %v1409 = vadd.f32 %v929, %v1347
    %v1410 = vadd.f32 %v930, %v1350
    %v1411 = vadd.f32 %v931, %v1353
    %v1412 = vadd.f32 %v932, %v1356
    %v1413 = vadd.f32 %v933, %v1359
    %v1414 = vadd.f32 %v934, %v1362
    %v1415 = vadd.f32 %v935, %v1365
    %v1416 = vadd.f32 %v936, %v1368
    %v1417 = vadd.f32 %v937, %v1371
    %v1418 = vadd.f32 %v938, %v1374
    %v1419 = vadd.f32 %v939, %v1377
    %v1420 = vadd.f32 %v940, %v1380
    %v1421 = vadd.f32 %v941, %v1383
    %v1422 = vadd.f32 %v942, %v1386
    %v1423 = vadd.f32 %v943, %v1389
    %v1424 = vadd.f32 %v944, %v1392
    %vm1425 = vcmask 7168
    %1426 = vst.msk [vmem:[#allocation3] sm:$0xff] %vm1425, %v1393
    %1427 = vst.msk [vmem:[#allocation3 + $0x8] sm:$0xff] %vm1425, %v1394
    %1428 = vst.msk [vmem:[#allocation3 + $0x10] sm:$0xff] %vm1425, %v1395
    %1429 = vst.msk [vmem:[#allocation3 + $0x18] sm:$0xff] %vm1425, %v1396
    %1430 = vst.msk [vmem:[#allocation3 + $0x20] sm:$0xff] %vm1425, %v1397
    %1431 = vst.msk [vmem:[#allocation3 + $0x28] sm:$0xff] %vm1425, %v1398
    %1432 = vst.msk [vmem:[#allocation3 + $0x30] sm:$0xff] %vm1425, %v1399
    %1433 = vst.msk [vmem:[#allocation3 + $0x38] sm:$0xff] %vm1425, %v1400
    %1434 = vst.msk [vmem:[#allocation3 + $0x40] sm:$0xff] %vm1425, %v1401
    %1435 = vst.msk [vmem:[#allocation3 + $0x48] sm:$0xff] %vm1425, %v1402
    %1436 = vst.msk [vmem:[#allocation3 + $0x50] sm:$0xff] %vm1425, %v1403
    %1437 = vst.msk [vmem:[#allocation3 + $0x58] sm:$0xff] %vm1425, %v1404
    %1438 = vst.msk [vmem:[#allocation3 + $0x60] sm:$0xff] %vm1425, %v1405
    %1439 = vst.msk [vmem:[#allocation3 + $0x68] sm:$0xff] %vm1425, %v1406
    %1440 = vst.msk [vmem:[#allocation3 + $0x70] sm:$0xff] %vm1425, %v1407
    %1441 = vst.msk [vmem:[#allocation3 + $0x78] sm:$0xff] %vm1425, %v1408
    %1442 = vst.msk [vmem:[#allocation3 + $0x80] sm:$0xff] %vm1425, %v1409
    %1443 = vst.msk [vmem:[#allocation3 + $0x88] sm:$0xff] %vm1425, %v1410
    %1444 = vst.msk [vmem:[#allocation3 + $0x90] sm:$0xff] %vm1425, %v1411
    %1445 = vst.msk [vmem:[#allocation3 + $0x98] sm:$0xff] %vm1425, %v1412
    %1446 = vst.msk [vmem:[#allocation3 + $0xa0] sm:$0xff] %vm1425, %v1413
    %1447 = vst.msk [vmem:[#allocation3 + $0xa8] sm:$0xff] %vm1425, %v1414
    %1448 = vst.msk [vmem:[#allocation3 + $0xb0] sm:$0xff] %vm1425, %v1415
    %1449 = vst.msk [vmem:[#allocation3 + $0xb8] sm:$0xff] %vm1425, %v1416
    %1450 = vst.msk [vmem:[#allocation3 + $0xc0] sm:$0xff] %vm1425, %v1417
    %1451 = vst.msk [vmem:[#allocation3 + $0xc8] sm:$0xff] %vm1425, %v1418
    %1452 = vst.msk [vmem:[#allocation3 + $0xd0] sm:$0xff] %vm1425, %v1419
    %1453 = vst.msk [vmem:[#allocation3 + $0xd8] sm:$0xff] %vm1425, %v1420
    %1454 = vst.msk [vmem:[#allocation3 + $0xe0] sm:$0xff] %vm1425, %v1421
    %1455 = vst.msk [vmem:[#allocation3 + $0xe8] sm:$0xff] %vm1425, %v1422
    %1456 = vst.msk [vmem:[#allocation3 + $0xf0] sm:$0xff] %vm1425, %v1423
    %1457 = vst.msk [vmem:[#allocation3 + $0xf8] sm:$0xff] %vm1425, %v1424
    %1458 = vst.msk [vmem:[#allocation2] sm:$0xff] %vm1425, %v753
    %1459 = vst.msk [vmem:[#allocation2 + $0x8] sm:$0xff] %vm1425, %v754
    %1460 = vst.msk [vmem:[#allocation2 + $0x10] sm:$0xff] %vm1425, %v755
    %1461 = vst.msk [vmem:[#allocation2 + $0x18] sm:$0xff] %vm1425, %v756
    %1462 = vst.msk [vmem:[#allocation2 + $0x20] sm:$0xff] %vm1425, %v757
    %1463 = vst.msk [vmem:[#allocation2 + $0x28] sm:$0xff] %vm1425, %v758
    %1464 = vst.msk [vmem:[#allocation2 + $0x30] sm:$0xff] %vm1425, %v759
    %1465 = vst.msk [vmem:[#allocation2 + $0x38] sm:$0xff] %vm1425, %v760
    %1466 = vst.msk [vmem:[#allocation2 + $0x40] sm:$0xff] %vm1425, %v761
    %1467 = vst.msk [vmem:[#allocation2 + $0x48] sm:$0xff] %vm1425, %v762
    %1468 = vst.msk [vmem:[#allocation2 + $0x50] sm:$0xff] %vm1425, %v763
    %1469 = vst.msk [vmem:[#allocation2 + $0x58] sm:$0xff] %vm1425, %v764
    %1470 = vst.msk [vmem:[#allocation2 + $0x60] sm:$0xff] %vm1425, %v765
    %1471 = vst.msk [vmem:[#allocation2 + $0x68] sm:$0xff] %vm1425, %v766
    %1472 = vst.msk [vmem:[#allocation2 + $0x70] sm:$0xff] %vm1425, %v767
    %1473 = vst.msk [vmem:[#allocation2 + $0x78] sm:$0xff] %vm1425, %v768
    %1474 = vst.msk [vmem:[#allocation2 + $0x80] sm:$0xff] %vm1425, %v769
    %1475 = vst.msk [vmem:[#allocation2 + $0x88] sm:$0xff] %vm1425, %v770
    %1476 = vst.msk [vmem:[#allocation2 + $0x90] sm:$0xff] %vm1425, %v771
    %1477 = vst.msk [vmem:[#allocation2 + $0x98] sm:$0xff] %vm1425, %v772
    %1478 = vst.msk [vmem:[#allocation2 + $0xa0] sm:$0xff] %vm1425, %v773
    %1479 = vst.msk [vmem:[#allocation2 + $0xa8] sm:$0xff] %vm1425, %v774
    %1480 = vst.msk [vmem:[#allocation2 + $0xb0] sm:$0xff] %vm1425, %v775
    %1481 = vst.msk [vmem:[#allocation2 + $0xb8] sm:$0xff] %vm1425, %v776
    %1482 = vst.msk [vmem:[#allocation2 + $0xc0] sm:$0xff] %vm1425, %v777
    %1483 = vst.msk [vmem:[#allocation2 + $0xc8] sm:$0xff] %vm1425, %v778
    %1484 = vst.msk [vmem:[#allocation2 + $0xd0] sm:$0xff] %vm1425, %v779
    %1485 = vst.msk [vmem:[#allocation2 + $0xd8] sm:$0xff] %vm1425, %v780
    %1486 = vst.msk [vmem:[#allocation2 + $0xe0] sm:$0xff] %vm1425, %v781
    %1487 = vst.msk [vmem:[#allocation2 + $0xe8] sm:$0xff] %vm1425, %v782
    %1488 = vst.msk [vmem:[#allocation2 + $0xf0] sm:$0xff] %vm1425, %v783
    %1489 = vst.msk [vmem:[#allocation2 + $0xf8] sm:$0xff] %vm1425, %v784
    %v1490 = vld [vmem:[#allocation4] sm:$0xff]
    %v1491 = vld [vmem:[#allocation4 + $0x8] sm:$0xff]
    %v1492 = vld [vmem:[#allocation4 + $0x10] sm:$0xff]
    %v1493 = vld [vmem:[#allocation4 + $0x18] sm:$0xff]
    %v1494 = vld [vmem:[#allocation4 + $0x20] sm:$0xff]
    %v1495 = vld [vmem:[#allocation4 + $0x28] sm:$0xff]
    %v1496 = vld [vmem:[#allocation4 + $0x30] sm:$0xff]
    %v1497 = vld [vmem:[#allocation4 + $0x38] sm:$0xff]
    %v1498 = vld [vmem:[#allocation4 + $0x40] sm:$0xff]
    %v1499 = vld [vmem:[#allocation4 + $0x48] sm:$0xff]
    %v1500 = vld [vmem:[#allocation4 + $0x50] sm:$0xff]
    %v1501 = vld [vmem:[#allocation4 + $0x58] sm:$0xff]
    %v1502 = vld [vmem:[#allocation4 + $0x60] sm:$0xff]
    %v1503 = vld [vmem:[#allocation4 + $0x68] sm:$0xff]
    %v1504 = vld [vmem:[#allocation4 + $0x70] sm:$0xff]
    %v1505 = vld [vmem:[#allocation4 + $0x78] sm:$0xff]
    %v1506 = vld [vmem:[#allocation4 + $0x80] sm:$0xff]
    %v1507 = vld [vmem:[#allocation4 + $0x88] sm:$0xff]
    %v1508 = vld [vmem:[#allocation4 + $0x90] sm:$0xff]
    %v1509 = vld [vmem:[#allocation4 + $0x98] sm:$0xff]
    %v1510 = vld [vmem:[#allocation4 + $0xa0] sm:$0xff]
    %v1511 = vld [vmem:[#allocation4 + $0xa8] sm:$0xff]
    %v1512 = vld [vmem:[#allocation4 + $0xb0] sm:$0xff]
    %v1513 = vld [vmem:[#allocation4 + $0xb8] sm:$0xff]
    %v1514 = vld [vmem:[#allocation4 + $0xc0] sm:$0xff]
    %v1515 = vld [vmem:[#allocation4 + $0xc8] sm:$0xff]
    %v1516 = vld [vmem:[#allocation4 + $0xd0] sm:$0xff]
    %v1517 = vld [vmem:[#allocation4 + $0xd8] sm:$0xff]
    %v1518 = vld [vmem:[#allocation4 + $0xe0] sm:$0xff]
    %v1519 = vld [vmem:[#allocation4 + $0xe8] sm:$0xff]
    %v1520 = vld [vmem:[#allocation4 + $0xf0] sm:$0xff]
    %v1521 = vld [vmem:[#allocation4 + $0xf8] sm:$0xff]
    %v1522 = vadd.f32 %v228, %v317
    %1523 = vadd.xlane.f32.xlu0 %v1522
    %v1524 = vpop.xlane.xlu0 %1523
    %v1525 = vadd.f32 %v230, %v319
    %1526 = vadd.xlane.f32.xlu0 %v1525
    %v1527 = vpop.xlane.xlu0 %1526
    %v1528 = vadd.f32 %v233, %v322
    %1529 = vadd.xlane.f32.xlu0 %v1528
    %v1530 = vpop.xlane.xlu0 %1529
    %v1531 = vadd.f32 %v235, %v324
    %1532 = vadd.xlane.f32.xlu0 %v1531
    %v1533 = vpop.xlane.xlu0 %1532
    %v1534 = vadd.f32 %v238, %v327
    %1535 = vadd.xlane.f32.xlu0 %v1534
    %v1536 = vpop.xlane.xlu0 %1535
    %v1537 = vadd.f32 %v240, %v329
    %1538 = vadd.xlane.f32.xlu0 %v1537
    %v1539 = vpop.xlane.xlu0 %1538
    %v1540 = vadd.f32 %v243, %v332
    %1541 = vadd.xlane.f32.xlu0 %v1540
    %v1542 = vpop.xlane.xlu0 %1541
    %v1543 = vadd.f32 %v245, %v334
    %1544 = vadd.xlane.f32.xlu0 %v1543
    %v1545 = vpop.xlane.xlu0 %1544
    %v1546 = vadd.f32 %v248, %v337
    %1547 = vadd.xlane.f32.xlu0 %v1546
    %v1548 = vpop.xlane.xlu0 %1547
    %v1549 = vadd.f32 %v250, %v339
    %1550 = vadd.xlane.f32.xlu0 %v1549
    %v1551 = vpop.xlane.xlu0 %1550
    %v1552 = vadd.f32 %v253, %v342
    %1553 = vadd.xlane.f32.xlu0 %v1552
    %v1554 = vpop.xlane.xlu0 %1553
    %v1555 = vadd.f32 %v255, %v344
    %1556 = vadd.xlane.f32.xlu0 %v1555
    %v1557 = vpop.xlane.xlu0 %1556
    %v1558 = vadd.f32 %v258, %v347
    %1559 = vadd.xlane.f32.xlu0 %v1558
    %v1560 = vpop.xlane.xlu0 %1559
    %v1561 = vadd.f32 %v260, %v349
    %1562 = vadd.xlane.f32.xlu0 %v1561
    %v1563 = vpop.xlane.xlu0 %1562
    %v1564 = vadd.f32 %v263, %v352
    %1565 = vadd.xlane.f32.xlu0 %v1564
    %v1566 = vpop.xlane.xlu0 %1565
    %v1567 = vadd.f32 %v265, %v354
    %1568 = vadd.xlane.f32.xlu0 %v1567
    %v1569 = vpop.xlane.xlu0 %1568
    %v1570 = vadd.f32 %v268, %v357
    %1571 = vadd.xlane.f32.xlu0 %v1570
    %v1572 = vpop.xlane.xlu0 %1571
    %v1573 = vadd.f32 %v270, %v359
    %1574 = vadd.xlane.f32.xlu0 %v1573
    %v1575 = vpop.xlane.xlu0 %1574
    %v1576 = vadd.f32 %v273, %v362
    %1577 = vadd.xlane.f32.xlu0 %v1576
    %v1578 = vpop.xlane.xlu0 %1577
    %v1579 = vadd.f32 %v275, %v364
    %1580 = vadd.xlane.f32.xlu0 %v1579
    %v1581 = vpop.xlane.xlu0 %1580
    %v1582 = vadd.f32 %v278, %v367
    %1583 = vadd.xlane.f32.xlu0 %v1582
    %v1584 = vpop.xlane.xlu0 %1583
    %v1585 = vadd.f32 %v280, %v369
    %1586 = vadd.xlane.f32.xlu0 %v1585
    %v1587 = vpop.xlane.xlu0 %1586
    %v1588 = vadd.f32 %v283, %v372
    %1589 = vadd.xlane.f32.xlu0 %v1588
    %v1590 = vpop.xlane.xlu0 %1589
    %v1591 = vadd.f32 %v285, %v374
    %1592 = vadd.xlane.f32.xlu0 %v1591
    %v1593 = vpop.xlane.xlu0 %1592
    %v1594 = vadd.f32 %v288, %v377
    %1595 = vadd.xlane.f32.xlu0 %v1594
    %v1596 = vpop.xlane.xlu0 %1595
    %v1597 = vadd.f32 %v290, %v379
    %1598 = vadd.xlane.f32.xlu0 %v1597
    %v1599 = vpop.xlane.xlu0 %1598
    %v1600 = vadd.f32 %v293, %v382
    %1601 = vadd.xlane.f32.xlu0 %v1600
    %v1602 = vpop.xlane.xlu0 %1601
    %v1603 = vadd.f32 %v295, %v384
    %1604 = vadd.xlane.f32.xlu0 %v1603
    %v1605 = vpop.xlane.xlu0 %1604
    %v1606 = vadd.f32 %v298, %v387
    %1607 = vadd.xlane.f32.xlu0 %v1606
    %v1608 = vpop.xlane.xlu0 %1607
    %v1609 = vadd.f32 %v300, %v389
    %1610 = vadd.xlane.f32.xlu0 %v1609
    %v1611 = vpop.xlane.xlu0 %1610
    %v1612 = vadd.f32 %v303, %v392
    %1613 = vadd.xlane.f32.xlu0 %v1612
    %v1614 = vpop.xlane.xlu0 %1613
    %v1615 = vadd.f32 %v305, %v394
    %1616 = vadd.xlane.f32.xlu0 %v1615
    %v1617 = vpop.xlane.xlu0 %1616
    %v1618 = vadd.f32 %v1490, %v1524
    %v1619 = vadd.f32 %v1491, %v1527
    %v1620 = vadd.f32 %v1492, %v1530
    %v1621 = vadd.f32 %v1493, %v1533
    %v1622 = vadd.f32 %v1494, %v1536
    %v1623 = vadd.f32 %v1495, %v1539
    %v1624 = vadd.f32 %v1496, %v1542
    %v1625 = vadd.f32 %v1497, %v1545
    %v1626 = vadd.f32 %v1498, %v1548
    %v1627 = vadd.f32 %v1499, %v1551
    %v1628 = vadd.f32 %v1500, %v1554
    %v1629 = vadd.f32 %v1501, %v1557
    %v1630 = vadd.f32 %v1502, %v1560
    %v1631 = vadd.f32 %v1503, %v1563
    %v1632 = vadd.f32 %v1504, %v1566
    %v1633 = vadd.f32 %v1505, %v1569
    %v1634 = vadd.f32 %v1506, %v1572
    %v1635 = vadd.f32 %v1507, %v1575
    %v1636 = vadd.f32 %v1508, %v1578
    %v1637 = vadd.f32 %v1509, %v1581
    %v1638 = vadd.f32 %v1510, %v1584
    %v1639 = vadd.f32 %v1511, %v1587
    %v1640 = vadd.f32 %v1512, %v1590
    %v1641 = vadd.f32 %v1513, %v1593
    %v1642 = vadd.f32 %v1514, %v1596
    %v1643 = vadd.f32 %v1515, %v1599
    %v1644 = vadd.f32 %v1516, %v1602
    %v1645 = vadd.f32 %v1517, %v1605
    %v1646 = vadd.f32 %v1518, %v1608
    %v1647 = vadd.f32 %v1519, %v1611
    %v1648 = vadd.f32 %v1520, %v1614
    %v1649 = vadd.f32 %v1521, %v1617
    %1650 = vst.msk [vmem:[#allocation4] sm:$0xff] %vm1425, %v1618
    %1651 = vst.msk [vmem:[#allocation4 + $0x8] sm:$0xff] %vm1425, %v1619
    %1652 = vst.msk [vmem:[#allocation4 + $0x10] sm:$0xff] %vm1425, %v1620
    %1653 = vst.msk [vmem:[#allocation4 + $0x18] sm:$0xff] %vm1425, %v1621
    %1654 = vst.msk [vmem:[#allocation4 + $0x20] sm:$0xff] %vm1425, %v1622
    %1655 = vst.msk [vmem:[#allocation4 + $0x28] sm:$0xff] %vm1425, %v1623
    %1656 = vst.msk [vmem:[#allocation4 + $0x30] sm:$0xff] %vm1425, %v1624
    %1657 = vst.msk [vmem:[#allocation4 + $0x38] sm:$0xff] %vm1425, %v1625
    %1658 = vst.msk [vmem:[#allocation4 + $0x40] sm:$0xff] %vm1425, %v1626
    %1659 = vst.msk [vmem:[#allocation4 + $0x48] sm:$0xff] %vm1425, %v1627
    %1660 = vst.msk [vmem:[#allocation4 + $0x50] sm:$0xff] %vm1425, %v1628
    %1661 = vst.msk [vmem:[#allocation4 + $0x58] sm:$0xff] %vm1425, %v1629
    %1662 = vst.msk [vmem:[#allocation4 + $0x60] sm:$0xff] %vm1425, %v1630
    %1663 = vst.msk [vmem:[#allocation4 + $0x68] sm:$0xff] %vm1425, %v1631
    %1664 = vst.msk [vmem:[#allocation4 + $0x70] sm:$0xff] %vm1425, %v1632
    %1665 = vst.msk [vmem:[#allocation4 + $0x78] sm:$0xff] %vm1425, %v1633
    %1666 = vst.msk [vmem:[#allocation4 + $0x80] sm:$0xff] %vm1425, %v1634
    %1667 = vst.msk [vmem:[#allocation4 + $0x88] sm:$0xff] %vm1425, %v1635
    %1668 = vst.msk [vmem:[#allocation4 + $0x90] sm:$0xff] %vm1425, %v1636
    %1669 = vst.msk [vmem:[#allocation4 + $0x98] sm:$0xff] %vm1425, %v1637
    %1670 = vst.msk [vmem:[#allocation4 + $0xa0] sm:$0xff] %vm1425, %v1638
    %1671 = vst.msk [vmem:[#allocation4 + $0xa8] sm:$0xff] %vm1425, %v1639
    %1672 = vst.msk [vmem:[#allocation4 + $0xb0] sm:$0xff] %vm1425, %v1640
    %1673 = vst.msk [vmem:[#allocation4 + $0xb8] sm:$0xff] %vm1425, %v1641
    %1674 = vst.msk [vmem:[#allocation4 + $0xc0] sm:$0xff] %vm1425, %v1642
    %1675 = vst.msk [vmem:[#allocation4 + $0xc8] sm:$0xff] %vm1425, %v1643
    %1676 = vst.msk [vmem:[#allocation4 + $0xd0] sm:$0xff] %vm1425, %v1644
    %1677 = vst.msk [vmem:[#allocation4 + $0xd8] sm:$0xff] %vm1425, %v1645
    %1678 = vst.msk [vmem:[#allocation4 + $0xe0] sm:$0xff] %vm1425, %v1646
    %1679 = vst.msk [vmem:[#allocation4 + $0xe8] sm:$0xff] %vm1425, %v1647
    %1680 = vst.msk [vmem:[#allocation4 + $0xf0] sm:$0xff] %vm1425, %v1648
    %1681 = vst.msk [vmem:[#allocation4 + $0xf8] sm:$0xff] %vm1425, %v1649
    %v1682 = vld [vmem:[%s3] sm:$0xff]
    %v1683 = vld [vmem:[%s3 + $0x8] sm:$0xff]
    %v1684 = vld [vmem:[%s3 + $0x10] sm:$0xff]
    %v1685 = vld [vmem:[%s3 + $0x18] sm:$0xff]
    %v1686 = vld [vmem:[%s3 + $0x20] sm:$0xff]
    %v1687 = vld [vmem:[%s3 + $0x28] sm:$0xff]
    %v1688 = vld [vmem:[%s3 + $0x30] sm:$0xff]
    %v1689 = vld [vmem:[%s3 + $0x38] sm:$0xff]
    %v1690 = vld [vmem:[%s3 + $0x40] sm:$0xff]
    %v1691 = vld [vmem:[%s3 + $0x48] sm:$0xff]
    %v1692 = vld [vmem:[%s3 + $0x50] sm:$0xff]
    %v1693 = vld [vmem:[%s3 + $0x58] sm:$0xff]
    %v1694 = vld [vmem:[%s3 + $0x60] sm:$0xff]
    %v1695 = vld [vmem:[%s3 + $0x68] sm:$0xff]
    %v1696 = vld [vmem:[%s3 + $0x70] sm:$0xff]
    %v1697 = vld [vmem:[%s3 + $0x78] sm:$0xff]
    %v1698 = vld [vmem:[%s3 + $0x80] sm:$0xff]
    %v1699 = vld [vmem:[%s3 + $0x88] sm:$0xff]
    %v1700 = vld [vmem:[%s3 + $0x90] sm:$0xff]
    %v1701 = vld [vmem:[%s3 + $0x98] sm:$0xff]
    %v1702 = vld [vmem:[%s3 + $0xa0] sm:$0xff]
    %v1703 = vld [vmem:[%s3 + $0xa8] sm:$0xff]
    %v1704 = vld [vmem:[%s3 + $0xb0] sm:$0xff]
    %v1705 = vld [vmem:[%s3 + $0xb8] sm:$0xff]
    %v1706 = vld [vmem:[%s3 + $0xc0] sm:$0xff]
    %v1707 = vld [vmem:[%s3 + $0xc8] sm:$0xff]
    %v1708 = vld [vmem:[%s3 + $0xd0] sm:$0xff]
    %v1709 = vld [vmem:[%s3 + $0xd8] sm:$0xff]
    %v1710 = vld [vmem:[%s3 + $0xe0] sm:$0xff]
    %v1711 = vld [vmem:[%s3 + $0xe8] sm:$0xff]
    %v1712 = vld [vmem:[%s3 + $0xf0] sm:$0xff]
    %v1713 = vld [vmem:[%s3 + $0xf8] sm:$0xff]
    %s1714 = smul.u32 0, 256
    %v1715 = vlaneseq
    %v1716 = vand.u32 %v1715, 127
    %v1717 = vadd.s32 %v1716, 128
    %v1718 = vstv %s1714
    %v1719 = vadd.s32 %v1718, %v1716
    %v1720 = vadd.s32 %v1718, %v1717
    %v1721 = vld [vmem:[#allocation5] sm:$0xff]
    %v1722 = vld [vmem:[#allocation5 + $0x8] sm:$0xff]
    %v1723 = vld [vmem:[#allocation5 + $0x10] sm:$0xff]
    %v1724 = vld [vmem:[#allocation5 + $0x18] sm:$0xff]
    %v1725 = vld [vmem:[#allocation5 + $0x20] sm:$0xff]
    %v1726 = vld [vmem:[#allocation5 + $0x28] sm:$0xff]
    %v1727 = vld [vmem:[#allocation5 + $0x30] sm:$0xff]
    %v1728 = vld [vmem:[#allocation5 + $0x38] sm:$0xff]
    %v1729 = vld [vmem:[#allocation5 + $0x40] sm:$0xff]
    %v1730 = vld [vmem:[#allocation5 + $0x48] sm:$0xff]
    %v1731 = vld [vmem:[#allocation5 + $0x50] sm:$0xff]
    %v1732 = vld [vmem:[#allocation5 + $0x58] sm:$0xff]
    %v1733 = vld [vmem:[#allocation5 + $0x60] sm:$0xff]
    %v1734 = vld [vmem:[#allocation5 + $0x68] sm:$0xff]
    %v1735 = vld [vmem:[#allocation5 + $0x70] sm:$0xff]
    %v1736 = vld [vmem:[#allocation5 + $0x78] sm:$0xff]
    %v1737 = vld [vmem:[#allocation5 + $0x80] sm:$0xff]
    %v1738 = vld [vmem:[#allocation5 + $0x88] sm:$0xff]
    %v1739 = vld [vmem:[#allocation5 + $0x90] sm:$0xff]
    %v1740 = vld [vmem:[#allocation5 + $0x98] sm:$0xff]
    %v1741 = vld [vmem:[#allocation5 + $0xa0] sm:$0xff]
    %v1742 = vld [vmem:[#allocation5 + $0xa8] sm:$0xff]
    %v1743 = vld [vmem:[#allocation5 + $0xb0] sm:$0xff]
    %v1744 = vld [vmem:[#allocation5 + $0xb8] sm:$0xff]
    %v1745 = vld [vmem:[#allocation5 + $0xc0] sm:$0xff]
    %v1746 = vld [vmem:[#allocation5 + $0xc8] sm:$0xff]
    %v1747 = vld [vmem:[#allocation5 + $0xd0] sm:$0xff]
    %v1748 = vld [vmem:[#allocation5 + $0xd8] sm:$0xff]
    %v1749 = vld [vmem:[#allocation5 + $0xe0] sm:$0xff]
    %v1750 = vld [vmem:[#allocation5 + $0xe8] sm:$0xff]
    %v1751 = vld [vmem:[#allocation5 + $0xf0] sm:$0xff]
    %v1752 = vld [vmem:[#allocation5 + $0xf8] sm:$0xff]
    %1753 = vset.pattern.permute.xlu0 0
    %1754 = vperm.xlu0 %1753, %v1682
    %v1755 = vpop.permute.xlu0 %1754
    %1756 = vset.pattern.permute.xlu0 0
    %1757 = vperm.xlu0 %1756, %v1683
    %v1758 = vpop.permute.xlu0 %1757
    %1759 = vset.pattern.permute.xlu0 0
    %1760 = vperm.xlu0 %1759, %v1684
    %v1761 = vpop.permute.xlu0 %1760
    %1762 = vset.pattern.permute.xlu0 0
    %1763 = vperm.xlu0 %1762, %v1685
    %v1764 = vpop.permute.xlu0 %1763
    %1765 = vset.pattern.permute.xlu0 0
    %1766 = vperm.xlu0 %1765, %v1686
    %v1767 = vpop.permute.xlu0 %1766
    %1768 = vset.pattern.permute.xlu0 0
    %1769 = vperm.xlu0 %1768, %v1687
    %v1770 = vpop.permute.xlu0 %1769
    %1771 = vset.pattern.permute.xlu0 0
    %1772 = vperm.xlu0 %1771, %v1688
    %v1773 = vpop.permute.xlu0 %1772
    %1774 = vset.pattern.permute.xlu0 0
    %1775 = vperm.xlu0 %1774, %v1689
    %v1776 = vpop.permute.xlu0 %1775
    %1777 = vset.pattern.permute.xlu0 0
    %1778 = vperm.xlu0 %1777, %v1690
    %v1779 = vpop.permute.xlu0 %1778
    %1780 = vset.pattern.permute.xlu0 0
    %1781 = vperm.xlu0 %1780, %v1691
    %v1782 = vpop.permute.xlu0 %1781
    %1783 = vset.pattern.permute.xlu0 0
    %1784 = vperm.xlu0 %1783, %v1692
    %v1785 = vpop.permute.xlu0 %1784
    %1786 = vset.pattern.permute.xlu0 0
    %1787 = vperm.xlu0 %1786, %v1693
    %v1788 = vpop.permute.xlu0 %1787
    %1789 = vset.pattern.permute.xlu0 0
    %1790 = vperm.xlu0 %1789, %v1694
    %v1791 = vpop.permute.xlu0 %1790
    %1792 = vset.pattern.permute.xlu0 0
    %1793 = vperm.xlu0 %1792, %v1695
    %v1794 = vpop.permute.xlu0 %1793
    %1795 = vset.pattern.permute.xlu0 0
    %1796 = vperm.xlu0 %1795, %v1696
    %v1797 = vpop.permute.xlu0 %1796
    %1798 = vset.pattern.permute.xlu0 0
    %1799 = vperm.xlu0 %1798, %v1697
    %v1800 = vpop.permute.xlu0 %1799
    %1801 = vset.pattern.permute.xlu0 0
    %1802 = vperm.xlu0 %1801, %v1698
    %v1803 = vpop.permute.xlu0 %1802
    %1804 = vset.pattern.permute.xlu0 0
    %1805 = vperm.xlu0 %1804, %v1699
    %v1806 = vpop.permute.xlu0 %1805
    %1807 = vset.pattern.permute.xlu0 0
    %1808 = vperm.xlu0 %1807, %v1700
    %v1809 = vpop.permute.xlu0 %1808
    %1810 = vset.pattern.permute.xlu0 0
    %1811 = vperm.xlu0 %1810, %v1701
    %v1812 = vpop.permute.xlu0 %1811
    %1813 = vset.pattern.permute.xlu0 0
    %1814 = vperm.xlu0 %1813, %v1702
    %v1815 = vpop.permute.xlu0 %1814
    %1816 = vset.pattern.permute.xlu0 0
    %1817 = vperm.xlu0 %1816, %v1703
    %v1818 = vpop.permute.xlu0 %1817
    %1819 = vset.pattern.permute.xlu0 0
    %1820 = vperm.xlu0 %1819, %v1704
    %v1821 = vpop.permute.xlu0 %1820
    %1822 = vset.pattern.permute.xlu0 0
    %1823 = vperm.xlu0 %1822, %v1705
    %v1824 = vpop.permute.xlu0 %1823
    %1825 = vset.pattern.permute.xlu0 0
    %1826 = vperm.xlu0 %1825, %v1706
    %v1827 = vpop.permute.xlu0 %1826
    %1828 = vset.pattern.permute.xlu0 0
    %1829 = vperm.xlu0 %1828, %v1707
    %v1830 = vpop.permute.xlu0 %1829
    %1831 = vset.pattern.permute.xlu0 0
    %1832 = vperm.xlu0 %1831, %v1708
    %v1833 = vpop.permute.xlu0 %1832
    %1834 = vset.pattern.permute.xlu0 0
    %1835 = vperm.xlu0 %1834, %v1709
    %v1836 = vpop.permute.xlu0 %1835
    %1837 = vset.pattern.permute.xlu0 0
    %1838 = vperm.xlu0 %1837, %v1710
    %v1839 = vpop.permute.xlu0 %1838
    %1840 = vset.pattern.permute.xlu0 0
    %1841 = vperm.xlu0 %1840, %v1711
    %v1842 = vpop.permute.xlu0 %1841
    %1843 = vset.pattern.permute.xlu0 0
    %1844 = vperm.xlu0 %1843, %v1712
    %v1845 = vpop.permute.xlu0 %1844
    %1846 = vset.pattern.permute.xlu0 0
    %1847 = vperm.xlu0 %1846, %v1713
    %v1848 = vpop.permute.xlu0 %1847
    %vm1849 = vcmp.eq.s32.totalorder %v1719, %v1755
    %vm1850 = vcmp.eq.s32.totalorder %v1720, %v1755
    %vm1851 = vcmp.eq.s32.totalorder %v1719, %v1758
    %vm1852 = vcmp.eq.s32.totalorder %v1720, %v1758
    %vm1853 = vcmp.eq.s32.totalorder %v1719, %v1761
    %vm1854 = vcmp.eq.s32.totalorder %v1720, %v1761
    %vm1855 = vcmp.eq.s32.totalorder %v1719, %v1764
    %vm1856 = vcmp.eq.s32.totalorder %v1720, %v1764
    %vm1857 = vcmp.eq.s32.totalorder %v1719, %v1767
    %vm1858 = vcmp.eq.s32.totalorder %v1720, %v1767
    %vm1859 = vcmp.eq.s32.totalorder %v1719, %v1770
    %vm1860 = vcmp.eq.s32.totalorder %v1720, %v1770
    %vm1861 = vcmp.eq.s32.totalorder %v1719, %v1773
    %vm1862 = vcmp.eq.s32.totalorder %v1720, %v1773
    %vm1863 = vcmp.eq.s32.totalorder %v1719, %v1776
    %vm1864 = vcmp.eq.s32.totalorder %v1720, %v1776
    %vm1865 = vcmp.eq.s32.totalorder %v1719, %v1779
    %vm1866 = vcmp.eq.s32.totalorder %v1720, %v1779
    %vm1867 = vcmp.eq.s32.totalorder %v1719, %v1782
    %vm1868 = vcmp.eq.s32.totalorder %v1720, %v1782
    %vm1869 = vcmp.eq.s32.totalorder %v1719, %v1785
    %vm1870 = vcmp.eq.s32.totalorder %v1720, %v1785
    %vm1871 = vcmp.eq.s32.totalorder %v1719, %v1788
    %vm1872 = vcmp.eq.s32.totalorder %v1720, %v1788
    %vm1873 = vcmp.eq.s32.totalorder %v1719, %v1791
    %vm1874 = vcmp.eq.s32.totalorder %v1720, %v1791
    %vm1875 = vcmp.eq.s32.totalorder %v1719, %v1794
    %vm1876 = vcmp.eq.s32.totalorder %v1720, %v1794
    %vm1877 = vcmp.eq.s32.totalorder %v1719, %v1797
    %vm1878 = vcmp.eq.s32.totalorder %v1720, %v1797
    %vm1879 = vcmp.eq.s32.totalorder %v1719, %v1800
    %vm1880 = vcmp.eq.s32.totalorder %v1720, %v1800
    %vm1881 = vcmp.eq.s32.totalorder %v1719, %v1803
    %vm1882 = vcmp.eq.s32.totalorder %v1720, %v1803
    %vm1883 = vcmp.eq.s32.totalorder %v1719, %v1806
    %vm1884 = vcmp.eq.s32.totalorder %v1720, %v1806
    %vm1885 = vcmp.eq.s32.totalorder %v1719, %v1809
    %vm1886 = vcmp.eq.s32.totalorder %v1720, %v1809
    %vm1887 = vcmp.eq.s32.totalorder %v1719, %v1812
    %vm1888 = vcmp.eq.s32.totalorder %v1720, %v1812
    %vm1889 = vcmp.eq.s32.totalorder %v1719, %v1815
    %vm1890 = vcmp.eq.s32.totalorder %v1720, %v1815
    %vm1891 = vcmp.eq.s32.totalorder %v1719, %v1818
    %vm1892 = vcmp.eq.s32.totalorder %v1720, %v1818
    %vm1893 = vcmp.eq.s32.totalorder %v1719, %v1821
    %vm1894 = vcmp.eq.s32.totalorder %v1720, %v1821
    %vm1895 = vcmp.eq.s32.totalorder %v1719, %v1824
    %vm1896 = vcmp.eq.s32.totalorder %v1720, %v1824
    %vm1897 = vcmp.eq.s32.totalorder %v1719, %v1827
    %vm1898 = vcmp.eq.s32.totalorder %v1720, %v1827
    %vm1899 = vcmp.eq.s32.totalorder %v1719, %v1830
    %vm1900 = vcmp.eq.s32.totalorder %v1720, %v1830
    %vm1901 = vcmp.eq.s32.totalorder %v1719, %v1833
    %vm1902 = vcmp.eq.s32.totalorder %v1720, %v1833
    %vm1903 = vcmp.eq.s32.totalorder %v1719, %v1836
    %vm1904 = vcmp.eq.s32.totalorder %v1720, %v1836
    %vm1905 = vcmp.eq.s32.totalorder %v1719, %v1839
    %vm1906 = vcmp.eq.s32.totalorder %v1720, %v1839
    %vm1907 = vcmp.eq.s32.totalorder %v1719, %v1842
    %vm1908 = vcmp.eq.s32.totalorder %v1720, %v1842
    %vm1909 = vcmp.eq.s32.totalorder %v1719, %v1845
    %vm1910 = vcmp.eq.s32.totalorder %v1720, %v1845
    %vm1911 = vcmp.eq.s32.totalorder %v1719, %v1848
    %vm1912 = vcmp.eq.s32.totalorder %v1720, %v1848
    %v1913 = vsel %vm1849, %v228, 0.0
    %v1914 = vsel %vm1850, %v317, 0.0
    %v1915 = vsel %vm1851, %v230, 0.0
    %v1916 = vsel %vm1852, %v319, 0.0
    %v1917 = vsel %vm1853, %v233, 0.0
    %v1918 = vsel %vm1854, %v322, 0.0
    %v1919 = vsel %vm1855, %v235, 0.0
    %v1920 = vsel %vm1856, %v324, 0.0
    %v1921 = vsel %vm1857, %v238, 0.0
    %v1922 = vsel %vm1858, %v327, 0.0
    %v1923 = vsel %vm1859, %v240, 0.0
    %v1924 = vsel %vm1860, %v329, 0.0
    %v1925 = vsel %vm1861, %v243, 0.0
    %v1926 = vsel %vm1862, %v332, 0.0
    %v1927 = vsel %vm1863, %v245, 0.0
    %v1928 = vsel %vm1864, %v334, 0.0
    %v1929 = vsel %vm1865, %v248, 0.0
    %v1930 = vsel %vm1866, %v337, 0.0
    %v1931 = vsel %vm1867, %v250, 0.0
    %v1932 = vsel %vm1868, %v339, 0.0
    %v1933 = vsel %vm1869, %v253, 0.0
    %v1934 = vsel %vm1870, %v342, 0.0
    %v1935 = vsel %vm1871, %v255, 0.0
    %v1936 = vsel %vm1872, %v344, 0.0
    %v1937 = vsel %vm1873, %v258, 0.0
    %v1938 = vsel %vm1874, %v347, 0.0
    %v1939 = vsel %vm1875, %v260, 0.0
    %v1940 = vsel %vm1876, %v349, 0.0
    %v1941 = vsel %vm1877, %v263, 0.0
    %v1942 = vsel %vm1878, %v352, 0.0
    %v1943 = vsel %vm1879, %v265, 0.0
    %v1944 = vsel %vm1880, %v354, 0.0
    %v1945 = vsel %vm1881, %v268, 0.0
    %v1946 = vsel %vm1882, %v357, 0.0
    %v1947 = vsel %vm1883, %v270, 0.0
    %v1948 = vsel %vm1884, %v359, 0.0
    %v1949 = vsel %vm1885, %v273, 0.0
    %v1950 = vsel %vm1886, %v362, 0.0
    %v1951 = vsel %vm1887, %v275, 0.0
    %v1952 = vsel %vm1888, %v364, 0.0
    %v1953 = vsel %vm1889, %v278, 0.0
    %v1954 = vsel %vm1890, %v367, 0.0
    %v1955 = vsel %vm1891, %v280, 0.0
    %v1956 = vsel %vm1892, %v369, 0.0
    %v1957 = vsel %vm1893, %v283, 0.0
    %v1958 = vsel %vm1894, %v372, 0.0
    %v1959 = vsel %vm1895, %v285, 0.0
    %v1960 = vsel %vm1896, %v374, 0.0
    %v1961 = vsel %vm1897, %v288, 0.0
    %v1962 = vsel %vm1898, %v377, 0.0
    %v1963 = vsel %vm1899, %v290, 0.0
    %v1964 = vsel %vm1900, %v379, 0.0
    %v1965 = vsel %vm1901, %v293, 0.0
    %v1966 = vsel %vm1902, %v382, 0.0
    %v1967 = vsel %vm1903, %v295, 0.0
    %v1968 = vsel %vm1904, %v384, 0.0
    %v1969 = vsel %vm1905, %v298, 0.0
    %v1970 = vsel %vm1906, %v387, 0.0
    %v1971 = vsel %vm1907, %v300, 0.0
    %v1972 = vsel %vm1908, %v389, 0.0
    %v1973 = vsel %vm1909, %v303, 0.0
    %v1974 = vsel %vm1910, %v392, 0.0
    %v1975 = vsel %vm1911, %v305, 0.0
    %v1976 = vsel %vm1912, %v394, 0.0
    %v1977 = vadd.f32 %v1913, %v1914
    %1978 = vadd.xlane.f32.xlu0 %v1977
    %v1979 = vpop.xlane.xlu0 %1978
    %v1980 = vadd.f32 %v1915, %v1916
    %1981 = vadd.xlane.f32.xlu0 %v1980
    %v1982 = vpop.xlane.xlu0 %1981
    %v1983 = vadd.f32 %v1917, %v1918
    %1984 = vadd.xlane.f32.xlu0 %v1983
    %v1985 = vpop.xlane.xlu0 %1984
    %v1986 = vadd.f32 %v1919, %v1920
    %1987 = vadd.xlane.f32.xlu0 %v1986
    %v1988 = vpop.xlane.xlu0 %1987
    %v1989 = vadd.f32 %v1921, %v1922
    %1990 = vadd.xlane.f32.xlu0 %v1989
    %v1991 = vpop.xlane.xlu0 %1990
    %v1992 = vadd.f32 %v1923, %v1924
    %1993 = vadd.xlane.f32.xlu0 %v1992
    %v1994 = vpop.xlane.xlu0 %1993
    %v1995 = vadd.f32 %v1925, %v1926
    %1996 = vadd.xlane.f32.xlu0 %v1995
    %v1997 = vpop.xlane.xlu0 %1996
    %v1998 = vadd.f32 %v1927, %v1928
    %1999 = vadd.xlane.f32.xlu0 %v1998
    %v2000 = vpop.xlane.xlu0 %1999
    %v2001 = vadd.f32 %v1929, %v1930
    %2002 = vadd.xlane.f32.xlu0 %v2001
    %v2003 = vpop.xlane.xlu0 %2002
    %v2004 = vadd.f32 %v1931, %v1932
    %2005 = vadd.xlane.f32.xlu0 %v2004
    %v2006 = vpop.xlane.xlu0 %2005
    %v2007 = vadd.f32 %v1933, %v1934
    %2008 = vadd.xlane.f32.xlu0 %v2007
    %v2009 = vpop.xlane.xlu0 %2008
    %v2010 = vadd.f32 %v1935, %v1936
    %2011 = vadd.xlane.f32.xlu0 %v2010
    %v2012 = vpop.xlane.xlu0 %2011
    %v2013 = vadd.f32 %v1937, %v1938
    %2014 = vadd.xlane.f32.xlu0 %v2013
    %v2015 = vpop.xlane.xlu0 %2014
    %v2016 = vadd.f32 %v1939, %v1940
    %2017 = vadd.xlane.f32.xlu0 %v2016
    %v2018 = vpop.xlane.xlu0 %2017
    %v2019 = vadd.f32 %v1941, %v1942
    %2020 = vadd.xlane.f32.xlu0 %v2019
    %v2021 = vpop.xlane.xlu0 %2020
    %v2022 = vadd.f32 %v1943, %v1944
    %2023 = vadd.xlane.f32.xlu0 %v2022
    %v2024 = vpop.xlane.xlu0 %2023
    %v2025 = vadd.f32 %v1945, %v1946
    %2026 = vadd.xlane.f32.xlu0 %v2025
    %v2027 = vpop.xlane.xlu0 %2026
    %v2028 = vadd.f32 %v1947, %v1948
    %2029 = vadd.xlane.f32.xlu0 %v2028
    %v2030 = vpop.xlane.xlu0 %2029
    %v2031 = vadd.f32 %v1949, %v1950
    %2032 = vadd.xlane.f32.xlu0 %v2031
    %v2033 = vpop.xlane.xlu0 %2032
    %v2034 = vadd.f32 %v1951, %v1952
    %2035 = vadd.xlane.f32.xlu0 %v2034
    %v2036 = vpop.xlane.xlu0 %2035
    %v2037 = vadd.f32 %v1953, %v1954
    %2038 = vadd.xlane.f32.xlu0 %v2037
    %v2039 = vpop.xlane.xlu0 %2038
    %v2040 = vadd.f32 %v1955, %v1956
    %2041 = vadd.xlane.f32.xlu0 %v2040
    %v2042 = vpop.xlane.xlu0 %2041
    %v2043 = vadd.f32 %v1957, %v1958
    %2044 = vadd.xlane.f32.xlu0 %v2043
    %v2045 = vpop.xlane.xlu0 %2044
    %v2046 = vadd.f32 %v1959, %v1960
    %2047 = vadd.xlane.f32.xlu0 %v2046
    %v2048 = vpop.xlane.xlu0 %2047
    %v2049 = vadd.f32 %v1961, %v1962
    %2050 = vadd.xlane.f32.xlu0 %v2049
    %v2051 = vpop.xlane.xlu0 %2050
    %v2052 = vadd.f32 %v1963, %v1964
    %2053 = vadd.xlane.f32.xlu0 %v2052
    %v2054 = vpop.xlane.xlu0 %2053
    %v2055 = vadd.f32 %v1965, %v1966
    %2056 = vadd.xlane.f32.xlu0 %v2055
    %v2057 = vpop.xlane.xlu0 %2056
    %v2058 = vadd.f32 %v1967, %v1968
    %2059 = vadd.xlane.f32.xlu0 %v2058
    %v2060 = vpop.xlane.xlu0 %2059
    %v2061 = vadd.f32 %v1969, %v1970
    %2062 = vadd.xlane.f32.xlu0 %v2061
    %v2063 = vpop.xlane.xlu0 %2062
    %v2064 = vadd.f32 %v1971, %v1972
    %2065 = vadd.xlane.f32.xlu0 %v2064
    %v2066 = vpop.xlane.xlu0 %2065
    %v2067 = vadd.f32 %v1973, %v1974
    %2068 = vadd.xlane.f32.xlu0 %v2067
    %v2069 = vpop.xlane.xlu0 %2068
    %v2070 = vadd.f32 %v1975, %v1976
    %2071 = vadd.xlane.f32.xlu0 %v2070
    %v2072 = vpop.xlane.xlu0 %2071
    %v2073 = vadd.f32 %v1721, %v1979
    %v2074 = vadd.f32 %v1722, %v1982
    %v2075 = vadd.f32 %v1723, %v1985
    %v2076 = vadd.f32 %v1724, %v1988
    %v2077 = vadd.f32 %v1725, %v1991
    %v2078 = vadd.f32 %v1726, %v1994
    %v2079 = vadd.f32 %v1727, %v1997
    %v2080 = vadd.f32 %v1728, %v2000
    %v2081 = vadd.f32 %v1729, %v2003
    %v2082 = vadd.f32 %v1730, %v2006
    %v2083 = vadd.f32 %v1731, %v2009
    %v2084 = vadd.f32 %v1732, %v2012
    %v2085 = vadd.f32 %v1733, %v2015
    %v2086 = vadd.f32 %v1734, %v2018
    %v2087 = vadd.f32 %v1735, %v2021
    %v2088 = vadd.f32 %v1736, %v2024
    %v2089 = vadd.f32 %v1737, %v2027
    %v2090 = vadd.f32 %v1738, %v2030
    %v2091 = vadd.f32 %v1739, %v2033
    %v2092 = vadd.f32 %v1740, %v2036
    %v2093 = vadd.f32 %v1741, %v2039
    %v2094 = vadd.f32 %v1742, %v2042
    %v2095 = vadd.f32 %v1743, %v2045
    %v2096 = vadd.f32 %v1744, %v2048
    %v2097 = vadd.f32 %v1745, %v2051
    %v2098 = vadd.f32 %v1746, %v2054
    %v2099 = vadd.f32 %v1747, %v2057
    %v2100 = vadd.f32 %v1748, %v2060
    %v2101 = vadd.f32 %v1749, %v2063
    %v2102 = vadd.f32 %v1750, %v2066
    %v2103 = vadd.f32 %v1751, %v2069
    %v2104 = vadd.f32 %v1752, %v2072
    %2105 = vst.msk [vmem:[#allocation5] sm:$0xff] %vm1425, %v2073
    %2106 = vst.msk [vmem:[#allocation5 + $0x8] sm:$0xff] %vm1425, %v2074
    %2107 = vst.msk [vmem:[#allocation5 + $0x10] sm:$0xff] %vm1425, %v2075
    %2108 = vst.msk [vmem:[#allocation5 + $0x18] sm:$0xff] %vm1425, %v2076
    %2109 = vst.msk [vmem:[#allocation5 + $0x20] sm:$0xff] %vm1425, %v2077
    %2110 = vst.msk [vmem:[#allocation5 + $0x28] sm:$0xff] %vm1425, %v2078
    %2111 = vst.msk [vmem:[#allocation5 + $0x30] sm:$0xff] %vm1425, %v2079
    %2112 = vst.msk [vmem:[#allocation5 + $0x38] sm:$0xff] %vm1425, %v2080
    %2113 = vst.msk [vmem:[#allocation5 + $0x40] sm:$0xff] %vm1425, %v2081
    %2114 = vst.msk [vmem:[#allocation5 + $0x48] sm:$0xff] %vm1425, %v2082
    %2115 = vst.msk [vmem:[#allocation5 + $0x50] sm:$0xff] %vm1425, %v2083
    %2116 = vst.msk [vmem:[#allocation5 + $0x58] sm:$0xff] %vm1425, %v2084
    %2117 = vst.msk [vmem:[#allocation5 + $0x60] sm:$0xff] %vm1425, %v2085
    %2118 = vst.msk [vmem:[#allocation5 + $0x68] sm:$0xff] %vm1425, %v2086
    %2119 = vst.msk [vmem:[#allocation5 + $0x70] sm:$0xff] %vm1425, %v2087
    %2120 = vst.msk [vmem:[#allocation5 + $0x78] sm:$0xff] %vm1425, %v2088
    %2121 = vst.msk [vmem:[#allocation5 + $0x80] sm:$0xff] %vm1425, %v2089
    %2122 = vst.msk [vmem:[#allocation5 + $0x88] sm:$0xff] %vm1425, %v2090
    %2123 = vst.msk [vmem:[#allocation5 + $0x90] sm:$0xff] %vm1425, %v2091
    %2124 = vst.msk [vmem:[#allocation5 + $0x98] sm:$0xff] %vm1425, %v2092
    %2125 = vst.msk [vmem:[#allocation5 + $0xa0] sm:$0xff] %vm1425, %v2093
    %2126 = vst.msk [vmem:[#allocation5 + $0xa8] sm:$0xff] %vm1425, %v2094
    %2127 = vst.msk [vmem:[#allocation5 + $0xb0] sm:$0xff] %vm1425, %v2095
    %2128 = vst.msk [vmem:[#allocation5 + $0xb8] sm:$0xff] %vm1425, %v2096
    %2129 = vst.msk [vmem:[#allocation5 + $0xc0] sm:$0xff] %vm1425, %v2097
    %2130 = vst.msk [vmem:[#allocation5 + $0xc8] sm:$0xff] %vm1425, %v2098
    %2131 = vst.msk [vmem:[#allocation5 + $0xd0] sm:$0xff] %vm1425, %v2099
    %2132 = vst.msk [vmem:[#allocation5 + $0xd8] sm:$0xff] %vm1425, %v2100
    %2133 = vst.msk [vmem:[#allocation5 + $0xe0] sm:$0xff] %vm1425, %v2101
    %2134 = vst.msk [vmem:[#allocation5 + $0xe8] sm:$0xff] %vm1425, %v2102
    %2135 = vst.msk [vmem:[#allocation5 + $0xf0] sm:$0xff] %vm1425, %v2103
    %2136 = vst.msk [vmem:[#allocation5 + $0xf8] sm:$0xff] %vm1425, %v2104
    %v2137 = vld [vmem:[#allocation6] sm:$0xff]
    %v2138 = vld [vmem:[#allocation6 + $0x8] sm:$0xff]
    %v2139 = vld [vmem:[#allocation6 + $0x10] sm:$0xff]
    %v2140 = vld [vmem:[#allocation6 + $0x18] sm:$0xff]
    %v2141 = vld [vmem:[#allocation6 + $0x20] sm:$0xff]
    %v2142 = vld [vmem:[#allocation6 + $0x28] sm:$0xff]
    %v2143 = vld [vmem:[#allocation6 + $0x30] sm:$0xff]
    %v2144 = vld [vmem:[#allocation6 + $0x38] sm:$0xff]
    %v2145 = vld [vmem:[#allocation6 + $0x40] sm:$0xff]
    %v2146 = vld [vmem:[#allocation6 + $0x48] sm:$0xff]
    %v2147 = vld [vmem:[#allocation6 + $0x50] sm:$0xff]
    %v2148 = vld [vmem:[#allocation6 + $0x58] sm:$0xff]
    %v2149 = vld [vmem:[#allocation6 + $0x60] sm:$0xff]
    %v2150 = vld [vmem:[#allocation6 + $0x68] sm:$0xff]
    %v2151 = vld [vmem:[#allocation6 + $0x70] sm:$0xff]
    %v2152 = vld [vmem:[#allocation6 + $0x78] sm:$0xff]
    %v2153 = vld [vmem:[#allocation6 + $0x80] sm:$0xff]
    %v2154 = vld [vmem:[#allocation6 + $0x88] sm:$0xff]
    %v2155 = vld [vmem:[#allocation6 + $0x90] sm:$0xff]
    %v2156 = vld [vmem:[#allocation6 + $0x98] sm:$0xff]
    %v2157 = vld [vmem:[#allocation6 + $0xa0] sm:$0xff]
    %v2158 = vld [vmem:[#allocation6 + $0xa8] sm:$0xff]
    %v2159 = vld [vmem:[#allocation6 + $0xb0] sm:$0xff]
    %v2160 = vld [vmem:[#allocation6 + $0xb8] sm:$0xff]
    %v2161 = vld [vmem:[#allocation6 + $0xc0] sm:$0xff]
    %v2162 = vld [vmem:[#allocation6 + $0xc8] sm:$0xff]
    %v2163 = vld [vmem:[#allocation6 + $0xd0] sm:$0xff]
    %v2164 = vld [vmem:[#allocation6 + $0xd8] sm:$0xff]
    %v2165 = vld [vmem:[#allocation6 + $0xe0] sm:$0xff]
    %v2166 = vld [vmem:[#allocation6 + $0xe8] sm:$0xff]
    %v2167 = vld [vmem:[#allocation6 + $0xf0] sm:$0xff]
    %v2168 = vld [vmem:[#allocation6 + $0xf8] sm:$0xff]
    %vm2169 = vcmp.eq.s32.totalorder %v1719, 1
    %vm2170 = vcmp.eq.s32.totalorder %v1720, 1
    %v2171 = vsel %vm2169, %v228, 0.0
    %v2172 = vsel %vm2170, %v317, 0.0
    %v2173 = vsel %vm2169, %v230, 0.0
    %v2174 = vsel %vm2170, %v319, 0.0
    %v2175 = vsel %vm2169, %v233, 0.0
    %v2176 = vsel %vm2170, %v322, 0.0
    %v2177 = vsel %vm2169, %v235, 0.0
    %v2178 = vsel %vm2170, %v324, 0.0
    %v2179 = vsel %vm2169, %v238, 0.0
    %v2180 = vsel %vm2170, %v327, 0.0
    %v2181 = vsel %vm2169, %v240, 0.0
    %v2182 = vsel %vm2170, %v329, 0.0
    %v2183 = vsel %vm2169, %v243, 0.0
    %v2184 = vsel %vm2170, %v332, 0.0
    %v2185 = vsel %vm2169, %v245, 0.0
    %v2186 = vsel %vm2170, %v334, 0.0
    %v2187 = vsel %vm2169, %v248, 0.0
    %v2188 = vsel %vm2170, %v337, 0.0
    %v2189 = vsel %vm2169, %v250, 0.0
    %v2190 = vsel %vm2170, %v339, 0.0
    %v2191 = vsel %vm2169, %v253, 0.0
    %v2192 = vsel %vm2170, %v342, 0.0
    %v2193 = vsel %vm2169, %v255, 0.0
    %v2194 = vsel %vm2170, %v344, 0.0
    %v2195 = vsel %vm2169, %v258, 0.0
    %v2196 = vsel %vm2170, %v347, 0.0
    %v2197 = vsel %vm2169, %v260, 0.0
    %v2198 = vsel %vm2170, %v349, 0.0
    %v2199 = vsel %vm2169, %v263, 0.0
    %v2200 = vsel %vm2170, %v352, 0.0
    %v2201 = vsel %vm2169, %v265, 0.0
    %v2202 = vsel %vm2170, %v354, 0.0
    %v2203 = vsel %vm2169, %v268, 0.0
    %v2204 = vsel %vm2170, %v357, 0.0
    %v2205 = vsel %vm2169, %v270, 0.0
    %v2206 = vsel %vm2170, %v359, 0.0
    %v2207 = vsel %vm2169, %v273, 0.0
    %v2208 = vsel %vm2170, %v362, 0.0
    %v2209 = vsel %vm2169, %v275, 0.0
    %v2210 = vsel %vm2170, %v364, 0.0
    %v2211 = vsel %vm2169, %v278, 0.0
    %v2212 = vsel %vm2170, %v367, 0.0
    %v2213 = vsel %vm2169, %v280, 0.0
    %v2214 = vsel %vm2170, %v369, 0.0
    %v2215 = vsel %vm2169, %v283, 0.0
    %v2216 = vsel %vm2170, %v372, 0.0
    %v2217 = vsel %vm2169, %v285, 0.0
    %v2218 = vsel %vm2170, %v374, 0.0
    %v2219 = vsel %vm2169, %v288, 0.0
    %v2220 = vsel %vm2170, %v377, 0.0
    %v2221 = vsel %vm2169, %v290, 0.0
    %v2222 = vsel %vm2170, %v379, 0.0
    %v2223 = vsel %vm2169, %v293, 0.0
    %v2224 = vsel %vm2170, %v382, 0.0
    %v2225 = vsel %vm2169, %v295, 0.0
    %v2226 = vsel %vm2170, %v384, 0.0
    %v2227 = vsel %vm2169, %v298, 0.0
    %v2228 = vsel %vm2170, %v387, 0.0
    %v2229 = vsel %vm2169, %v300, 0.0
    %v2230 = vsel %vm2170, %v389, 0.0
    %v2231 = vsel %vm2169, %v303, 0.0
    %v2232 = vsel %vm2170, %v392, 0.0
    %v2233 = vsel %vm2169, %v305, 0.0
    %v2234 = vsel %vm2170, %v394, 0.0
    %v2235 = vadd.f32 %v2171, %v2172
    %2236 = vadd.xlane.f32.xlu0 %v2235
    %v2237 = vpop.xlane.xlu0 %2236
    %v2238 = vadd.f32 %v2173, %v2174
    %2239 = vadd.xlane.f32.xlu0 %v2238
    %v2240 = vpop.xlane.xlu0 %2239
    %v2241 = vadd.f32 %v2175, %v2176
    %2242 = vadd.xlane.f32.xlu0 %v2241
    %v2243 = vpop.xlane.xlu0 %2242
    %v2244 = vadd.f32 %v2177, %v2178
    %2245 = vadd.xlane.f32.xlu0 %v2244
    %v2246 = vpop.xlane.xlu0 %2245
    %v2247 = vadd.f32 %v2179, %v2180
    %2248 = vadd.xlane.f32.xlu0 %v2247
    %v2249 = vpop.xlane.xlu0 %2248
    %v2250 = vadd.f32 %v2181, %v2182
    %2251 = vadd.xlane.f32.xlu0 %v2250
    %v2252 = vpop.xlane.xlu0 %2251
    %v2253 = vadd.f32 %v2183, %v2184
    %2254 = vadd.xlane.f32.xlu0 %v2253
    %v2255 = vpop.xlane.xlu0 %2254
    %v2256 = vadd.f32 %v2185, %v2186
    %2257 = vadd.xlane.f32.xlu0 %v2256
    %v2258 = vpop.xlane.xlu0 %2257
    %v2259 = vadd.f32 %v2187, %v2188
    %2260 = vadd.xlane.f32.xlu0 %v2259
    %v2261 = vpop.xlane.xlu0 %2260
    %v2262 = vadd.f32 %v2189, %v2190
    %2263 = vadd.xlane.f32.xlu0 %v2262
    %v2264 = vpop.xlane.xlu0 %2263
    %v2265 = vadd.f32 %v2191, %v2192
    %2266 = vadd.xlane.f32.xlu0 %v2265
    %v2267 = vpop.xlane.xlu0 %2266
    %v2268 = vadd.f32 %v2193, %v2194
    %2269 = vadd.xlane.f32.xlu0 %v2268
    %v2270 = vpop.xlane.xlu0 %2269
    %v2271 = vadd.f32 %v2195, %v2196
    %2272 = vadd.xlane.f32.xlu0 %v2271
    %v2273 = vpop.xlane.xlu0 %2272
    %v2274 = vadd.f32 %v2197, %v2198
    %2275 = vadd.xlane.f32.xlu0 %v2274
    %v2276 = vpop.xlane.xlu0 %2275
    %v2277 = vadd.f32 %v2199, %v2200
    %2278 = vadd.xlane.f32.xlu0 %v2277
    %v2279 = vpop.xlane.xlu0 %2278
    %v2280 = vadd.f32 %v2201, %v2202
    %2281 = vadd.xlane.f32.xlu0 %v2280
    %v2282 = vpop.xlane.xlu0 %2281
    %v2283 = vadd.f32 %v2203, %v2204
    %2284 = vadd.xlane.f32.xlu0 %v2283
    %v2285 = vpop.xlane.xlu0 %2284
    %v2286 = vadd.f32 %v2205, %v2206
    %2287 = vadd.xlane.f32.xlu0 %v2286
    %v2288 = vpop.xlane.xlu0 %2287
    %v2289 = vadd.f32 %v2207, %v2208
    %2290 = vadd.xlane.f32.xlu0 %v2289
    %v2291 = vpop.xlane.xlu0 %2290
    %v2292 = vadd.f32 %v2209, %v2210
    %2293 = vadd.xlane.f32.xlu0 %v2292
    %v2294 = vpop.xlane.xlu0 %2293
    %v2295 = vadd.f32 %v2211, %v2212
    %2296 = vadd.xlane.f32.xlu0 %v2295
    %v2297 = vpop.xlane.xlu0 %2296
    %v2298 = vadd.f32 %v2213, %v2214
    %2299 = vadd.xlane.f32.xlu0 %v2298
    %v2300 = vpop.xlane.xlu0 %2299
    %v2301 = vadd.f32 %v2215, %v2216
    %2302 = vadd.xlane.f32.xlu0 %v2301
    %v2303 = vpop.xlane.xlu0 %2302
    %v2304 = vadd.f32 %v2217, %v2218
    %2305 = vadd.xlane.f32.xlu0 %v2304
    %v2306 = vpop.xlane.xlu0 %2305
    %v2307 = vadd.f32 %v2219, %v2220
    %2308 = vadd.xlane.f32.xlu0 %v2307
    %v2309 = vpop.xlane.xlu0 %2308
    %v2310 = vadd.f32 %v2221, %v2222
    %2311 = vadd.xlane.f32.xlu0 %v2310
    %v2312 = vpop.xlane.xlu0 %2311
    %v2313 = vadd.f32 %v2223, %v2224
    %2314 = vadd.xlane.f32.xlu0 %v2313
    %v2315 = vpop.xlane.xlu0 %2314
    %v2316 = vadd.f32 %v2225, %v2226
    %2317 = vadd.xlane.f32.xlu0 %v2316
    %v2318 = vpop.xlane.xlu0 %2317
    %v2319 = vadd.f32 %v2227, %v2228
    %2320 = vadd.xlane.f32.xlu0 %v2319
    %v2321 = vpop.xlane.xlu0 %2320
    %v2322 = vadd.f32 %v2229, %v2230
    %2323 = vadd.xlane.f32.xlu0 %v2322
    %v2324 = vpop.xlane.xlu0 %2323
    %v2325 = vadd.f32 %v2231, %v2232
    %2326 = vadd.xlane.f32.xlu0 %v2325
    %v2327 = vpop.xlane.xlu0 %2326
    %v2328 = vadd.f32 %v2233, %v2234
    %2329 = vadd.xlane.f32.xlu0 %v2328
    %v2330 = vpop.xlane.xlu0 %2329
    %v2331 = vadd.f32 %v2137, %v2237
    %v2332 = vadd.f32 %v2138, %v2240
    %v2333 = vadd.f32 %v2139, %v2243
    %v2334 = vadd.f32 %v2140, %v2246
    %v2335 = vadd.f32 %v2141, %v2249
    %v2336 = vadd.f32 %v2142, %v2252
    %v2337 = vadd.f32 %v2143, %v2255
    %v2338 = vadd.f32 %v2144, %v2258
    %v2339 = vadd.f32 %v2145, %v2261
    %v2340 = vadd.f32 %v2146, %v2264
    %v2341 = vadd.f32 %v2147, %v2267
    %v2342 = vadd.f32 %v2148, %v2270
    %v2343 = vadd.f32 %v2149, %v2273
    %v2344 = vadd.f32 %v2150, %v2276
    %v2345 = vadd.f32 %v2151, %v2279
    %v2346 = vadd.f32 %v2152, %v2282
    %v2347 = vadd.f32 %v2153, %v2285
    %v2348 = vadd.f32 %v2154, %v2288
    %v2349 = vadd.f32 %v2155, %v2291
    %v2350 = vadd.f32 %v2156, %v2294
    %v2351 = vadd.f32 %v2157, %v2297
    %v2352 = vadd.f32 %v2158, %v2300
    %v2353 = vadd.f32 %v2159, %v2303
    %v2354 = vadd.f32 %v2160, %v2306
    %v2355 = vadd.f32 %v2161, %v2309
    %v2356 = vadd.f32 %v2162, %v2312
    %v2357 = vadd.f32 %v2163, %v2315
    %v2358 = vadd.f32 %v2164, %v2318
    %v2359 = vadd.f32 %v2165, %v2321
    %v2360 = vadd.f32 %v2166, %v2324
    %v2361 = vadd.f32 %v2167, %v2327
    %v2362 = vadd.f32 %v2168, %v2330
    %2363 = vst.msk [vmem:[#allocation6] sm:$0xff] %vm1425, %v2331
    %2364 = vst.msk [vmem:[#allocation6 + $0x8] sm:$0xff] %vm1425, %v2332
    %2365 = vst.msk [vmem:[#allocation6 + $0x10] sm:$0xff] %vm1425, %v2333
    %2366 = vst.msk [vmem:[#allocation6 + $0x18] sm:$0xff] %vm1425, %v2334
    %2367 = vst.msk [vmem:[#allocation6 + $0x20] sm:$0xff] %vm1425, %v2335
    %2368 = vst.msk [vmem:[#allocation6 + $0x28] sm:$0xff] %vm1425, %v2336
    %2369 = vst.msk [vmem:[#allocation6 + $0x30] sm:$0xff] %vm1425, %v2337
    %2370 = vst.msk [vmem:[#allocation6 + $0x38] sm:$0xff] %vm1425, %v2338
    %2371 = vst.msk [vmem:[#allocation6 + $0x40] sm:$0xff] %vm1425, %v2339
    %2372 = vst.msk [vmem:[#allocation6 + $0x48] sm:$0xff] %vm1425, %v2340
    %2373 = vst.msk [vmem:[#allocation6 + $0x50] sm:$0xff] %vm1425, %v2341
    %2374 = vst.msk [vmem:[#allocation6 + $0x58] sm:$0xff] %vm1425, %v2342
    %2375 = vst.msk [vmem:[#allocation6 + $0x60] sm:$0xff] %vm1425, %v2343
    %2376 = vst.msk [vmem:[#allocation6 + $0x68] sm:$0xff] %vm1425, %v2344
    %2377 = vst.msk [vmem:[#allocation6 + $0x70] sm:$0xff] %vm1425, %v2345
    %2378 = vst.msk [vmem:[#allocation6 + $0x78] sm:$0xff] %vm1425, %v2346
    %2379 = vst.msk [vmem:[#allocation6 + $0x80] sm:$0xff] %vm1425, %v2347
    %2380 = vst.msk [vmem:[#allocation6 + $0x88] sm:$0xff] %vm1425, %v2348
    %2381 = vst.msk [vmem:[#allocation6 + $0x90] sm:$0xff] %vm1425, %v2349
    %2382 = vst.msk [vmem:[#allocation6 + $0x98] sm:$0xff] %vm1425, %v2350
    %2383 = vst.msk [vmem:[#allocation6 + $0xa0] sm:$0xff] %vm1425, %v2351
    %2384 = vst.msk [vmem:[#allocation6 + $0xa8] sm:$0xff] %vm1425, %v2352
    %2385 = vst.msk [vmem:[#allocation6 + $0xb0] sm:$0xff] %vm1425, %v2353
    %2386 = vst.msk [vmem:[#allocation6 + $0xb8] sm:$0xff] %vm1425, %v2354
    %2387 = vst.msk [vmem:[#allocation6 + $0xc0] sm:$0xff] %vm1425, %v2355
    %2388 = vst.msk [vmem:[#allocation6 + $0xc8] sm:$0xff] %vm1425, %v2356
    %2389 = vst.msk [vmem:[#allocation6 + $0xd0] sm:$0xff] %vm1425, %v2357
    %2390 = vst.msk [vmem:[#allocation6 + $0xd8] sm:$0xff] %vm1425, %v2358
    %2391 = vst.msk [vmem:[#allocation6 + $0xe0] sm:$0xff] %vm1425, %v2359
    %2392 = vst.msk [vmem:[#allocation6 + $0xe8] sm:$0xff] %vm1425, %v2360
    %2393 = vst.msk [vmem:[#allocation6 + $0xf0] sm:$0xff] %vm1425, %v2361
    %2394 = vst.msk [vmem:[#allocation6 + $0xf8] sm:$0xff] %vm1425, %v2362
    // Predicated region
    $region26: #{tpu_custom_call.1} parent=1 // pred_check
      %p2395 = pneg %p460
    $region27: #{tpu_custom_call.1} parent=1 // pred_check_branch
      %2397 = sbr.rel (%p2395) target = $region29
    $region28: #{tpu_custom_call.1} parent=1 // pred_region
      %v2398 = vld [vmem:[#allocation2] sm:$0xff]
      %v2399 = vld [vmem:[#allocation2 + $0x8] sm:$0xff]
      %v2400 = vld [vmem:[#allocation2 + $0x10] sm:$0xff]
      %v2401 = vld [vmem:[#allocation2 + $0x18] sm:$0xff]
      %v2402 = vld [vmem:[#allocation2 + $0x20] sm:$0xff]
      %v2403 = vld [vmem:[#allocation2 + $0x28] sm:$0xff]
      %v2404 = vld [vmem:[#allocation2 + $0x30] sm:$0xff]
      %v2405 = vld [vmem:[#allocation2 + $0x38] sm:$0xff]
      %v2406 = vld [vmem:[#allocation2 + $0x40] sm:$0xff]
      %v2407 = vld [vmem:[#allocation2 + $0x48] sm:$0xff]
      %v2408 = vld [vmem:[#allocation2 + $0x50] sm:$0xff]
      %v2409 = vld [vmem:[#allocation2 + $0x58] sm:$0xff]
      %v2410 = vld [vmem:[#allocation2 + $0x60] sm:$0xff]
      %v2411 = vld [vmem:[#allocation2 + $0x68] sm:$0xff]
      %v2412 = vld [vmem:[#allocation2 + $0x70] sm:$0xff]
      %v2413 = vld [vmem:[#allocation2 + $0x78] sm:$0xff]
      %v2414 = vld [vmem:[#allocation2 + $0x80] sm:$0xff]
      %v2415 = vld [vmem:[#allocation2 + $0x88] sm:$0xff]
      %v2416 = vld [vmem:[#allocation2 + $0x90] sm:$0xff]
      %v2417 = vld [vmem:[#allocation2 + $0x98] sm:$0xff]
      %v2418 = vld [vmem:[#allocation2 + $0xa0] sm:$0xff]
      %v2419 = vld [vmem:[#allocation2 + $0xa8] sm:$0xff]
      %v2420 = vld [vmem:[#allocation2 + $0xb0] sm:$0xff]
      %v2421 = vld [vmem:[#allocation2 + $0xb8] sm:$0xff]
      %v2422 = vld [vmem:[#allocation2 + $0xc0] sm:$0xff]
      %v2423 = vld [vmem:[#allocation2 + $0xc8] sm:$0xff]
      %v2424 = vld [vmem:[#allocation2 + $0xd0] sm:$0xff]
      %v2425 = vld [vmem:[#allocation2 + $0xd8] sm:$0xff]
      %v2426 = vld [vmem:[#allocation2 + $0xe0] sm:$0xff]
      %v2427 = vld [vmem:[#allocation2 + $0xe8] sm:$0xff]
      %v2428 = vld [vmem:[#allocation2 + $0xf0] sm:$0xff]
      %v2429 = vld [vmem:[#allocation2 + $0xf8] sm:$0xff]
      %v2430 = vld [vmem:[#allocation3] sm:$0xff]
      %v2431 = vld [vmem:[#allocation3 + $0x8] sm:$0xff]
      %v2432 = vld [vmem:[#allocation3 + $0x10] sm:$0xff]
      %v2433 = vld [vmem:[#allocation3 + $0x18] sm:$0xff]
      %v2434 = vld [vmem:[#allocation3 + $0x20] sm:$0xff]
      %v2435 = vld [vmem:[#allocation3 + $0x28] sm:$0xff]
      %v2436 = vld [vmem:[#allocation3 + $0x30] sm:$0xff]
      %v2437 = vld [vmem:[#allocation3 + $0x38] sm:$0xff]
      %v2438 = vld [vmem:[#allocation3 + $0x40] sm:$0xff]
      %v2439 = vld [vmem:[#allocation3 + $0x48] sm:$0xff]
      %v2440 = vld [vmem:[#allocation3 + $0x50] sm:$0xff]
      %v2441 = vld [vmem:[#allocation3 + $0x58] sm:$0xff]
      %v2442 = vld [vmem:[#allocation3 + $0x60] sm:$0xff]
      %v2443 = vld [vmem:[#allocation3 + $0x68] sm:$0xff]
      %v2444 = vld [vmem:[#allocation3 + $0x70] sm:$0xff]
      %v2445 = vld [vmem:[#allocation3 + $0x78] sm:$0xff]
      %v2446 = vld [vmem:[#allocation3 + $0x80] sm:$0xff]
      %v2447 = vld [vmem:[#allocation3 + $0x88] sm:$0xff]
      %v2448 = vld [vmem:[#allocation3 + $0x90] sm:$0xff]
      %v2449 = vld [vmem:[#allocation3 + $0x98] sm:$0xff]
      %v2450 = vld [vmem:[#allocation3 + $0xa0] sm:$0xff]
      %v2451 = vld [vmem:[#allocation3 + $0xa8] sm:$0xff]
      %v2452 = vld [vmem:[#allocation3 + $0xb0] sm:$0xff]
      %v2453 = vld [vmem:[#allocation3 + $0xb8] sm:$0xff]
      %v2454 = vld [vmem:[#allocation3 + $0xc0] sm:$0xff]
      %v2455 = vld [vmem:[#allocation3 + $0xc8] sm:$0xff]
      %v2456 = vld [vmem:[#allocation3 + $0xd0] sm:$0xff]
      %v2457 = vld [vmem:[#allocation3 + $0xd8] sm:$0xff]
      %v2458 = vld [vmem:[#allocation3 + $0xe0] sm:$0xff]
      %v2459 = vld [vmem:[#allocation3 + $0xe8] sm:$0xff]
      %v2460 = vld [vmem:[#allocation3 + $0xf0] sm:$0xff]
      %v2461 = vld [vmem:[#allocation3 + $0xf8] sm:$0xff]
      %v2462 = vlog2.pop %v2430
      %v2463 = vmul.f32 %v2462, 0.6931472
      %v2464 = vlog2.pop %v2431
      %v2465 = vmul.f32 %v2464, 0.6931472
      %v2466 = vlog2.pop %v2432
      %v2467 = vmul.f32 %v2466, 0.6931472
      %v2468 = vlog2.pop %v2433
      %v2469 = vmul.f32 %v2468, 0.6931472
      %v2470 = vlog2.pop %v2434
      %v2471 = vmul.f32 %v2470, 0.6931472
      %v2472 = vlog2.pop %v2435
      %v2473 = vmul.f32 %v2472, 0.6931472
      %v2474 = vlog2.pop %v2436
      %v2475 = vmul.f32 %v2474, 0.6931472
      %v2476 = vlog2.pop %v2437
      %v2477 = vmul.f32 %v2476, 0.6931472
      %v2478 = vlog2.pop %v2438
      %v2479 = vmul.f32 %v2478, 0.6931472
      %v2480 = vlog2.pop %v2439
      %v2481 = vmul.f32 %v2480, 0.6931472
      %v2482 = vlog2.pop %v2440
      %v2483 = vmul.f32 %v2482, 0.6931472
      %v2484 = vlog2.pop %v2441
      %v2485 = vmul.f32 %v2484, 0.6931472
      %v2486 = vlog2.pop %v2442
      %v2487 = vmul.f32 %v2486, 0.6931472
      %v2488 = vlog2.pop %v2443
      %v2489 = vmul.f32 %v2488, 0.6931472
      %v2490 = vlog2.pop %v2444
      %v2491 = vmul.f32 %v2490, 0.6931472
      %v2492 = vlog2.pop %v2445
      %v2493 = vmul.f32 %v2492, 0.6931472
      %v2494 = vlog2.pop %v2446
      %v2495 = vmul.f32 %v2494, 0.6931472
      %v2496 = vlog2.pop %v2447
      %v2497 = vmul.f32 %v2496, 0.6931472
      %v2498 = vlog2.pop %v2448
      %v2499 = vmul.f32 %v2498, 0.6931472
      %v2500 = vlog2.pop %v2449
      %v2501 = vmul.f32 %v2500, 0.6931472
      %v2502 = vlog2.pop %v2450
      %v2503 = vmul.f32 %v2502, 0.6931472
      %v2504 = vlog2.pop %v2451
      %v2505 = vmul.f32 %v2504, 0.6931472
      %v2506 = vlog2.pop %v2452
      %v2507 = vmul.f32 %v2506, 0.6931472
      %v2508 = vlog2.pop %v2453
      %v2509 = vmul.f32 %v2508, 0.6931472
      %v2510 = vlog2.pop %v2454
      %v2511 = vmul.f32 %v2510, 0.6931472
      %v2512 = vlog2.pop %v2455
      %v2513 = vmul.f32 %v2512, 0.6931472
      %v2514 = vlog2.pop %v2456
      %v2515 = vmul.f32 %v2514, 0.6931472
      %v2516 = vlog2.pop %v2457
      %v2517 = vmul.f32 %v2516, 0.6931472
      %v2518 = vlog2.pop %v2458
      %v2519 = vmul.f32 %v2518, 0.6931472
      %v2520 = vlog2.pop %v2459
      %v2521 = vmul.f32 %v2520, 0.6931472
      %v2522 = vlog2.pop %v2460
      %v2523 = vmul.f32 %v2522, 0.6931472
      %v2524 = vlog2.pop %v2461
      %v2525 = vmul.f32 %v2524, 0.6931472
      %v2526 = vadd.f32 %v2398, %v2463
      %v2527 = vadd.f32 %v2399, %v2465
      %v2528 = vadd.f32 %v2400, %v2467
      %v2529 = vadd.f32 %v2401, %v2469
      %v2530 = vadd.f32 %v2402, %v2471
      %v2531 = vadd.f32 %v2403, %v2473
      %v2532 = vadd.f32 %v2404, %v2475
      %v2533 = vadd.f32 %v2405, %v2477
      %v2534 = vadd.f32 %v2406, %v2479
      %v2535 = vadd.f32 %v2407, %v2481
      %v2536 = vadd.f32 %v2408, %v2483
      %v2537 = vadd.f32 %v2409, %v2485
      %v2538 = vadd.f32 %v2410, %v2487
      %v2539 = vadd.f32 %v2411, %v2489
      %v2540 = vadd.f32 %v2412, %v2491
      %v2541 = vadd.f32 %v2413, %v2493
      %v2542 = vadd.f32 %v2414, %v2495
      %v2543 = vadd.f32 %v2415, %v2497
      %v2544 = vadd.f32 %v2416, %v2499
      %v2545 = vadd.f32 %v2417, %v2501
      %v2546 = vadd.f32 %v2418, %v2503
      %v2547 = vadd.f32 %v2419, %v2505
      %v2548 = vadd.f32 %v2420, %v2507
      %v2549 = vadd.f32 %v2421, %v2509
      %v2550 = vadd.f32 %v2422, %v2511
      %v2551 = vadd.f32 %v2423, %v2513
      %v2552 = vadd.f32 %v2424, %v2515
      %v2553 = vadd.f32 %v2425, %v2517
      %v2554 = vadd.f32 %v2426, %v2519
      %v2555 = vadd.f32 %v2427, %v2521
      %v2556 = vadd.f32 %v2428, %v2523
      %v2557 = vadd.f32 %v2429, %v2525
      %v2558 = vld [vmem:[#allocation5] sm:$0xff]
      %v2559 = vld [vmem:[#allocation5 + $0x8] sm:$0xff]
      %v2560 = vld [vmem:[#allocation5 + $0x10] sm:$0xff]
      %v2561 = vld [vmem:[#allocation5 + $0x18] sm:$0xff]
      %v2562 = vld [vmem:[#allocation5 + $0x20] sm:$0xff]
      %v2563 = vld [vmem:[#allocation5 + $0x28] sm:$0xff]
      %v2564 = vld [vmem:[#allocation5 + $0x30] sm:$0xff]
      %v2565 = vld [vmem:[#allocation5 + $0x38] sm:$0xff]
      %v2566 = vld [vmem:[#allocation5 + $0x40] sm:$0xff]
      %v2567 = vld [vmem:[#allocation5 + $0x48] sm:$0xff]
      %v2568 = vld [vmem:[#allocation5 + $0x50] sm:$0xff]
      %v2569 = vld [vmem:[#allocation5 + $0x58] sm:$0xff]
      %v2570 = vld [vmem:[#allocation5 + $0x60] sm:$0xff]
      %v2571 = vld [vmem:[#allocation5 + $0x68] sm:$0xff]
      %v2572 = vld [vmem:[#allocation5 + $0x70] sm:$0xff]
      %v2573 = vld [vmem:[#allocation5 + $0x78] sm:$0xff]
      %v2574 = vld [vmem:[#allocation5 + $0x80] sm:$0xff]
      %v2575 = vld [vmem:[#allocation5 + $0x88] sm:$0xff]
      %v2576 = vld [vmem:[#allocation5 + $0x90] sm:$0xff]
      %v2577 = vld [vmem:[#allocation5 + $0x98] sm:$0xff]
      %v2578 = vld [vmem:[#allocation5 + $0xa0] sm:$0xff]
      %v2579 = vld [vmem:[#allocation5 + $0xa8] sm:$0xff]
      %v2580 = vld [vmem:[#allocation5 + $0xb0] sm:$0xff]
      %v2581 = vld [vmem:[#allocation5 + $0xb8] sm:$0xff]
      %v2582 = vld [vmem:[#allocation5 + $0xc0] sm:$0xff]
      %v2583 = vld [vmem:[#allocation5 + $0xc8] sm:$0xff]
      %v2584 = vld [vmem:[#allocation5 + $0xd0] sm:$0xff]
      %v2585 = vld [vmem:[#allocation5 + $0xd8] sm:$0xff]
      %v2586 = vld [vmem:[#allocation5 + $0xe0] sm:$0xff]
      %v2587 = vld [vmem:[#allocation5 + $0xe8] sm:$0xff]
      %v2588 = vld [vmem:[#allocation5 + $0xf0] sm:$0xff]
      %v2589 = vld [vmem:[#allocation5 + $0xf8] sm:$0xff]
      %v2590 = vsub.f32 %v2558, %v2526
      %v2591 = vsub.f32 %v2559, %v2527
      %v2592 = vsub.f32 %v2560, %v2528
      %v2593 = vsub.f32 %v2561, %v2529
      %v2594 = vsub.f32 %v2562, %v2530
      %v2595 = vsub.f32 %v2563, %v2531
      %v2596 = vsub.f32 %v2564, %v2532
      %v2597 = vsub.f32 %v2565, %v2533
      %v2598 = vsub.f32 %v2566, %v2534
      %v2599 = vsub.f32 %v2567, %v2535
      %v2600 = vsub.f32 %v2568, %v2536
      %v2601 = vsub.f32 %v2569, %v2537
      %v2602 = vsub.f32 %v2570, %v2538
      %v2603 = vsub.f32 %v2571, %v2539
      %v2604 = vsub.f32 %v2572, %v2540
      %v2605 = vsub.f32 %v2573, %v2541
      %v2606 = vsub.f32 %v2574, %v2542
      %v2607 = vsub.f32 %v2575, %v2543
      %v2608 = vsub.f32 %v2576, %v2544
      %v2609 = vsub.f32 %v2577, %v2545
      %v2610 = vsub.f32 %v2578, %v2546
      %v2611 = vsub.f32 %v2579, %v2547
      %v2612 = vsub.f32 %v2580, %v2548
      %v2613 = vsub.f32 %v2581, %v2549
      %v2614 = vsub.f32 %v2582, %v2550
      %v2615 = vsub.f32 %v2583, %v2551
      %v2616 = vsub.f32 %v2584, %v2552
      %v2617 = vsub.f32 %v2585, %v2553
      %v2618 = vsub.f32 %v2586, %v2554
      %v2619 = vsub.f32 %v2587, %v2555
      %v2620 = vsub.f32 %v2588, %v2556
      %v2621 = vsub.f32 %v2589, %v2557
      %v2622 = vld [vmem:[#allocation4] sm:$0xff]
      %v2623 = vld [vmem:[#allocation4 + $0x8] sm:$0xff]
      %v2624 = vld [vmem:[#allocation4 + $0x10] sm:$0xff]
      %v2625 = vld [vmem:[#allocation4 + $0x18] sm:$0xff]
      %v2626 = vld [vmem:[#allocation4 + $0x20] sm:$0xff]
      %v2627 = vld [vmem:[#allocation4 + $0x28] sm:$0xff]
      %v2628 = vld [vmem:[#allocation4 + $0x30] sm:$0xff]
      %v2629 = vld [vmem:[#allocation4 + $0x38] sm:$0xff]
      %v2630 = vld [vmem:[#allocation4 + $0x40] sm:$0xff]
      %v2631 = vld [vmem:[#allocation4 + $0x48] sm:$0xff]
      %v2632 = vld [vmem:[#allocation4 + $0x50] sm:$0xff]
      %v2633 = vld [vmem:[#allocation4 + $0x58] sm:$0xff]
      %v2634 = vld [vmem:[#allocation4 + $0x60] sm:$0xff]
      %v2635 = vld [vmem:[#allocation4 + $0x68] sm:$0xff]
      %v2636 = vld [vmem:[#allocation4 + $0x70] sm:$0xff]
      %v2637 = vld [vmem:[#allocation4 + $0x78] sm:$0xff]
      %v2638 = vld [vmem:[#allocation4 + $0x80] sm:$0xff]
      %v2639 = vld [vmem:[#allocation4 + $0x88] sm:$0xff]
      %v2640 = vld [vmem:[#allocation4 + $0x90] sm:$0xff]
      %v2641 = vld [vmem:[#allocation4 + $0x98] sm:$0xff]
      %v2642 = vld [vmem:[#allocation4 + $0xa0] sm:$0xff]
      %v2643 = vld [vmem:[#allocation4 + $0xa8] sm:$0xff]
      %v2644 = vld [vmem:[#allocation4 + $0xb0] sm:$0xff]
      %v2645 = vld [vmem:[#allocation4 + $0xb8] sm:$0xff]
      %v2646 = vld [vmem:[#allocation4 + $0xc0] sm:$0xff]
      %v2647 = vld [vmem:[#allocation4 + $0xc8] sm:$0xff]
      %v2648 = vld [vmem:[#allocation4 + $0xd0] sm:$0xff]
      %v2649 = vld [vmem:[#allocation4 + $0xd8] sm:$0xff]
      %v2650 = vld [vmem:[#allocation4 + $0xe0] sm:$0xff]
      %v2651 = vld [vmem:[#allocation4 + $0xe8] sm:$0xff]
      %v2652 = vld [vmem:[#allocation4 + $0xf0] sm:$0xff]
      %v2653 = vld [vmem:[#allocation4 + $0xf8] sm:$0xff]
      %v2654 = vmul.f32 %v2526, 256.0
      %v2655 = vmul.f32 %v2527, 256.0
      %v2656 = vmul.f32 %v2528, 256.0
      %v2657 = vmul.f32 %v2529, 256.0
      %v2658 = vmul.f32 %v2530, 256.0
      %v2659 = vmul.f32 %v2531, 256.0
      %v2660 = vmul.f32 %v2532, 256.0
      %v2661 = vmul.f32 %v2533, 256.0
      %v2662 = vmul.f32 %v2534, 256.0
      %v2663 = vmul.f32 %v2535, 256.0
      %v2664 = vmul.f32 %v2536, 256.0
      %v2665 = vmul.f32 %v2537, 256.0
      %v2666 = vmul.f32 %v2538, 256.0
      %v2667 = vmul.f32 %v2539, 256.0
      %v2668 = vmul.f32 %v2540, 256.0
      %v2669 = vmul.f32 %v2541, 256.0
      %v2670 = vmul.f32 %v2542, 256.0
      %v2671 = vmul.f32 %v2543, 256.0
      %v2672 = vmul.f32 %v2544, 256.0
      %v2673 = vmul.f32 %v2545, 256.0
      %v2674 = vmul.f32 %v2546, 256.0
      %v2675 = vmul.f32 %v2547, 256.0
      %v2676 = vmul.f32 %v2548, 256.0
      %v2677 = vmul.f32 %v2549, 256.0
      %v2678 = vmul.f32 %v2550, 256.0
      %v2679 = vmul.f32 %v2551, 256.0
      %v2680 = vmul.f32 %v2552, 256.0
      %v2681 = vmul.f32 %v2553, 256.0
      %v2682 = vmul.f32 %v2554, 256.0
      %v2683 = vmul.f32 %v2555, 256.0
      %v2684 = vmul.f32 %v2556, 256.0
      %v2685 = vmul.f32 %v2557, 256.0
      %v2686 = vsub.f32 %v2622, %v2654
      %v2687 = vsub.f32 %v2623, %v2655
      %v2688 = vsub.f32 %v2624, %v2656
      %v2689 = vsub.f32 %v2625, %v2657
      %v2690 = vsub.f32 %v2626, %v2658
      %v2691 = vsub.f32 %v2627, %v2659
      %v2692 = vsub.f32 %v2628, %v2660
      %v2693 = vsub.f32 %v2629, %v2661
      %v2694 = vsub.f32 %v2630, %v2662
      %v2695 = vsub.f32 %v2631, %v2663
      %v2696 = vsub.f32 %v2632, %v2664
      %v2697 = vsub.f32 %v2633, %v2665
      %v2698 = vsub.f32 %v2634, %v2666
      %v2699 = vsub.f32 %v2635, %v2667
      %v2700 = vsub.f32 %v2636, %v2668
      %v2701 = vsub.f32 %v2637, %v2669
      %v2702 = vsub.f32 %v2638, %v2670
      %v2703 = vsub.f32 %v2639, %v2671
      %v2704 = vsub.f32 %v2640, %v2672
      %v2705 = vsub.f32 %v2641, %v2673
      %v2706 = vsub.f32 %v2642, %v2674
      %v2707 = vsub.f32 %v2643, %v2675
      %v2708 = vsub.f32 %v2644, %v2676
      %v2709 = vsub.f32 %v2645, %v2677
      %v2710 = vsub.f32 %v2646, %v2678
      %v2711 = vsub.f32 %v2647, %v2679
      %v2712 = vsub.f32 %v2648, %v2680
      %v2713 = vsub.f32 %v2649, %v2681
      %v2714 = vsub.f32 %v2650, %v2682
      %v2715 = vsub.f32 %v2651, %v2683
      %v2716 = vsub.f32 %v2652, %v2684
      %v2717 = vsub.f32 %v2653, %v2685
      %v2718 = vld [vmem:[#allocation6] sm:$0xff]
      %v2719 = vld [vmem:[#allocation6 + $0x8] sm:$0xff]
      %v2720 = vld [vmem:[#allocation6 + $0x10] sm:$0xff]
      %v2721 = vld [vmem:[#allocation6 + $0x18] sm:$0xff]
      %v2722 = vld [vmem:[#allocation6 + $0x20] sm:$0xff]
      %v2723 = vld [vmem:[#allocation6 + $0x28] sm:$0xff]
      %v2724 = vld [vmem:[#allocation6 + $0x30] sm:$0xff]
      %v2725 = vld [vmem:[#allocation6 + $0x38] sm:$0xff]
      %v2726 = vld [vmem:[#allocation6 + $0x40] sm:$0xff]
      %v2727 = vld [vmem:[#allocation6 + $0x48] sm:$0xff]
      %v2728 = vld [vmem:[#allocation6 + $0x50] sm:$0xff]
      %v2729 = vld [vmem:[#allocation6 + $0x58] sm:$0xff]
      %v2730 = vld [vmem:[#allocation6 + $0x60] sm:$0xff]
      %v2731 = vld [vmem:[#allocation6 + $0x68] sm:$0xff]
      %v2732 = vld [vmem:[#allocation6 + $0x70] sm:$0xff]
      %v2733 = vld [vmem:[#allocation6 + $0x78] sm:$0xff]
      %v2734 = vld [vmem:[#allocation6 + $0x80] sm:$0xff]
      %v2735 = vld [vmem:[#allocation6 + $0x88] sm:$0xff]
      %v2736 = vld [vmem:[#allocation6 + $0x90] sm:$0xff]
      %v2737 = vld [vmem:[#allocation6 + $0x98] sm:$0xff]
      %v2738 = vld [vmem:[#allocation6 + $0xa0] sm:$0xff]
      %v2739 = vld [vmem:[#allocation6 + $0xa8] sm:$0xff]
      %v2740 = vld [vmem:[#allocation6 + $0xb0] sm:$0xff]
      %v2741 = vld [vmem:[#allocation6 + $0xb8] sm:$0xff]
      %v2742 = vld [vmem:[#allocation6 + $0xc0] sm:$0xff]
      %v2743 = vld [vmem:[#allocation6 + $0xc8] sm:$0xff]
      %v2744 = vld [vmem:[#allocation6 + $0xd0] sm:$0xff]
      %v2745 = vld [vmem:[#allocation6 + $0xd8] sm:$0xff]
      %v2746 = vld [vmem:[#allocation6 + $0xe0] sm:$0xff]
      %v2747 = vld [vmem:[#allocation6 + $0xe8] sm:$0xff]
      %v2748 = vld [vmem:[#allocation6 + $0xf0] sm:$0xff]
      %v2749 = vld [vmem:[#allocation6 + $0xf8] sm:$0xff]
      %v2750 = vsub.f32 %v2718, %v2526
      %v2751 = vsub.f32 %v2719, %v2527
      %v2752 = vsub.f32 %v2720, %v2528
      %v2753 = vsub.f32 %v2721, %v2529
      %v2754 = vsub.f32 %v2722, %v2530
      %v2755 = vsub.f32 %v2723, %v2531
      %v2756 = vsub.f32 %v2724, %v2532
      %v2757 = vsub.f32 %v2725, %v2533
      %v2758 = vsub.f32 %v2726, %v2534
      %v2759 = vsub.f32 %v2727, %v2535
      %v2760 = vsub.f32 %v2728, %v2536
      %v2761 = vsub.f32 %v2729, %v2537
      %v2762 = vsub.f32 %v2730, %v2538
      %v2763 = vsub.f32 %v2731, %v2539
      %v2764 = vsub.f32 %v2732, %v2540
      %v2765 = vsub.f32 %v2733, %v2541
      %v2766 = vsub.f32 %v2734, %v2542
      %v2767 = vsub.f32 %v2735, %v2543
      %v2768 = vsub.f32 %v2736, %v2544
      %v2769 = vsub.f32 %v2737, %v2545
      %v2770 = vsub.f32 %v2738, %v2546
      %v2771 = vsub.f32 %v2739, %v2547
      %v2772 = vsub.f32 %v2740, %v2548
      %v2773 = vsub.f32 %v2741, %v2549
      %v2774 = vsub.f32 %v2742, %v2550
      %v2775 = vsub.f32 %v2743, %v2551
      %v2776 = vsub.f32 %v2744, %v2552
      %v2777 = vsub.f32 %v2745, %v2553
      %v2778 = vsub.f32 %v2746, %v2554
      %v2779 = vsub.f32 %v2747, %v2555
      %v2780 = vsub.f32 %v2748, %v2556
      %v2781 = vsub.f32 %v2749, %v2557
      %v2782 = vmul.f32 %v2590, 0.8
      %v2783 = vmul.f32 %v2591, 0.8
      %v2784 = vmul.f32 %v2592, 0.8
      %v2785 = vmul.f32 %v2593, 0.8
      %v2786 = vmul.f32 %v2594, 0.8
      %v2787 = vmul.f32 %v2595, 0.8
      %v2788 = vmul.f32 %v2596, 0.8
      %v2789 = vmul.f32 %v2597, 0.8
      %v2790 = vmul.f32 %v2598, 0.8
      %v2791 = vmul.f32 %v2599, 0.8
      %v2792 = vmul.f32 %v2600, 0.8
      %v2793 = vmul.f32 %v2601, 0.8
      %v2794 = vmul.f32 %v2602, 0.8
      %v2795 = vmul.f32 %v2603, 0.8
      %v2796 = vmul.f32 %v2604, 0.8
      %v2797 = vmul.f32 %v2605, 0.8
      %v2798 = vmul.f32 %v2606, 0.8
      %v2799 = vmul.f32 %v2607, 0.8
      %v2800 = vmul.f32 %v2608, 0.8
      %v2801 = vmul.f32 %v2609, 0.8
      %v2802 = vmul.f32 %v2610, 0.8
      %v2803 = vmul.f32 %v2611, 0.8
      %v2804 = vmul.f32 %v2612, 0.8
      %v2805 = vmul.f32 %v2613, 0.8
      %v2806 = vmul.f32 %v2614, 0.8
      %v2807 = vmul.f32 %v2615, 0.8
      %v2808 = vmul.f32 %v2616, 0.8
      %v2809 = vmul.f32 %v2617, 0.8
      %v2810 = vmul.f32 %v2618, 0.8
      %v2811 = vmul.f32 %v2619, 0.8
      %v2812 = vmul.f32 %v2620, 0.8
      %v2813 = vmul.f32 %v2621, 0.8
      %v2814 = vsub.f32 %v2686, %v2590
      %v2815 = vsub.f32 %v2687, %v2591
      %v2816 = vsub.f32 %v2688, %v2592
      %v2817 = vsub.f32 %v2689, %v2593
      %v2818 = vsub.f32 %v2690, %v2594
      %v2819 = vsub.f32 %v2691, %v2595
      %v2820 = vsub.f32 %v2692, %v2596
      %v2821 = vsub.f32 %v2693, %v2597
      %v2822 = vsub.f32 %v2694, %v2598
      %v2823 = vsub.f32 %v2695, %v2599
      %v2824 = vsub.f32 %v2696, %v2600
      %v2825 = vsub.f32 %v2697, %v2601
      %v2826 = vsub.f32 %v2698, %v2602
      %v2827 = vsub.f32 %v2699, %v2603
      %v2828 = vsub.f32 %v2700, %v2604
      %v2829 = vsub.f32 %v2701, %v2605
      %v2830 = vsub.f32 %v2702, %v2606
      %v2831 = vsub.f32 %v2703, %v2607
      %v2832 = vsub.f32 %v2704, %v2608
      %v2833 = vsub.f32 %v2705, %v2609
      %v2834 = vsub.f32 %v2706, %v2610
      %v2835 = vsub.f32 %v2707, %v2611
      %v2836 = vsub.f32 %v2708, %v2612
      %v2837 = vsub.f32 %v2709, %v2613
      %v2838 = vsub.f32 %v2710, %v2614
      %v2839 = vsub.f32 %v2711, %v2615
      %v2840 = vsub.f32 %v2712, %v2616
      %v2841 = vsub.f32 %v2713, %v2617
      %v2842 = vsub.f32 %v2714, %v2618
      %v2843 = vsub.f32 %v2715, %v2619
      %v2844 = vsub.f32 %v2716, %v2620
      %v2845 = vsub.f32 %v2717, %v2621
      %v2846 = vsub.f32 %v2814, %v2750
      %v2847 = vsub.f32 %v2815, %v2751
      %v2848 = vsub.f32 %v2816, %v2752
      %v2849 = vsub.f32 %v2817, %v2753
      %v2850 = vsub.f32 %v2818, %v2754
      %v2851 = vsub.f32 %v2819, %v2755
      %v2852 = vsub.f32 %v2820, %v2756
      %v2853 = vsub.f32 %v2821, %v2757
      %v2854 = vsub.f32 %v2822, %v2758
      %v2855 = vsub.f32 %v2823, %v2759
      %v2856 = vsub.f32 %v2824, %v2760
      %v2857 = vsub.f32 %v2825, %v2761
      %v2858 = vsub.f32 %v2826, %v2762
      %v2859 = vsub.f32 %v2827, %v2763
      %v2860 = vsub.f32 %v2828, %v2764
      %v2861 = vsub.f32 %v2829, %v2765
      %v2862 = vsub.f32 %v2830, %v2766
      %v2863 = vsub.f32 %v2831, %v2767
      %v2864 = vsub.f32 %v2832, %v2768
      %v2865 = vsub.f32 %v2833, %v2769
      %v2866 = vsub.f32 %v2834, %v2770
      %v2867 = vsub.f32 %v2835, %v2771
      %v2868 = vsub.f32 %v2836, %v2772
      %v2869 = vsub.f32 %v2837, %v2773
      %v2870 = vsub.f32 %v2838, %v2774
      %v2871 = vsub.f32 %v2839, %v2775
      %v2872 = vsub.f32 %v2840, %v2776
      %v2873 = vsub.f32 %v2841, %v2777
      %v2874 = vsub.f32 %v2842, %v2778
      %v2875 = vsub.f32 %v2843, %v2779
      %v2876 = vsub.f32 %v2844, %v2780
      %v2877 = vsub.f32 %v2845, %v2781
      %v2878 = vmul.f32 %v2846, 0.0007874016
      %v2879 = vmul.f32 %v2847, 0.0007874016
      %v2880 = vmul.f32 %v2848, 0.0007874016
      %v2881 = vmul.f32 %v2849, 0.0007874016
      %v2882 = vmul.f32 %v2850, 0.0007874016
      %v2883 = vmul.f32 %v2851, 0.0007874016
      %v2884 = vmul.f32 %v2852, 0.0007874016
      %v2885 = vmul.f32 %v2853, 0.0007874016
      %v2886 = vmul.f32 %v2854, 0.0007874016
      %v2887 = vmul.f32 %v2855, 0.0007874016
      %v2888 = vmul.f32 %v2856, 0.0007874016
      %v2889 = vmul.f32 %v2857, 0.0007874016
      %v2890 = vmul.f32 %v2858, 0.0007874016
      %v2891 = vmul.f32 %v2859, 0.0007874016
      %v2892 = vmul.f32 %v2860, 0.0007874016
      %v2893 = vmul.f32 %v2861, 0.0007874016
      %v2894 = vmul.f32 %v2862, 0.0007874016
      %v2895 = vmul.f32 %v2863, 0.0007874016
      %v2896 = vmul.f32 %v2864, 0.0007874016
      %v2897 = vmul.f32 %v2865, 0.0007874016
      %v2898 = vmul.f32 %v2866, 0.0007874016
      %v2899 = vmul.f32 %v2867, 0.0007874016
      %v2900 = vmul.f32 %v2868, 0.0007874016
      %v2901 = vmul.f32 %v2869, 0.0007874016
      %v2902 = vmul.f32 %v2870, 0.0007874016
      %v2903 = vmul.f32 %v2871, 0.0007874016
      %v2904 = vmul.f32 %v2872, 0.0007874016
      %v2905 = vmul.f32 %v2873, 0.0007874016
      %v2906 = vmul.f32 %v2874, 0.0007874016
      %v2907 = vmul.f32 %v2875, 0.0007874016
      %v2908 = vmul.f32 %v2876, 0.0007874016
      %v2909 = vmul.f32 %v2877, 0.0007874016
      %v2910 = vadd.f32 %v2782, %v2878
      %v2911 = vadd.f32 %v2783, %v2879
      %v2912 = vadd.f32 %v2784, %v2880
      %v2913 = vadd.f32 %v2785, %v2881
      %v2914 = vadd.f32 %v2786, %v2882
      %v2915 = vadd.f32 %v2787, %v2883
      %v2916 = vadd.f32 %v2788, %v2884
      %v2917 = vadd.f32 %v2789, %v2885
      %v2918 = vadd.f32 %v2790, %v2886
      %v2919 = vadd.f32 %v2791, %v2887
      %v2920 = vadd.f32 %v2792, %v2888
      %v2921 = vadd.f32 %v2793, %v2889
      %v2922 = vadd.f32 %v2794, %v2890
      %v2923 = vadd.f32 %v2795, %v2891
      %v2924 = vadd.f32 %v2796, %v2892
      %v2925 = vadd.f32 %v2797, %v2893
      %v2926 = vadd.f32 %v2798, %v2894
      %v2927 = vadd.f32 %v2799, %v2895
      %v2928 = vadd.f32 %v2800, %v2896
      %v2929 = vadd.f32 %v2801, %v2897
      %v2930 = vadd.f32 %v2802, %v2898
      %v2931 = vadd.f32 %v2803, %v2899
      %v2932 = vadd.f32 %v2804, %v2900
      %v2933 = vadd.f32 %v2805, %v2901
      %v2934 = vadd.f32 %v2806, %v2902
      %v2935 = vadd.f32 %v2807, %v2903
      %v2936 = vadd.f32 %v2808, %v2904
      %v2937 = vadd.f32 %v2809, %v2905
      %v2938 = vadd.f32 %v2810, %v2906
      %v2939 = vadd.f32 %v2811, %v2907
      %v2940 = vadd.f32 %v2812, %v2908
      %v2941 = vadd.f32 %v2813, %v2909
      %vm2942 = vcmp.ne.s32.totalorder %v1682, 1
      %vm2943 = vcmp.ne.s32.totalorder %v1683, 1
      %vm2944 = vcmp.ne.s32.totalorder %v1684, 1
      %vm2945 = vcmp.ne.s32.totalorder %v1685, 1
      %vm2946 = vcmp.ne.s32.totalorder %v1686, 1
      %vm2947 = vcmp.ne.s32.totalorder %v1687, 1
      %vm2948 = vcmp.ne.s32.totalorder %v1688, 1
      %vm2949 = vcmp.ne.s32.totalorder %v1689, 1
      %vm2950 = vcmp.ne.s32.totalorder %v1690, 1
      %vm2951 = vcmp.ne.s32.totalorder %v1691, 1
      %vm2952 = vcmp.ne.s32.totalorder %v1692, 1
      %vm2953 = vcmp.ne.s32.totalorder %v1693, 1
      %vm2954 = vcmp.ne.s32.totalorder %v1694, 1
      %vm2955 = vcmp.ne.s32.totalorder %v1695, 1
      %vm2956 = vcmp.ne.s32.totalorder %v1696, 1
      %vm2957 = vcmp.ne.s32.totalorder %v1697, 1
      %vm2958 = vcmp.ne.s32.totalorder %v1698, 1
      %vm2959 = vcmp.ne.s32.totalorder %v1699, 1
      %vm2960 = vcmp.ne.s32.totalorder %v1700, 1
      %vm2961 = vcmp.ne.s32.totalorder %v1701, 1
      %vm2962 = vcmp.ne.s32.totalorder %v1702, 1
      %vm2963 = vcmp.ne.s32.totalorder %v1703, 1
      %vm2964 = vcmp.ne.s32.totalorder %v1704, 1
      %vm2965 = vcmp.ne.s32.totalorder %v1705, 1
      %vm2966 = vcmp.ne.s32.totalorder %v1706, 1
      %vm2967 = vcmp.ne.s32.totalorder %v1707, 1
      %vm2968 = vcmp.ne.s32.totalorder %v1708, 1
      %vm2969 = vcmp.ne.s32.totalorder %v1709, 1
      %vm2970 = vcmp.ne.s32.totalorder %v1710, 1
      %vm2971 = vcmp.ne.s32.totalorder %v1711, 1
      %vm2972 = vcmp.ne.s32.totalorder %v1712, 1
      %vm2973 = vcmp.ne.s32.totalorder %v1713, 1
      %v2974 = vsel %vm2942, 1, 0
      %v2975 = vsel %vm2943, 1, 0
      %v2976 = vsel %vm2944, 1, 0
      %v2977 = vsel %vm2945, 1, 0
      %v2978 = vsel %vm2946, 1, 0
      %v2979 = vsel %vm2947, 1, 0
      %v2980 = vsel %vm2948, 1, 0
      %v2981 = vsel %vm2949, 1, 0
      %v2982 = vsel %vm2950, 1, 0
      %v2983 = vsel %vm2951, 1, 0
      %v2984 = vsel %vm2952, 1, 0
      %v2985 = vsel %vm2953, 1, 0
      %v2986 = vsel %vm2954, 1, 0
      %v2987 = vsel %vm2955, 1, 0
      %v2988 = vsel %vm2956, 1, 0
      %v2989 = vsel %vm2957, 1, 0
      %v2990 = vsel %vm2958, 1, 0
      %v2991 = vsel %vm2959, 1, 0
      %v2992 = vsel %vm2960, 1, 0
      %v2993 = vsel %vm2961, 1, 0
      %v2994 = vsel %vm2962, 1, 0
      %v2995 = vsel %vm2963, 1, 0
      %v2996 = vsel %vm2964, 1, 0
      %v2997 = vsel %vm2965, 1, 0
      %v2998 = vsel %vm2966, 1, 0
      %v2999 = vsel %vm2967, 1, 0
      %v3000 = vsel %vm2968, 1, 0
      %v3001 = vsel %vm2969, 1, 0
      %v3002 = vsel %vm2970, 1, 0
      %v3003 = vsel %vm2971, 1, 0
      %v3004 = vsel %vm2972, 1, 0
      %v3005 = vsel %vm2973, 1, 0
      %v3006 = vcvt.s32.f32 %v2974
      %v3007 = vcvt.s32.f32 %v2975
      %v3008 = vcvt.s32.f32 %v2976
      %v3009 = vcvt.s32.f32 %v2977
      %v3010 = vcvt.s32.f32 %v2978
      %v3011 = vcvt.s32.f32 %v2979
      %v3012 = vcvt.s32.f32 %v2980
      %v3013 = vcvt.s32.f32 %v2981
      %v3014 = vcvt.s32.f32 %v2982
      %v3015 = vcvt.s32.f32 %v2983
      %v3016 = vcvt.s32.f32 %v2984
      %v3017 = vcvt.s32.f32 %v2985
      %v3018 = vcvt.s32.f32 %v2986
      %v3019 = vcvt.s32.f32 %v2987
      %v3020 = vcvt.s32.f32 %v2988
      %v3021 = vcvt.s32.f32 %v2989
      %v3022 = vcvt.s32.f32 %v2990
      %v3023 = vcvt.s32.f32 %v2991
      %v3024 = vcvt.s32.f32 %v2992
      %v3025 = vcvt.s32.f32 %v2993
      %v3026 = vcvt.s32.f32 %v2994
      %v3027 = vcvt.s32.f32 %v2995
      %v3028 = vcvt.s32.f32 %v2996
      %v3029 = vcvt.s32.f32 %v2997
      %v3030 = vcvt.s32.f32 %v2998
      %v3031 = vcvt.s32.f32 %v2999
      %v3032 = vcvt.s32.f32 %v3000
      %v3033 = vcvt.s32.f32 %v3001
      %v3034 = vcvt.s32.f32 %v3002
      %v3035 = vcvt.s32.f32 %v3003
      %v3036 = vcvt.s32.f32 %v3004
      %v3037 = vcvt.s32.f32 %v3005
      %v3038 = vsub.f32 -1.6078693, %v2910
      %v3039 = vsub.f32 -1.6078693, %v2911
      %v3040 = vsub.f32 -1.6078693, %v2912
      %v3041 = vsub.f32 -1.6078693, %v2913
      %v3042 = vsub.f32 -1.6078693, %v2914
      %v3043 = vsub.f32 -1.6078693, %v2915
      %v3044 = vsub.f32 -1.6078693, %v2916
      %v3045 = vsub.f32 -1.6078693, %v2917
      %v3046 = vsub.f32 -1.6078693, %v2918
      %v3047 = vsub.f32 -1.6078693, %v2919
      %v3048 = vsub.f32 -1.6078693, %v2920
      %v3049 = vsub.f32 -1.6078693, %v2921
      %v3050 = vsub.f32 -1.6078693, %v2922
      %v3051 = vsub.f32 -1.6078693, %v2923
      %v3052 = vsub.f32 -1.6078693, %v2924
      %v3053 = vsub.f32 -1.6078693, %v2925
      %v3054 = vsub.f32 -1.6078693, %v2926
      %v3055 = vsub.f32 -1.6078693, %v2927
      %v3056 = vsub.f32 -1.6078693, %v2928
      %v3057 = vsub.f32 -1.6078693, %v2929
      %v3058 = vsub.f32 -1.6078693, %v2930
      %v3059 = vsub.f32 -1.6078693, %v2931
      %v3060 = vsub.f32 -1.6078693, %v2932
      %v3061 = vsub.f32 -1.6078693, %v2933
      %v3062 = vsub.f32 -1.6078693, %v2934
      %v3063 = vsub.f32 -1.6078693, %v2935
      %v3064 = vsub.f32 -1.6078693, %v2936
      %v3065 = vsub.f32 -1.6078693, %v2937
      %v3066 = vsub.f32 -1.6078693, %v2938
      %v3067 = vsub.f32 -1.6078693, %v2939
      %v3068 = vsub.f32 -1.6078693, %v2940
      %v3069 = vsub.f32 -1.6078693, %v2941
      %v3070 = vmul.f32 %v3006, %v3038
      %v3071 = vmul.f32 %v3007, %v3039
      %v3072 = vmul.f32 %v3008, %v3040
      %v3073 = vmul.f32 %v3009, %v3041
      %v3074 = vmul.f32 %v3010, %v3042
      %v3075 = vmul.f32 %v3011, %v3043
      %v3076 = vmul.f32 %v3012, %v3044
      %v3077 = vmul.f32 %v3013, %v3045
      %v3078 = vmul.f32 %v3014, %v3046
      %v3079 = vmul.f32 %v3015, %v3047
      %v3080 = vmul.f32 %v3016, %v3048
      %v3081 = vmul.f32 %v3017, %v3049
      %v3082 = vmul.f32 %v3018, %v3050
      %v3083 = vmul.f32 %v3019, %v3051
      %v3084 = vmul.f32 %v3020, %v3052
      %v3085 = vmul.f32 %v3021, %v3053
      %v3086 = vmul.f32 %v3022, %v3054
      %v3087 = vmul.f32 %v3023, %v3055
      %v3088 = vmul.f32 %v3024, %v3056
      %v3089 = vmul.f32 %v3025, %v3057
      %v3090 = vmul.f32 %v3026, %v3058
      %v3091 = vmul.f32 %v3027, %v3059
      %v3092 = vmul.f32 %v3028, %v3060
      %v3093 = vmul.f32 %v3029, %v3061
      %v3094 = vmul.f32 %v3030, %v3062
      %v3095 = vmul.f32 %v3031, %v3063
      %v3096 = vmul.f32 %v3032, %v3064
      %v3097 = vmul.f32 %v3033, %v3065
      %v3098 = vmul.f32 %v3034, %v3066
      %v3099 = vmul.f32 %v3035, %v3067
      %v3100 = vmul.f32 %v3036, %v3068
      %v3101 = vmul.f32 %v3037, %v3069
      %3102 = vst.msk [vmem:[%s5] sm:$0xff] %vm1425, %v3070
      %3103 = vst.msk [vmem:[%s5 + $0x8] sm:$0xff] %vm1425, %v3071
      %3104 = vst.msk [vmem:[%s5 + $0x10] sm:$0xff] %vm1425, %v3072
      %3105 = vst.msk [vmem:[%s5 + $0x18] sm:$0xff] %vm1425, %v3073
      %3106 = vst.msk [vmem:[%s5 + $0x20] sm:$0xff] %vm1425, %v3074
      %3107 = vst.msk [vmem:[%s5 + $0x28] sm:$0xff] %vm1425, %v3075
      %3108 = vst.msk [vmem:[%s5 + $0x30] sm:$0xff] %vm1425, %v3076
      %3109 = vst.msk [vmem:[%s5 + $0x38] sm:$0xff] %vm1425, %v3077
      %3110 = vst.msk [vmem:[%s5 + $0x40] sm:$0xff] %vm1425, %v3078
      %3111 = vst.msk [vmem:[%s5 + $0x48] sm:$0xff] %vm1425, %v3079
      %3112 = vst.msk [vmem:[%s5 + $0x50] sm:$0xff] %vm1425, %v3080
      %3113 = vst.msk [vmem:[%s5 + $0x58] sm:$0xff] %vm1425, %v3081
      %3114 = vst.msk [vmem:[%s5 + $0x60] sm:$0xff] %vm1425, %v3082
      %3115 = vst.msk [vmem:[%s5 + $0x68] sm:$0xff] %vm1425, %v3083
      %3116 = vst.msk [vmem:[%s5 + $0x70] sm:$0xff] %vm1425, %v3084
      %3117 = vst.msk [vmem:[%s5 + $0x78] sm:$0xff] %vm1425, %v3085
      %3118 = vst.msk [vmem:[%s5 + $0x80] sm:$0xff] %vm1425, %v3086
      %3119 = vst.msk [vmem:[%s5 + $0x88] sm:$0xff] %vm1425, %v3087
      %3120 = vst.msk [vmem:[%s5 + $0x90] sm:$0xff] %vm1425, %v3088
      %3121 = vst.msk [vmem:[%s5 + $0x98] sm:$0xff] %vm1425, %v3089
      %3122 = vst.msk [vmem:[%s5 + $0xa0] sm:$0xff] %vm1425, %v3090
      %3123 = vst.msk [vmem:[%s5 + $0xa8] sm:$0xff] %vm1425, %v3091
      %3124 = vst.msk [vmem:[%s5 + $0xb0] sm:$0xff] %vm1425, %v3092
      %3125 = vst.msk [vmem:[%s5 + $0xb8] sm:$0xff] %vm1425, %v3093
      %3126 = vst.msk [vmem:[%s5 + $0xc0] sm:$0xff] %vm1425, %v3094
      %3127 = vst.msk [vmem:[%s5 + $0xc8] sm:$0xff] %vm1425, %v3095
      %3128 = vst.msk [vmem:[%s5 + $0xd0] sm:$0xff] %vm1425, %v3096
      %3129 = vst.msk [vmem:[%s5 + $0xd8] sm:$0xff] %vm1425, %v3097
      %3130 = vst.msk [vmem:[%s5 + $0xe0] sm:$0xff] %vm1425, %v3098
      %3131 = vst.msk [vmem:[%s5 + $0xe8] sm:$0xff] %vm1425, %v3099
      %3132 = vst.msk [vmem:[%s5 + $0xf0] sm:$0xff] %vm1425, %v3100
      %3133 = vst.msk [vmem:[%s5 + $0xf8] sm:$0xff] %vm1425, %v3101
    $region29: #{tpu_custom_call.1} parent=1 // pred_fallthru
      _
    // Predicated region
    $region30: #{tpu_custom_call.1} parent=1 // pred_check
      _
    $region31: #{tpu_custom_call.1} parent=1 // pred_check_branch
      %3135 = sbr.rel (0) target = $region33
    $region32: #{tpu_custom_call.1} parent=1 // pred_region
      %3137 = vsyncadd [#allocation9], 0
      %s3138 = sshll.u32 [#allocation10], 4
      %s3139 = int_to_ptr.vmem [resolvable:$true] %s3138
      %s3140 = sshll.u32 %s4, 4
      %s3141 = int_to_ptr.hbm [resolvable:$true] %s3140
      %3146 = dma.vmem_to_hbm [thread:$0]  %s3139, 8192, %s3141, [#allocation9], 256, 256, 16
    $region33: #{tpu_custom_call.1} parent=1 // pred_fallthru
      _
    // Predicated region
    $region34: #{tpu_custom_call.1} parent=1 // pred_check
      _
    $region35: #{tpu_custom_call.1} parent=1 // pred_check_branch
      %3148 = sbr.rel (0) target = $region37
    $region36: #{tpu_custom_call.1} parent=1 // pred_region
      _
    $region37: #{tpu_custom_call.1} parent=1 // pred_fallthru
      _
    // Predicated region
    $region38: #{tpu_custom_call.1} parent=1 // pred_check
      _
    $region39: #{tpu_custom_call.1} parent=1 // pred_check_branch
      %3150 = sbr.rel (0) target = $region41
    $region40: #{tpu_custom_call.1} parent=1 // pred_region
      %3152 = dma.done [#allocation9], 8192
    $region41: #{tpu_custom_call.1} parent=1 // pred_fallthru
      _
    // Predicated region
    $region42: #{tpu_custom_call.1} parent=1 // pred_check
      _
    $region43: #{tpu_custom_call.1} parent=1 // pred_check_branch
      %3154 = sbr.rel (0) target = $region45
    $region44: #{tpu_custom_call.1} parent=1 // pred_region
      _
    $region45: #{tpu_custom_call.1} parent=1 // pred_fallthru
      _
    %3155 = vsyncpa [#allocation8], 1
    %3156 = vsyncpa [#allocation9], 1

</llo_original>
